<compile_context>
chip_gen: v6e
topology: v6e:2x2x1
jax: 0.10.0
libtpu: 0.0.40
codegen_flags: <defaults>
</compile_context>

<pallas_src>
import functools

import jax
import jax.numpy as jnp
import numpy as np
from jax.experimental import pallas as pl
from jax.experimental.pallas import tpu as pltpu

INPUT_SIZE = 274   # module default
D_WORD_VEC = 150   # module default
HIDDEN = 200       # module default

HP = 256           # hidden padded to a 128-lane multiple (one gate block)
XP = 384           # input_size (274) padded to a 128-lane multiple


# --------------------------------------------------------------------------
# Kernel: one grid step == one decoder timestep. Weights are resident (constant
# index_map); h/c state is carried across grid steps in the constant-index
# output blocks (VMEM-resident, written back to HBM once at the end).
# --------------------------------------------------------------------------
def decoder_seq_kernel(x_ref, h0_ref, c0_ref, w1_ref, w2_ref, w3_ref, b_ref,
                       h2_seq_ref, h_out_ref, c_out_ref, *, hp):
    f32 = jnp.float32
    bf16 = jnp.bfloat16
    t = pl.program_id(0)

    # Seed the carried state from the initial-state inputs on the first step.
    @pl.when(t == 0)
    def _():
        h_out_ref[...] = h0_ref[...]
        c_out_ref[...] = c0_ref[...]

    x_t = x_ref[0]                                       # (B, XP) bf16
    h0, h1, h2 = h_out_ref[0], h_out_ref[1], h_out_ref[2]  # (B, HP) f32
    c0, c1, c2 = c_out_ref[0], c_out_ref[1], c_out_ref[2]
    h0b, h1b, h2b = h0.astype(bf16), h1.astype(bf16), h2.astype(bf16)

    def gates_to_state(gates, c):
        # PyTorch LSTMCell gate order [i | f | g | o], each padded to hp lanes.
        i_g = jax.nn.sigmoid(gates[:, 0 * hp:1 * hp])
        f_g = jax.nn.sigmoid(gates[:, 1 * hp:2 * hp])
        g_g = jnp.tanh(gates[:, 2 * hp:3 * hp])
        o_g = jax.nn.sigmoid(gates[:, 3 * hp:4 * hp])
        c_new = f_g * c + i_g * g_g
        h_new = o_g * jnp.tanh(c_new)
        return h_new, c_new

    # One fused matmul per cell: [inp | h] @ [[W_ih],[W_hh]] + (b_ih + b_hh).
    # Cell 1 additionally has tgt_emb folded into its input weight (eval mode).
    g1 = jnp.dot(jnp.concatenate([x_t, h0b], axis=-1), w1_ref[...],
                 preferred_element_type=f32) + b_ref[0]
    g2 = jnp.dot(jnp.concatenate([h0b, h1b], axis=-1), w2_ref[...],
                 preferred_element_type=f32) + b_ref[1]
    g3 = jnp.dot(jnp.concatenate([h1b, h2b], axis=-1), w3_ref[...],
                 preferred_element_type=f32) + b_ref[2]

    h0n, c0n = gates_to_state(g1, c0)
    h1n, c1n = gates_to_state(g2, c1)
    h2n, c2n = gates_to_state(g3, c2)

    h_out_ref[0] = h0n
    h_out_ref[1] = h1n
    h_out_ref[2] = h2n
    c_out_ref[0] = c0n
    c_out_ref[1] = c1n
    c_out_ref[2] = c2n
    h2_seq_ref[0] = h2n


# --------------------------------------------------------------------------
# Host-side parameter packing (done once, outside the decode loop).
# --------------------------------------------------------------------------
def init_params(key):
    """f32 parameters in PyTorch layout: weight (out, in), bias (out,)."""
    ks = jax.random.split(key, 14)

    def uni(k, shape, bound):
        return jax.random.uniform(k, shape, jnp.float32, -bound, bound)

    be = 1.0 / np.sqrt(INPUT_SIZE)
    bh = 1.0 / np.sqrt(HIDDEN)
    h4 = 4 * HIDDEN
    return dict(
        emb_w=uni(ks[0], (D_WORD_VEC, INPUT_SIZE), be),
        emb_b=uni(ks[1], (D_WORD_VEC,), be),
        l1_wih=uni(ks[2], (h4, D_WORD_VEC), bh),
        l1_whh=uni(ks[3], (h4, HIDDEN), bh),
        l1_bih=uni(ks[4], (h4,), bh),
        l1_bhh=uni(ks[5], (h4,), bh),
        l2_wih=uni(ks[6], (h4, HIDDEN), bh),
        l2_whh=uni(ks[7], (h4, HIDDEN), bh),
        l2_bih=uni(ks[8], (h4,), bh),
        l2_bhh=uni(ks[9], (h4,), bh),
        l3_wih=uni(ks[10], (h4, HIDDEN), bh),
        l3_whh=uni(ks[11], (h4, HIDDEN), bh),
        l3_bih=uni(ks[12], (h4,), bh),
        l3_bhh=uni(ks[13], (h4,), bh),
    )


def pack_params(p):
    """Fold tgt_emb into lstm1 (eval mode only), fuse [W_ih; W_hh] per cell,
    pad each gate to 256 lane-aligned columns, pre-sum biases, cast to bf16."""
    hidden, in_size = HIDDEN, INPUT_SIZE

    def to_np(a):
        return np.asarray(a, np.float32)

    def gate_pad_cols(w):                # (K, 4*hidden) -> (K, 4*HP)
        w = np.atleast_2d(np.asarray(w, np.float32))
        out = np.zeros((w.shape[0], 4 * HP), np.float32)
        for k in range(4):
            out[:, k * HP:k * HP + hidden] = w[:, k * hidden:(k + 1) * hidden]
        return out

    # TODO(synk): the W_emb -> W_ih1 fold assumes eval mode (Dropout == identity);
    # keep the unfused path if this kernel is ever reused for training.
    a1 = to_np(p["emb_w"]).T @ to_np(p["l1_wih"]).T                  # (274, 800)
    b1 = (to_np(p["emb_b"]) @ to_np(p["l1_wih"]).T
          + to_np(p["l1_bih"]) + to_np(p["l1_bhh"]))                 # (800,)

    w1 = np.zeros((XP + HP, 4 * HP), np.float32)
    w1[:in_size, :] = gate_pad_cols(a1)
    w1[XP:XP + hidden, :] = gate_pad_cols(to_np(p["l1_whh"]).T)

    def cell_w(wih, whh):
        w = np.zeros((2 * HP, 4 * HP), np.float32)
        w[:hidden, :] = gate_pad_cols(to_np(wih).T)
        w[HP:HP + hidden, :] = gate_pad_cols(to_np(whh).T)
        return w

    w2 = cell_w(p["l2_wih"], p["l2_whh"])
    w3 = cell_w(p["l3_wih"], p["l3_whh"])

    b = np.zeros((3, 1, 4 * HP), np.float32)
    b[0] = gate_pad_cols(b1)
    b[1] = gate_pad_cols(to_np(p["l2_bih"]) + to_np(p["l2_bhh"]))
    b[2] = gate_pad_cols(to_np(p["l3_bih"]) + to_np(p["l3_bhh"]))

    return dict(
        w1=jnp.asarray(w1, jnp.bfloat16),
        w2=jnp.asarray(w2, jnp.bfloat16),
        w3=jnp.asarray(w3, jnp.bfloat16),
        b=jnp.asarray(b, jnp.float32),
    )


def _pad_inputs(x_seq, h_slab, c_slab):
    T, B, in_size = x_seq.shape
    x_pad = jnp.zeros((T, B, XP), jnp.bfloat16)
    x_pad = x_pad.at[..., :in_size].set(x_seq.astype(jnp.bfloat16))
    h_pad = jnp.zeros((3, B, HP), jnp.float32)
    h_pad = h_pad.at[..., :h_slab.shape[-1]].set(h_slab.astype(jnp.float32))
    c_pad = jnp.zeros((3, B, HP), jnp.float32)
    c_pad = c_pad.at[..., :c_slab.shape[-1]].set(c_slab.astype(jnp.float32))
    return x_pad, h_pad, c_pad


# --------------------------------------------------------------------------
# Wrappers
# --------------------------------------------------------------------------
def decoder_decode(x_seq, h_slab, c_slab, packed):
    """Run T chained Decoder.forward steps in ONE pallas_call.

    x_seq:  (T, B, input_size)      per-step inputs to tgt_emb
    h_slab: (3, B, hidden) float32  initial [h0, h1, h2]
    c_slab: (3, B, hidden) float32  initial [c0, c1, c2]
    Returns (h2 per step (T,B,hidden), final h (3,B,hidden), final c (3,B,hidden)).
    """
    T, B, _ = x_seq.shape
    x_pad, h_pad, c_pad = _pad_inputs(x_seq, h_slab, c_slab)
    w1, w2, w3, b = packed["w1"], packed["w2"], packed["w3"], packed["b"]

    k_total = w1.shape[0] + w2.shape[0] + w3.shape[0]
    n_gates = 4 * HP
    cost = pl.CostEstimate(
        flops=2 * T * B * k_total * n_gates,
        transcendentals=T * B * 3 * 5 * HP,
        bytes_accessed=int((w1.size + w2.size + w3.size) * 2 + b.size * 4
                           + x_pad.size * 2 + 4 * 3 * B * HP * 4
                           + T * B * HP * 4),
    )

    def state_spec():
        return pl.BlockSpec((3, B, HP), lambda t: (0, 0, 0))

    h2_seq, h_fin, c_fin = pl.pallas_call(
        functools.partial(decoder_seq_kernel, hp=HP),
        grid=(T,),
        in_specs=[
            pl.BlockSpec((1, B, XP), lambda t: (t, 0, 0)),   # x_t (per step)
            state_spec(),                                    # initial h (DMA once)
            state_spec(),                                    # initial c (DMA once)
            pl.BlockSpec(w1.shape, lambda t: (0, 0)),        # weights: resident
            pl.BlockSpec(w2.shape, lambda t: (0, 0)),
            pl.BlockSpec(w3.shape, lambda t: (0, 0)),
            pl.BlockSpec(b.shape, lambda t: (0, 0, 0)),
        ],
        out_specs=[
            pl.BlockSpec((1, B, HP), lambda t: (t, 0, 0)),   # h2 per step
            state_spec(),                                    # carried / final h
            state_spec(),                                    # carried / final c
        ],
        out_shape=[
            jax.ShapeDtypeStruct((T, B, HP), jnp.float32),
            jax.ShapeDtypeStruct((3, B, HP), jnp.float32),
            jax.ShapeDtypeStruct((3, B, HP), jnp.float32),
        ],
        compiler_params=pltpu.CompilerParams(
            dimension_semantics=("arbitrary",),              # time is sequential
            vmem_limit_bytes=32 * 1024 * 1024),
        cost_estimate=cost,
    )(x_pad, h_pad, c_pad, w1, w2, w3, b)

    return (h2_seq[..., :HIDDEN], h_fin[..., :HIDDEN], c_fin[..., :HIDDEN])


def decoder_forward(in_frame, vec_h, vec_c, packed):
    """Exactly Decoder.forward (eval mode): one timestep, module-style API."""
    h_slab = jnp.stack(vec_h, axis=0)
    c_slab = jnp.stack(vec_c, axis=0)
    h2_seq, h_fin, c_fin = decoder_decode(in_frame[None], h_slab, c_slab, packed)
    vec_h_new = [h_fin[0], h_fin[1], h_fin[2]]
    vec_c_new = [c_fin[0], c_fin[1], c_fin[2]]
    return h2_seq[0], vec_h_new, vec_c_new


# --------------------------------------------------------------------------
# References
# --------------------------------------------------------------------------
def reference_f32_step(in_frame, vec_h, vec_c, p):
    """Pure-f32 JAX transcription of the PyTorch forward (eval mode)."""
    hi = jax.lax.Precision.HIGHEST
    emb = jnp.dot(in_frame, p["emb_w"].T, precision=hi) + p["emb_b"]

    def cell(inp, h, c, wih, whh, bih, bhh):
        gates = (jnp.dot(inp, wih.T, precision=hi)
                 + jnp.dot(h, whh.T, precision=hi) + bih + bhh)
        i, f, g, o = jnp.split(gates, 4, axis=-1)
        c_new = jax.nn.sigmoid(f) * c + jax.nn.sigmoid(i) * jnp.tanh(g)
        h_new = jax.nn.sigmoid(o) * jnp.tanh(c_new)
        return h_new, c_new

    h0n, c0n = cell(emb, vec_h[0], vec_c[0],
                    p["l1_wih"], p["l1_whh"], p["l1_bih"], p["l1_bhh"])
    h1n, c1n = cell(vec_h[0], vec_h[1], vec_c[1],
                    p["l2_wih"], p["l2_whh"], p["l2_bih"], p["l2_bhh"])
    h2n, c2n = cell(vec_h[1], vec_h[2], vec_c[2],
                    p["l3_wih"], p["l3_whh"], p["l3_bih"], p["l3_bhh"])
    return h2n, [h0n, h1n, h2n], [c0n, c1n, c2n]


def reference_packed(x_seq, h_slab, c_slab, packed):
    """Plain-JAX mirror of the kernel's exact folded/padded/bf16 arithmetic."""
    f32, bf16 = jnp.float32, jnp.bfloat16
    x_pad, h, c = _pad_inputs(x_seq, h_slab, c_slab)

    def upd(g, cc):
        i = jax.nn.sigmoid(g[:, 0 * HP:1 * HP])
        f = jax.nn.sigmoid(g[:, 1 * HP:2 * HP])
        gg = jnp.tanh(g[:, 2 * HP:3 * HP])
        o = jax.nn.sigmoid(g[:, 3 * HP:4 * HP])
        cn = f * cc + i * gg
        return o * jnp.tanh(cn), cn

    h2s = []
    for t in range(x_seq.shape[0]):
        xt = x_pad[t]
        h0b, h1b, h2b = h[0].astype(bf16), h[1].astype(bf16), h[2].astype(bf16)
        g1 = jnp.dot(jnp.concatenate([xt, h0b], -1), packed["w1"],
                     preferred_element_type=f32) + packed["b"][0]
        g2 = jnp.dot(jnp.concatenate([h0b, h1b], -1), packed["w2"],
                     preferred_element_type=f32) + packed["b"][1]
        g3 = jnp.dot(jnp.concatenate([h1b, h2b], -1), packed["w3"],
                     preferred_element_type=f32) + packed["b"][2]
        h0n, c0n = upd(g1, c[0])
        h1n, c1n = upd(g2, c[1])
        h2n, c2n = upd(g3, c[2])
        h = jnp.stack([h0n, h1n, h2n])
        c = jnp.stack([c0n, c1n, c2n])
        h2s.append(h2n)
    return jnp.stack(h2s)[..., :HIDDEN], h[..., :HIDDEN], c[..., :HIDDEN]


# --------------------------------------------------------------------------
if __name__ == "__main__":
    key = jax.random.PRNGKey(0)
    kx, kh, kc, kp, kseq = jax.random.split(key, 5)
    B, T = 2, 8

    params = init_params(kp)
    packed = pack_params(params)

    in_frame = jax.random.normal(kx, (B, INPUT_SIZE), jnp.float32)
    vec_h = list(jax.random.normal(kh, (3, B, HIDDEN), jnp.float32))
    vec_c = list(jax.random.normal(kc, (3, B, HIDDEN), jnp.float32))

    # ---- single step: exactly the module's forward ----
    h2, h_new, c_new = decoder_forward(in_frame, vec_h, vec_c, packed)
    (h2, h_new, c_new) = jax.block_until_ready((h2, h_new, c_new))

    ref_h2, ref_h, ref_c = reference_f32_step(in_frame, vec_h, vec_c, params)
    np.testing.assert_allclose(np.asarray(h2), np.asarray(ref_h2),
                               rtol=4e-2, atol=4e-2)
    for a, r in zip(h_new, ref_h):
        np.testing.assert_allclose(np.asarray(a), np.asarray(r),
                                   rtol=4e-2, atol=4e-2)
    for a, r in zip(c_new, ref_c):
        np.testing.assert_allclose(np.asarray(a), np.asarray(r),
                                   rtol=4e-2, atol=4e-2)

    # ---- T-step decode: weights DMA'd once, state carried in VMEM ----
    x_seq = jax.random.normal(kseq, (T, B, INPUT_SIZE), jnp.float32)
    h_slab = jnp.stack(vec_h)
    c_slab = jnp.stack(vec_c)
    h2_seq, h_fin, c_fin = decoder_decode(x_seq, h_slab, c_slab, packed)
    (h2_seq, h_fin, c_fin) = jax.block_until_ready((h2_seq, h_fin, c_fin))

    m_h2_seq, m_h_fin, m_c_fin = reference_packed(x_seq, h_slab, c_slab, packed)
    np.testing.assert_allclose(np.asarray(h2_seq), np.asarray(m_h2_seq),
                               rtol=2e-3, atol=2e-3)
    np.testing.assert_allclose(np.asarray(h_fin), np.asarray(m_h_fin),
                               rtol=2e-3, atol=2e-3)
    np.testing.assert_allclose(np.asarray(c_fin), np.asarray(m_c_fin),
                               rtol=2e-3, atol=2e-3)

    print("KERNEL_OK")
</pallas_src>

<mosaic_0001>
module attributes {stable_mosaic.version = 11 : i64} {
  func.func @decoder_seq_kernel(%arg0: i32, %arg1: memref<1x2x384xbf16, #tpu.memory_space<vmem>>, %arg2: memref<3x2x256xf32, #tpu.memory_space<vmem>>, %arg3: memref<3x2x256xf32, #tpu.memory_space<vmem>>, %arg4: memref<640x1024xbf16, #tpu.memory_space<vmem>>, %arg5: memref<512x1024xbf16, #tpu.memory_space<vmem>>, %arg6: memref<512x1024xbf16, #tpu.memory_space<vmem>>, %arg7: memref<3x1x1024xf32, #tpu.memory_space<vmem>>, %arg8: memref<1x2x256xf32, #tpu.memory_space<vmem>>, %arg9: memref<3x2x256xf32, #tpu.memory_space<vmem>>, %arg10: memref<3x2x256xf32, #tpu.memory_space<vmem>>) attributes {dimension_semantics = [#tpu.dimension_semantics<arbitrary>], iteration_bounds = array<i64: 1>, scalar_prefetch = 0 : i64, scratch_operands = 0 : i64, tpu.core_type = #tpu.core_type<tc>, window_params = [{transform_indices = @transform_0, window_bounds = array<i64: 1, 2, 384>}, {pipeline_mode = #tpu.pipeline_mode<synchronous>, transform_indices = @transform_1, window_bounds = array<i64: 3, 2, 256>}, {pipeline_mode = #tpu.pipeline_mode<synchronous>, transform_indices = @transform_2, window_bounds = array<i64: 3, 2, 256>}, {pipeline_mode = #tpu.pipeline_mode<synchronous>, transform_indices = @transform_3, window_bounds = array<i64: 640, 1024>}, {pipeline_mode = #tpu.pipeline_mode<synchronous>, transform_indices = @transform_4, window_bounds = array<i64: 512, 1024>}, {pipeline_mode = #tpu.pipeline_mode<synchronous>, transform_indices = @transform_5, window_bounds = array<i64: 512, 1024>}, {pipeline_mode = #tpu.pipeline_mode<synchronous>, transform_indices = @transform_6, window_bounds = array<i64: 3, 1, 1024>}, {transform_indices = @transform_7, window_bounds = array<i64: 1, 2, 256>}, {pipeline_mode = #tpu.pipeline_mode<synchronous>, transform_indices = @transform_8, window_bounds = array<i64: 3, 2, 256>}, {pipeline_mode = #tpu.pipeline_mode<synchronous>, transform_indices = @transform_9, window_bounds = array<i64: 3, 2, 256>}]} {
    %c0_i32 = arith.constant 0 : i32
    %0 = arith.cmpi eq, %arg0, %c0_i32 : i32
    %1 = arith.extui %0 : i1 to i32
    %c0_i32_0 = arith.constant 0 : i32
    %2 = arith.cmpi ne, %1, %c0_i32_0 : i32
    scf.if %2 {
      %c0_66 = arith.constant 0 : index
      %c0_67 = arith.constant 0 : index
      %c0_68 = arith.constant 0 : index
      %137 = vector.load %arg2[%c0_66, %c0_67, %c0_68] : memref<3x2x256xf32, #tpu.memory_space<vmem>>, vector<3x2x256xf32>
      %c0_69 = arith.constant 0 : index
      %c0_70 = arith.constant 0 : index
      %c0_71 = arith.constant 0 : index
      %138 = vector.load %arg9[%c0_69, %c0_70, %c0_71] : memref<3x2x256xf32, #tpu.memory_space<vmem>>, vector<3x2x256xf32>
      tpu.vector_store %arg9[%c0_69, %c0_70, %c0_71], %137 {strides = array<i32>} : memref<3x2x256xf32, #tpu.memory_space<vmem>>, vector<3x2x256xf32>,
      %c0_72 = arith.constant 0 : index
      %c0_73 = arith.constant 0 : index
      %c0_74 = arith.constant 0 : index
      %139 = vector.load %arg3[%c0_72, %c0_73, %c0_74] : memref<3x2x256xf32, #tpu.memory_space<vmem>>, vector<3x2x256xf32>
      %c0_75 = arith.constant 0 : index
      %c0_76 = arith.constant 0 : index
      %c0_77 = arith.constant 0 : index
      %140 = vector.load %arg10[%c0_75, %c0_76, %c0_77] : memref<3x2x256xf32, #tpu.memory_space<vmem>>, vector<3x2x256xf32>
      tpu.vector_store %arg10[%c0_75, %c0_76, %c0_77], %139 {strides = array<i32>} : memref<3x2x256xf32, #tpu.memory_space<vmem>>, vector<3x2x256xf32>,
    } else {
    }
    %c0 = arith.constant 0 : index
    %c0_1 = arith.constant 0 : index
    %c0_2 = arith.constant 0 : index
    %3 = vector.load %arg1[%c0, %c0_1, %c0_2] : memref<1x2x384xbf16, #tpu.memory_space<vmem>>, vector<1x2x384xbf16>
    %4 = vector.shape_cast %3 : vector<1x2x384xbf16> to vector<2x384xbf16>
    %c0_3 = arith.constant 0 : index
    %c0_4 = arith.constant 0 : index
    %c0_5 = arith.constant 0 : index
    %5 = vector.load %arg9[%c0_3, %c0_4, %c0_5] : memref<3x2x256xf32, #tpu.memory_space<vmem>>, vector<1x2x256xf32>
    %6 = vector.shape_cast %5 : vector<1x2x256xf32> to vector<2x256xf32>
    %c1 = arith.constant 1 : index
    %c0_6 = arith.constant 0 : index
    %c0_7 = arith.constant 0 : index
    %7 = vector.load %arg9[%c1, %c0_6, %c0_7] : memref<3x2x256xf32, #tpu.memory_space<vmem>>, vector<1x2x256xf32>
    %8 = vector.shape_cast %7 : vector<1x2x256xf32> to vector<2x256xf32>
    %c2 = arith.constant 2 : index
    %c0_8 = arith.constant 0 : index
    %c0_9 = arith.constant 0 : index
    %9 = vector.load %arg9[%c2, %c0_8, %c0_9] : memref<3x2x256xf32, #tpu.memory_space<vmem>>, vector<1x2x256xf32>
    %10 = vector.shape_cast %9 : vector<1x2x256xf32> to vector<2x256xf32>
    %c0_10 = arith.constant 0 : index
    %c0_11 = arith.constant 0 : index
    %c0_12 = arith.constant 0 : index
    %11 = vector.load %arg10[%c0_10, %c0_11, %c0_12] : memref<3x2x256xf32, #tpu.memory_space<vmem>>, vector<1x2x256xf32>
    %12 = vector.shape_cast %11 : vector<1x2x256xf32> to vector<2x256xf32>
    %c1_13 = arith.constant 1 : index
    %c0_14 = arith.constant 0 : index
    %c0_15 = arith.constant 0 : index
    %13 = vector.load %arg10[%c1_13, %c0_14, %c0_15] : memref<3x2x256xf32, #tpu.memory_space<vmem>>, vector<1x2x256xf32>
    %14 = vector.shape_cast %13 : vector<1x2x256xf32> to vector<2x256xf32>
    %c2_16 = arith.constant 2 : index
    %c0_17 = arith.constant 0 : index
    %c0_18 = arith.constant 0 : index
    %15 = vector.load %arg10[%c2_16, %c0_17, %c0_18] : memref<3x2x256xf32, #tpu.memory_space<vmem>>, vector<1x2x256xf32>
    %16 = vector.shape_cast %15 : vector<1x2x256xf32> to vector<2x256xf32>
    %17 = arith.truncf %6 : vector<2x256xf32> to vector<2x256xbf16>
    %18 = arith.truncf %8 : vector<2x256xf32> to vector<2x256xbf16>
    %19 = arith.truncf %10 : vector<2x256xf32> to vector<2x256xbf16>
    %20 = tpu.concatenate %4, %17 in 1 : vector<2x384xbf16>, vector<2x256xbf16> -> vector<2x640xbf16>
    %c0_19 = arith.constant 0 : index
    %c0_20 = arith.constant 0 : index
    %21 = vector.load %arg4[%c0_19, %c0_20] : memref<640x1024xbf16, #tpu.memory_space<vmem>>, vector<640x1024xbf16>
    %cst = arith.constant dense<0.000000e+00> : vector<2x1024xf32>
    %22 = tpu.matmul %20, %21, %cst {dimension_numbers = #tpu.dot_dimension_numbers<[1], [0], [0], [1], [0, 0, 1, 1], [], []>} : vector<2x640xbf16>, vector<640x1024xbf16>, vector<2x1024xf32> -> vector<2x1024xf32>
    %c0_21 = arith.constant 0 : index
    %c0_22 = arith.constant 0 : index
    %c0_23 = arith.constant 0 : index
    %23 = vector.load %arg7[%c0_21, %c0_22, %c0_23] : memref<3x1x1024xf32, #tpu.memory_space<vmem>>, vector<1x1x1024xf32>
    %24 = vector.shape_cast %23 : vector<1x1x1024xf32> to vector<1x1024xf32>
    %25 = vector.broadcast %24 : vector<1x1024xf32> to vector<2x1024xf32>
    %26 = arith.addf %22, %25 : vector<2x1024xf32>
    %27 = tpu.concatenate %17, %18 in 1 : vector<2x256xbf16>, vector<2x256xbf16> -> vector<2x512xbf16>
    %c0_24 = arith.constant 0 : index
    %c0_25 = arith.constant 0 : index
    %28 = vector.load %arg5[%c0_24, %c0_25] : memref<512x1024xbf16, #tpu.memory_space<vmem>>, vector<512x1024xbf16>
    %cst_26 = arith.constant dense<0.000000e+00> : vector<2x1024xf32>
    %29 = tpu.matmul %27, %28, %cst_26 {dimension_numbers = #tpu.dot_dimension_numbers<[1], [0], [0], [1], [0, 0, 1, 1], [], []>} : vector<2x512xbf16>, vector<512x1024xbf16>, vector<2x1024xf32> -> vector<2x1024xf32>
    %c1_27 = arith.constant 1 : index
    %c0_28 = arith.constant 0 : index
    %c0_29 = arith.constant 0 : index
    %30 = vector.load %arg7[%c1_27, %c0_28, %c0_29] : memref<3x1x1024xf32, #tpu.memory_space<vmem>>, vector<1x1x1024xf32>
    %31 = vector.shape_cast %30 : vector<1x1x1024xf32> to vector<1x1024xf32>
    %32 = vector.broadcast %31 : vector<1x1024xf32> to vector<2x1024xf32>
    %33 = arith.addf %29, %32 : vector<2x1024xf32>
    %34 = tpu.concatenate %18, %19 in 1 : vector<2x256xbf16>, vector<2x256xbf16> -> vector<2x512xbf16>
    %c0_30 = arith.constant 0 : index
    %c0_31 = arith.constant 0 : index
    %35 = vector.load %arg6[%c0_30, %c0_31] : memref<512x1024xbf16, #tpu.memory_space<vmem>>, vector<512x1024xbf16>
    %cst_32 = arith.constant dense<0.000000e+00> : vector<2x1024xf32>
    %36 = tpu.matmul %34, %35, %cst_32 {dimension_numbers = #tpu.dot_dimension_numbers<[1], [0], [0], [1], [0, 0, 1, 1], [], []>} : vector<2x512xbf16>, vector<512x1024xbf16>, vector<2x1024xf32> -> vector<2x1024xf32>
    %c2_33 = arith.constant 2 : index
    %c0_34 = arith.constant 0 : index
    %c0_35 = arith.constant 0 : index
    %37 = vector.load %arg7[%c2_33, %c0_34, %c0_35] : memref<3x1x1024xf32, #tpu.memory_space<vmem>>, vector<1x1x1024xf32>
    %38 = vector.shape_cast %37 : vector<1x1x1024xf32> to vector<1x1024xf32>
    %39 = vector.broadcast %38 : vector<1x1024xf32> to vector<2x1024xf32>
    %40 = arith.addf %36, %39 : vector<2x1024xf32>
    %41 = vector.extract_strided_slice %26 {offsets = [0, 0], sizes = [2, 256], strides = [1, 1]} : vector<2x1024xf32> to vector<2x256xf32>
    %42 = arith.negf %41 : vector<2x256xf32>
    %43 = math.exp %42 : vector<2x256xf32>
    %cst_36 = arith.constant 1.000000e+00 : f32
    %44 = vector.broadcast %cst_36 : f32 to vector<2x256xf32>
    %45 = arith.addf %44, %43 : vector<2x256xf32>
    %46 = arith.divf %44, %45 : vector<2x256xf32>
    %47 = vector.extract_strided_slice %26 {offsets = [0, 256], sizes = [2, 256], strides = [1, 1]} : vector<2x1024xf32> to vector<2x256xf32>
    %48 = arith.negf %47 : vector<2x256xf32>
    %49 = math.exp %48 : vector<2x256xf32>
    %cst_37 = arith.constant 1.000000e+00 : f32
    %50 = vector.broadcast %cst_37 : f32 to vector<2x256xf32>
    %51 = arith.addf %50, %49 : vector<2x256xf32>
    %52 = arith.divf %50, %51 : vector<2x256xf32>
    %53 = vector.extract_strided_slice %26 {offsets = [0, 512], sizes = [2, 256], strides = [1, 1]} : vector<2x1024xf32> to vector<2x256xf32>
    %54 = math.tanh %53 : vector<2x256xf32>
    %55 = vector.extract_strided_slice %26 {offsets = [0, 768], sizes = [2, 256], strides = [1, 1]} : vector<2x1024xf32> to vector<2x256xf32>
    %56 = arith.negf %55 : vector<2x256xf32>
    %57 = math.exp %56 : vector<2x256xf32>
    %cst_38 = arith.constant 1.000000e+00 : f32
    %58 = vector.broadcast %cst_38 : f32 to vector<2x256xf32>
    %59 = arith.addf %58, %57 : vector<2x256xf32>
    %60 = arith.divf %58, %59 : vector<2x256xf32>
    %61 = arith.mulf %52, %12 : vector<2x256xf32>
    %62 = arith.mulf %46, %54 : vector<2x256xf32>
    %63 = arith.addf %61, %62 : vector<2x256xf32>
    %64 = math.tanh %63 : vector<2x256xf32>
    %65 = arith.mulf %60, %64 : vector<2x256xf32>
    %66 = vector.extract_strided_slice %33 {offsets = [0, 0], sizes = [2, 256], strides = [1, 1]} : vector<2x1024xf32> to vector<2x256xf32>
    %67 = arith.negf %66 : vector<2x256xf32>
    %68 = math.exp %67 : vector<2x256xf32>
    %cst_39 = arith.constant 1.000000e+00 : f32
    %69 = vector.broadcast %cst_39 : f32 to vector<2x256xf32>
    %70 = arith.addf %69, %68 : vector<2x256xf32>
    %71 = arith.divf %69, %70 : vector<2x256xf32>
    %72 = vector.extract_strided_slice %33 {offsets = [0, 256], sizes = [2, 256], strides = [1, 1]} : vector<2x1024xf32> to vector<2x256xf32>
    %73 = arith.negf %72 : vector<2x256xf32>
    %74 = math.exp %73 : vector<2x256xf32>
    %cst_40 = arith.constant 1.000000e+00 : f32
    %75 = vector.broadcast %cst_40 : f32 to vector<2x256xf32>
    %76 = arith.addf %75, %74 : vector<2x256xf32>
    %77 = arith.divf %75, %76 : vector<2x256xf32>
    %78 = vector.extract_strided_slice %33 {offsets = [0, 512], sizes = [2, 256], strides = [1, 1]} : vector<2x1024xf32> to vector<2x256xf32>
    %79 = math.tanh %78 : vector<2x256xf32>
    %80 = vector.extract_strided_slice %33 {offsets = [0, 768], sizes = [2, 256], strides = [1, 1]} : vector<2x1024xf32> to vector<2x256xf32>
    %81 = arith.negf %80 : vector<2x256xf32>
    %82 = math.exp %81 : vector<2x256xf32>
    %cst_41 = arith.constant 1.000000e+00 : f32
    %83 = vector.broadcast %cst_41 : f32 to vector<2x256xf32>
    %84 = arith.addf %83, %82 : vector<2x256xf32>
    %85 = arith.divf %83, %84 : vector<2x256xf32>
    %86 = arith.mulf %77, %14 : vector<2x256xf32>
    %87 = arith.mulf %71, %79 : vector<2x256xf32>
    %88 = arith.addf %86, %87 : vector<2x256xf32>
    %89 = math.tanh %88 : vector<2x256xf32>
    %90 = arith.mulf %85, %89 : vector<2x256xf32>
    %91 = vector.extract_strided_slice %40 {offsets = [0, 0], sizes = [2, 256], strides = [1, 1]} : vector<2x1024xf32> to vector<2x256xf32>
    %92 = arith.negf %91 : vector<2x256xf32>
    %93 = math.exp %92 : vector<2x256xf32>
    %cst_42 = arith.constant 1.000000e+00 : f32
    %94 = vector.broadcast %cst_42 : f32 to vector<2x256xf32>
    %95 = arith.addf %94, %93 : vector<2x256xf32>
    %96 = arith.divf %94, %95 : vector<2x256xf32>
    %97 = vector.extract_strided_slice %40 {offsets = [0, 256], sizes = [2, 256], strides = [1, 1]} : vector<2x1024xf32> to vector<2x256xf32>
    %98 = arith.negf %97 : vector<2x256xf32>
    %99 = math.exp %98 : vector<2x256xf32>
    %cst_43 = arith.constant 1.000000e+00 : f32
    %100 = vector.broadcast %cst_43 : f32 to vector<2x256xf32>
    %101 = arith.addf %100, %99 : vector<2x256xf32>
    %102 = arith.divf %100, %101 : vector<2x256xf32>
    %103 = vector.extract_strided_slice %40 {offsets = [0, 512], sizes = [2, 256], strides = [1, 1]} : vector<2x1024xf32> to vector<2x256xf32>
    %104 = math.tanh %103 : vector<2x256xf32>
    %105 = vector.extract_strided_slice %40 {offsets = [0, 768], sizes = [2, 256], strides = [1, 1]} : vector<2x1024xf32> to vector<2x256xf32>
    %106 = arith.negf %105 : vector<2x256xf32>
    %107 = math.exp %106 : vector<2x256xf32>
    %cst_44 = arith.constant 1.000000e+00 : f32
    %108 = vector.broadcast %cst_44 : f32 to vector<2x256xf32>
    %109 = arith.addf %108, %107 : vector<2x256xf32>
    %110 = arith.divf %108, %109 : vector<2x256xf32>
    %111 = arith.mulf %102, %16 : vector<2x256xf32>
    %112 = arith.mulf %96, %104 : vector<2x256xf32>
    %113 = arith.addf %111, %112 : vector<2x256xf32>
    %114 = math.tanh %113 : vector<2x256xf32>
    %115 = arith.mulf %110, %114 : vector<2x256xf32>
    %c0_45 = arith.constant 0 : index
    %c0_46 = arith.constant 0 : index
    %c0_47 = arith.constant 0 : index
    %116 = vector.load %arg9[%c0_45, %c0_46, %c0_47] : memref<3x2x256xf32, #tpu.memory_space<vmem>>, vector<1x2x256xf32>
    %117 = vector.shape_cast %116 : vector<1x2x256xf32> to vector<2x256xf32>
    %118 = vector.shape_cast %65 : vector<2x256xf32> to vector<1x2x256xf32>
    tpu.vector_store %arg9[%c0_45, %c0_46, %c0_47], %118 {strides = array<i32>} : memref<3x2x256xf32, #tpu.memory_space<vmem>>, vector<1x2x256xf32>,
    %c1_48 = arith.constant 1 : index
    %c0_49 = arith.constant 0 : index
    %c0_50 = arith.constant 0 : index
    %119 = vector.load %arg9[%c1_48, %c0_49, %c0_50] : memref<3x2x256xf32, #tpu.memory_space<vmem>>, vector<1x2x256xf32>
    %120 = vector.shape_cast %119 : vector<1x2x256xf32> to vector<2x256xf32>
    %121 = vector.shape_cast %90 : vector<2x256xf32> to vector<1x2x256xf32>
    tpu.vector_store %arg9[%c1_48, %c0_49, %c0_50], %121 {strides = array<i32>} : memref<3x2x256xf32, #tpu.memory_space<vmem>>, vector<1x2x256xf32>,
    %c2_51 = arith.constant 2 : index
    %c0_52 = arith.constant 0 : index
    %c0_53 = arith.constant 0 : index
    %122 = vector.load %arg9[%c2_51, %c0_52, %c0_53] : memref<3x2x256xf32, #tpu.memory_space<vmem>>, vector<1x2x256xf32>
    %123 = vector.shape_cast %122 : vector<1x2x256xf32> to vector<2x256xf32>
    %124 = vector.shape_cast %115 : vector<2x256xf32> to vector<1x2x256xf32>
    tpu.vector_store %arg9[%c2_51, %c0_52, %c0_53], %124 {strides = array<i32>} : memref<3x2x256xf32, #tpu.memory_space<vmem>>, vector<1x2x256xf32>,
    %c0_54 = arith.constant 0 : index
    %c0_55 = arith.constant 0 : index
    %c0_56 = arith.constant 0 : index
    %125 = vector.load %arg10[%c0_54, %c0_55, %c0_56] : memref<3x2x256xf32, #tpu.memory_space<vmem>>, vector<1x2x256xf32>
    %126 = vector.shape_cast %125 : vector<1x2x256xf32> to vector<2x256xf32>
    %127 = vector.shape_cast %63 : vector<2x256xf32> to vector<1x2x256xf32>
    tpu.vector_store %arg10[%c0_54, %c0_55, %c0_56], %127 {strides = array<i32>} : memref<3x2x256xf32, #tpu.memory_space<vmem>>, vector<1x2x256xf32>,
    %c1_57 = arith.constant 1 : index
    %c0_58 = arith.constant 0 : index
    %c0_59 = arith.constant 0 : index
    %128 = vector.load %arg10[%c1_57, %c0_58, %c0_59] : memref<3x2x256xf32, #tpu.memory_space<vmem>>, vector<1x2x256xf32>
    %129 = vector.shape_cast %128 : vector<1x2x256xf32> to vector<2x256xf32>
    %130 = vector.shape_cast %88 : vector<2x256xf32> to vector<1x2x256xf32>
    tpu.vector_store %arg10[%c1_57, %c0_58, %c0_59], %130 {strides = array<i32>} : memref<3x2x256xf32, #tpu.memory_space<vmem>>, vector<1x2x256xf32>,
    %c2_60 = arith.constant 2 : index
    %c0_61 = arith.constant 0 : index
    %c0_62 = arith.constant 0 : index
    %131 = vector.load %arg10[%c2_60, %c0_61, %c0_62] : memref<3x2x256xf32, #tpu.memory_space<vmem>>, vector<1x2x256xf32>
    %132 = vector.shape_cast %131 : vector<1x2x256xf32> to vector<2x256xf32>
    %133 = vector.shape_cast %113 : vector<2x256xf32> to vector<1x2x256xf32>
    tpu.vector_store %arg10[%c2_60, %c0_61, %c0_62], %133 {strides = array<i32>} : memref<3x2x256xf32, #tpu.memory_space<vmem>>, vector<1x2x256xf32>,
    %c0_63 = arith.constant 0 : index
    %c0_64 = arith.constant 0 : index
    %c0_65 = arith.constant 0 : index
    %134 = vector.load %arg8[%c0_63, %c0_64, %c0_65] : memref<1x2x256xf32, #tpu.memory_space<vmem>>, vector<1x2x256xf32>
    %135 = vector.shape_cast %134 : vector<1x2x256xf32> to vector<2x256xf32>
    %136 = vector.shape_cast %115 : vector<2x256xf32> to vector<1x2x256xf32>
    tpu.vector_store %arg8[%c0_63, %c0_64, %c0_65], %136 {strides = array<i32>} : memref<1x2x256xf32, #tpu.memory_space<vmem>>, vector<1x2x256xf32>,
    return
  }
  func.func @transform_0(%arg0: i32) -> (i32, i32, i32) {
    %c0_i32 = arith.constant 0 : i32
    %c0_i32_0 = arith.constant 0 : i32
    %c0_i32_1 = arith.constant 0 : i32
    return %arg0, %c0_i32, %c0_i32_0 : i32, i32, i32
  }
  func.func @transform_1(%arg0: i32) -> (i32, i32, i32) {
    %c0_i32 = arith.constant 0 : i32
    %c0_i32_0 = arith.constant 0 : i32
    %c0_i32_1 = arith.constant 0 : i32
    %c0_i32_2 = arith.constant 0 : i32
    return %c0_i32, %c0_i32_0, %c0_i32_1 : i32, i32, i32
  }
  func.func @transform_2(%arg0: i32) -> (i32, i32, i32) {
    %c0_i32 = arith.constant 0 : i32
    %c0_i32_0 = arith.constant 0 : i32
    %c0_i32_1 = arith.constant 0 : i32
    %c0_i32_2 = arith.constant 0 : i32
    return %c0_i32, %c0_i32_0, %c0_i32_1 : i32, i32, i32
  }
  func.func @transform_3(%arg0: i32) -> (i32, i32) {
    %c0_i32 = arith.constant 0 : i32
    %c0_i32_0 = arith.constant 0 : i32
    %c0_i32_1 = arith.constant 0 : i32
    return %c0_i32, %c0_i32_0 : i32, i32
  }
  func.func @transform_4(%arg0: i32) -> (i32, i32) {
    %c0_i32 = arith.constant 0 : i32
    %c0_i32_0 = arith.constant 0 : i32
    %c0_i32_1 = arith.constant 0 : i32
    return %c0_i32, %c0_i32_0 : i32, i32
  }
  func.func @transform_5(%arg0: i32) -> (i32, i32) {
    %c0_i32 = arith.constant 0 : i32
    %c0_i32_0 = arith.constant 0 : i32
    %c0_i32_1 = arith.constant 0 : i32
    return %c0_i32, %c0_i32_0 : i32, i32
  }
  func.func @transform_6(%arg0: i32) -> (i32, i32, i32) {
    %c0_i32 = arith.constant 0 : i32
    %c0_i32_0 = arith.constant 0 : i32
    %c0_i32_1 = arith.constant 0 : i32
    %c0_i32_2 = arith.constant 0 : i32
    return %c0_i32, %c0_i32_0, %c0_i32_1 : i32, i32, i32
  }
  func.func @transform_7(%arg0: i32) -> (i32, i32, i32) {
    %c0_i32 = arith.constant 0 : i32
    %c0_i32_0 = arith.constant 0 : i32
    %c0_i32_1 = arith.constant 0 : i32
    return %arg0, %c0_i32, %c0_i32_0 : i32, i32, i32
  }
  func.func @transform_8(%arg0: i32) -> (i32, i32, i32) {
    %c0_i32 = arith.constant 0 : i32
    %c0_i32_0 = arith.constant 0 : i32
    %c0_i32_1 = arith.constant 0 : i32
    %c0_i32_2 = arith.constant 0 : i32
    return %c0_i32, %c0_i32_0, %c0_i32_1 : i32, i32, i32
  }
  func.func @transform_9(%arg0: i32) -> (i32, i32, i32) {
    %c0_i32 = arith.constant 0 : i32
    %c0_i32_0 = arith.constant 0 : i32
    %c0_i32_1 = arith.constant 0 : i32
    %c0_i32_2 = arith.constant 0 : i32
    return %c0_i32, %c0_i32_0, %c0_i32_1 : i32, i32, i32
  }
}

</mosaic_0001>

<llo_original>
// kernel: tpu_custom_call.1
$region0: #{tpu_custom_call.1}
  #allocation0 [shape = 'u32[]', space=smem, size = 0x4, offset = 0x4, fixed_abs, tag = 'smem constant byte address 0x4 - core index']
  #allocation1 [shape = 'u32[144,128]{1,0:T(1,128)}', space=vmem, size = 0x12000, scoped, tag = 'internal scratch']
  %s0 = inlined_call_operand.hbm [shape: bf16[1,2,384], index: 0, kind: input, shape index: {}]
  %s1 = inlined_call_operand.hbm [shape: f32[3,2,256], index: 1, kind: input, shape index: {}]
  %s2 = inlined_call_operand.hbm [shape: f32[3,2,256], index: 2, kind: input, shape index: {}]
  %s3 = inlined_call_operand.hbm [shape: bf16[640,1024], index: 3, kind: input, shape index: {}]
  %s4 = inlined_call_operand.hbm [shape: bf16[512,1024], index: 4, kind: input, shape index: {}]
  %s5 = inlined_call_operand.hbm [shape: bf16[512,1024], index: 5, kind: input, shape index: {}]
  %s6 = inlined_call_operand.hbm [shape: f32[3,1,1024], index: 6, kind: input, shape index: {}]
  %s7 = inlined_call_operand.hbm [shape: f32[1,2,256], index: 7, kind: output, shape index: {0}]
  %s8 = inlined_call_operand.hbm [shape: f32[3,2,256], index: 8, kind: output, shape index: {1}]
  %s9 = inlined_call_operand.hbm [shape: f32[3,2,256], index: 9, kind: output, shape index: {2}]
  %10 = xla_tuple %s7, %s8, %s9
  %s11 = sld [smem:[#allocation0]]
  $region86: #{tpu_custom_call.1} parent=0
    _
  %s13 = ssub.s32 1, %s11
  %s14 = scalar_select 0, %s13, %s11
  $region1: #{tpu_custom_call.1} parent=0
    #allocation2 [shape = 'u8[1536]{0}', space=vmem, size = 0x800, scoped, tag = 'input window, operand 0, single buffered']
    #allocation3 [shape = 's32[1]{0}', space=sflag, size = 0x4, scoped, tag = 'scoped memory for tpu_custom_call.1']
    #allocation4 [shape = 's32[1]{0}', space=sflag, size = 0x4, scoped, tag = 'scoped memory for tpu_custom_call.1']
    #allocation5 [shape = 'u8[6144]{0}', space=vmem, size = 0x1800, scoped, tag = 'input window, operand 1, single buffered']
    #allocation6 [shape = 's32[1]{0}', space=sflag, size = 0x4, scoped, tag = 'scoped memory for tpu_custom_call.1']
    #allocation7 [shape = 'u8[6144]{0}', space=vmem, size = 0x1800, scoped, tag = 'input window, operand 2, single buffered']
    #allocation8 [shape = 'u8[1310720]{0}', space=vmem, size = 0x140000, scoped, tag = 'input window, operand 3, single buffered']
    #allocation9 [shape = 's32[1]{0}', space=sflag, size = 0x4, scoped, tag = 'scoped memory for tpu_custom_call.1']
    #allocation10 [shape = 'u8[1048576]{0}', space=vmem, size = 0x100000, scoped, tag = 'input window, operand 4, single buffered']
    #allocation11 [shape = 'u8[1048576]{0}', space=vmem, size = 0x100000, scoped, tag = 'input window, operand 5, single buffered']
    #allocation12 [shape = 's32[1]{0}', space=sflag, size = 0x4, scoped, tag = 'scoped memory for tpu_custom_call.1']
    #allocation13 [shape = 'u8[12288]{0}', space=vmem, size = 0x3000, scoped, tag = 'input window, operand 6, single buffered']
    #allocation14 [shape = 'u8[2048]{0}', space=vmem, size = 0x800, scoped, tag = 'output window, operand 0, single buffered']
    #allocation15 [shape = 'u8[6144]{0}', space=vmem, size = 0x1800, scoped, tag = 'output window, operand 1, single buffered']
    #allocation16 [shape = 's32[1]{0}', space=sflag, size = 0x4, scoped, tag = 'scoped memory for tpu_custom_call.1']
    #allocation17 [shape = 'u8[6144]{0}', space=vmem, size = 0x1800, scoped, tag = 'output window, operand 2, single buffered']
    %15 = vsyncpa [#allocation3], 0
    %16 = vsyncpa [#allocation6], 0
    %17 = vsyncpa [#allocation9], 0
    %18 = vsyncpa [#allocation12], 0
    %19 = vsyncpa [#allocation4], 0
    %20 = vsyncpa [#allocation16], 0
    // Predicated region
    $region2: #{tpu_custom_call.1} parent=1 // pred_check
      _
    $region3: #{tpu_custom_call.1} parent=1 // pred_check_branch
      %22 = sbr.rel (0) target = $region5
    $region4: #{tpu_custom_call.1} parent=1 // pred_region
      %s24 = ssub.s32 48, 48
      %25 = vsyncadd [#allocation3], %s24
      %s27 = sshll.u32 [#allocation2], 4
      %s28 = int_to_ptr.vmem [resolvable:$true] %s27
      %30 = dma.hbm_to_vmem [thread:$0]  %s0, 48, %s28, [#allocation3]
    $region5: #{tpu_custom_call.1} parent=1 // pred_fallthru
      _
    // Predicated region
    $region6: #{tpu_custom_call.1} parent=1 // pred_check
      _
    $region7: #{tpu_custom_call.1} parent=1 // pred_check_branch
      %32 = sbr.rel (0) target = $region9
    $region8: #{tpu_custom_call.1} parent=1 // pred_region
      %s34 = ssub.s32 192, 192
      %35 = vsyncadd [#allocation6], %s34
      %s36 = sshll.u32 [#allocation5], 4
      %s37 = int_to_ptr.vmem [resolvable:$true] %s36
      %42 = dma.hbm_to_vmem [thread:$0]  %s1, 192, %s37, [#allocation6], 64, 64, 4
    $region9: #{tpu_custom_call.1} parent=1 // pred_fallthru
      _
    // Predicated region
    $region10: #{tpu_custom_call.1} parent=1 // pred_check
      _
    $region11: #{tpu_custom_call.1} parent=1 // pred_check_branch
      %44 = sbr.rel (0) target = $region13
    $region12: #{tpu_custom_call.1} parent=1 // pred_region
      %s46 = ssub.s32 192, 192
      %47 = vsyncadd [#allocation6], %s46
      %s48 = sshll.u32 [#allocation7], 4
      %s49 = int_to_ptr.vmem [resolvable:$true] %s48
      %54 = dma.hbm_to_vmem [thread:$0]  %s2, 192, %s49, [#allocation6], 64, 64, 4
    $region13: #{tpu_custom_call.1} parent=1 // pred_fallthru
      _
    // Predicated region
    $region14: #{tpu_custom_call.1} parent=1 // pred_check
      _
    $region15: #{tpu_custom_call.1} parent=1 // pred_check_branch
      %56 = sbr.rel (0) target = $region17
    $region16: #{tpu_custom_call.1} parent=1 // pred_region
      %s58 = ssub.s32 40960, 40960
      %59 = vsyncadd [#allocation9], %s58
      %s60 = sshll.u32 [#allocation8], 4
      %s61 = int_to_ptr.vmem [resolvable:$true] %s60
      %66 = dma.hbm_to_vmem [thread:$0]  %s3, 40960, %s61, [#allocation9], 512, 512, 32
    $region17: #{tpu_custom_call.1} parent=1 // pred_fallthru
      _
    // Predicated region
    $region18: #{tpu_custom_call.1} parent=1 // pred_check
      _
    $region19: #{tpu_custom_call.1} parent=1 // pred_check_branch
      %68 = sbr.rel (0) target = $region21
    $region20: #{tpu_custom_call.1} parent=1 // pred_region
      %s70 = ssub.s32 32768, 32768
      %71 = vsyncadd [#allocation9], %s70
      %s72 = sshll.u32 [#allocation10], 4
      %s73 = int_to_ptr.vmem [resolvable:$true] %s72
      %78 = dma.hbm_to_vmem [thread:$0]  %s4, 32768, %s73, [#allocation9], 512, 512, 32
    $region21: #{tpu_custom_call.1} parent=1 // pred_fallthru
      _
    // Predicated region
    $region22: #{tpu_custom_call.1} parent=1 // pred_check
      _
    $region23: #{tpu_custom_call.1} parent=1 // pred_check_branch
      %80 = sbr.rel (0) target = $region25
    $region24: #{tpu_custom_call.1} parent=1 // pred_region
      %s82 = ssub.s32 32768, 32768
      %83 = vsyncadd [#allocation12], %s82
      %s84 = sshll.u32 [#allocation11], 4
      %s85 = int_to_ptr.vmem [resolvable:$true] %s84
      %90 = dma.hbm_to_vmem [thread:$0]  %s5, 32768, %s85, [#allocation12], 512, 512, 32
    $region25: #{tpu_custom_call.1} parent=1 // pred_fallthru
      _
    // Predicated region
    $region26: #{tpu_custom_call.1} parent=1 // pred_check
      _
    $region27: #{tpu_custom_call.1} parent=1 // pred_check_branch
      %92 = sbr.rel (0) target = $region29
    $region28: #{tpu_custom_call.1} parent=1 // pred_region
      %s94 = ssub.s32 384, 384
      %95 = vsyncadd [#allocation12], %s94
      %s96 = sshll.u32 [#allocation13], 4
      %s97 = int_to_ptr.vmem [resolvable:$true] %s96
      %102 = dma.hbm_to_vmem [thread:$0]  %s6, 384, %s97, [#allocation12], 128, 128, 8
    $region29: #{tpu_custom_call.1} parent=1 // pred_fallthru
      _
    // Predicated region
    $region30: #{tpu_custom_call.1} parent=1 // pred_check
      _
    $region31: #{tpu_custom_call.1} parent=1 // pred_check_branch
      %104 = sbr.rel (0) target = $region33
    $region32: #{tpu_custom_call.1} parent=1 // pred_region
      %105 = dma.done [#allocation3], 48
    $region33: #{tpu_custom_call.1} parent=1 // pred_fallthru
      _
    // Predicated region
    $region34: #{tpu_custom_call.1} parent=1 // pred_check
      _
    $region35: #{tpu_custom_call.1} parent=1 // pred_check_branch
      %107 = sbr.rel (0) target = $region37
    $region36: #{tpu_custom_call.1} parent=1 // pred_region
      %108 = dma.done [#allocation6], 192
    $region37: #{tpu_custom_call.1} parent=1 // pred_fallthru
      _
    // Predicated region
    $region38: #{tpu_custom_call.1} parent=1 // pred_check
      _
    $region39: #{tpu_custom_call.1} parent=1 // pred_check_branch
      %110 = sbr.rel (0) target = $region41
    $region40: #{tpu_custom_call.1} parent=1 // pred_region
      %111 = dma.done [#allocation6], 192
    $region41: #{tpu_custom_call.1} parent=1 // pred_fallthru
      _
    // Predicated region
    $region42: #{tpu_custom_call.1} parent=1 // pred_check
      _
    $region43: #{tpu_custom_call.1} parent=1 // pred_check_branch
      %113 = sbr.rel (0) target = $region45
    $region44: #{tpu_custom_call.1} parent=1 // pred_region
      %114 = dma.done [#allocation9], 40960
    $region45: #{tpu_custom_call.1} parent=1 // pred_fallthru
      _
    // Predicated region
    $region46: #{tpu_custom_call.1} parent=1 // pred_check
      _
    $region47: #{tpu_custom_call.1} parent=1 // pred_check_branch
      %116 = sbr.rel (0) target = $region49
    $region48: #{tpu_custom_call.1} parent=1 // pred_region
      %117 = dma.done [#allocation9], 32768
    $region49: #{tpu_custom_call.1} parent=1 // pred_fallthru
      _
    // Predicated region
    $region50: #{tpu_custom_call.1} parent=1 // pred_check
      _
    $region51: #{tpu_custom_call.1} parent=1 // pred_check_branch
      %119 = sbr.rel (0) target = $region53
    $region52: #{tpu_custom_call.1} parent=1 // pred_region
      %120 = dma.done [#allocation12], 32768
    $region53: #{tpu_custom_call.1} parent=1 // pred_fallthru
      _
    // Predicated region
    $region54: #{tpu_custom_call.1} parent=1 // pred_check
      _
    $region55: #{tpu_custom_call.1} parent=1 // pred_check_branch
      %122 = sbr.rel (0) target = $region57
    $region56: #{tpu_custom_call.1} parent=1 // pred_region
      %123 = dma.done [#allocation12], 384
    $region57: #{tpu_custom_call.1} parent=1 // pred_fallthru
      _
    %p125 = scmp.eq.s32.totalorder 0, 0
    // Predicated region
    $region58: #{tpu_custom_call.1} parent=1 // pred_check
      %p126 = pneg %p125
    $region59: #{tpu_custom_call.1} parent=1 // pred_check_branch
      %128 = sbr.rel (%p126) target = $region61
    $region60: #{tpu_custom_call.1} parent=1 // pred_region
      %v129 = vld [vmem:[#allocation5] sm:$0xf]
      %v130 = vld [vmem:[#allocation5 + $0x4] sm:$0xf]
      %v131 = vld [vmem:[#allocation5 + $0x8] sm:$0xf]
      %132 = vst [vmem:[#allocation15] sm:$0xf] %v129
      %133 = vst [vmem:[#allocation15 + $0x4] sm:$0xf] %v130
      %134 = vst [vmem:[#allocation15 + $0x8] sm:$0xf] %v131
      %v135 = vld [vmem:[#allocation7] sm:$0xf]
      %v136 = vld [vmem:[#allocation7 + $0x4] sm:$0xf]
      %v137 = vld [vmem:[#allocation7 + $0x8] sm:$0xf]
      %138 = vst [vmem:[#allocation17] sm:$0xf] %v135
      %139 = vst [vmem:[#allocation17 + $0x4] sm:$0xf] %v136
      %140 = vst [vmem:[#allocation17 + $0x8] sm:$0xf] %v137
    $region61: #{tpu_custom_call.1} parent=1 // pred_fallthru
      _
    %v141 = vld [vmem:[#allocation2] sm:$0x7]
    %v142 = vld [vmem:[#allocation15] sm:$0xf]
    %s143 = scalar_lea.vmem [#allocation15], 4
    %v144 = vld [vmem:[%s143] sm:$0xf]
    %s145 = scalar_lea.vmem [#allocation15], 8
    %v146 = vld [vmem:[%s145] sm:$0xf]
    %v147 = vld [vmem:[#allocation17] sm:$0xf]
    %s148 = scalar_lea.vmem [#allocation17], 4
    %v149 = vld [vmem:[%s148] sm:$0xf]
    %s150 = scalar_lea.vmem [#allocation17], 8
    %v151 = vld [vmem:[%s150] sm:$0xf]
    %v154 = vunpack.c.l.s4 1983009808
    %v155 = vunpack.c.0.s8 %v154
    %v156 = vlaneseq
    %v157 = vshrl.u32 %v156, 7
    %v158 = vsub.s32 %v155, %v157
    %v159 = vrot.slane %v142, %v158
    %v160 = vcombine.high %v159, %v159
    %v163 = vpack.c.bf16 %v159, %v159
    %v164 = vpack.c.bf16 %v160, %v160
    %v167 = vunpack.c.l.s4 1983009808
    %v168 = vunpack.c.0.s8 %v167
    %v169 = vlaneseq
    %v170 = vshrl.u32 %v169, 7
    %v171 = vsub.s32 %v168, %v170
    %v172 = vrot.slane %v144, %v171
    %v173 = vcombine.high %v172, %v172
    %v176 = vpack.c.bf16 %v172, %v172
    %v177 = vpack.c.bf16 %v173, %v173
    %v180 = vunpack.c.l.s4 1983009808
    %v181 = vunpack.c.0.s8 %v180
    %v182 = vlaneseq
    %v183 = vshrl.u32 %v182, 7
    %v184 = vsub.s32 %v181, %v183
    %v185 = vrot.slane %v146, %v184
    %v186 = vcombine.high %v185, %v185
    %v189 = vpack.c.bf16 %v185, %v185
    %v190 = vpack.c.bf16 %v186, %v186
    %v193 = vunpack.c.l.s4 1966171168
    %v194 = vunpack.c.0.s8 %v193
    %v195 = vlaneseq
    %v196 = vshrl.u32 %v195, 7
    %v197 = vsub.s32 %v194, %v196
    %v198 = vrot.slane %v141, %v197
    %v199 = vcombine.high %v198, %v198
    %v201 = vunpack.c.l.s4 1966171168
    %v202 = vunpack.c.0.s8 %v201
    %v203 = vlaneseq
    %v204 = vshrl.u32 %v203, 7
    %v205 = vsub.s32 %v202, %v204
    %v206 = vrot.slane %v198, %v205
    %v208 = vunpack.c.l.s4 1966171168
    %v209 = vunpack.c.0.s8 %v208
    %v210 = vlaneseq
    %v211 = vshrl.u32 %v210, 7
    %v212 = vsub.s32 %v209, %v211
    %v213 = vrot.slane %v199, %v212
    %v214 = vcombine.high %v206, %v206
    %v218 = vld [vmem:[#allocation8] sm:$0xff]
    %v219 = vld [vmem:[#allocation8 + $0x8] sm:$0xff]
    %v220 = vld [vmem:[#allocation8 + $0x10] sm:$0xff]
    %v221 = vld [vmem:[#allocation8 + $0x18] sm:$0xff]
    %v222 = vld [vmem:[#allocation8 + $0x20] sm:$0xff]
    %v223 = vld [vmem:[#allocation8 + $0x28] sm:$0xff]
    %v224 = vld [vmem:[#allocation8 + $0x30] sm:$0xff]
    %v225 = vld [vmem:[#allocation8 + $0x38] sm:$0xff]
    %v226 = vld [vmem:[#allocation8 + $0x40] sm:$0xff]
    %v227 = vld [vmem:[#allocation8 + $0x48] sm:$0xff]
    %v228 = vld [vmem:[#allocation8 + $0x50] sm:$0xff]
    %v229 = vld [vmem:[#allocation8 + $0x58] sm:$0xff]
    %v230 = vld [vmem:[#allocation8 + $0x60] sm:$0xff]
    %v231 = vld [vmem:[#allocation8 + $0x68] sm:$0xff]
    %v232 = vld [vmem:[#allocation8 + $0x70] sm:$0xff]
    %v233 = vld [vmem:[#allocation8 + $0x78] sm:$0xff]
    %v234 = vld [vmem:[#allocation8 + $0x80] sm:$0xff]
    %v235 = vld [vmem:[#allocation8 + $0x88] sm:$0xff]
    %v236 = vld [vmem:[#allocation8 + $0x90] sm:$0xff]
    %v237 = vld [vmem:[#allocation8 + $0x98] sm:$0xff]
    %v238 = vld [vmem:[#allocation8 + $0xa0] sm:$0xff]
    %v239 = vld [vmem:[#allocation8 + $0xa8] sm:$0xff]
    %v240 = vld [vmem:[#allocation8 + $0xb0] sm:$0xff]
    %v241 = vld [vmem:[#allocation8 + $0xb8] sm:$0xff]
    %v242 = vld [vmem:[#allocation8 + $0xc0] sm:$0xff]
    %v243 = vld [vmem:[#allocation8 + $0xc8] sm:$0xff]
    %v244 = vld [vmem:[#allocation8 + $0xd0] sm:$0xff]
    %v245 = vld [vmem:[#allocation8 + $0xd8] sm:$0xff]
    %v246 = vld [vmem:[#allocation8 + $0xe0] sm:$0xff]
    %v247 = vld [vmem:[#allocation8 + $0xe8] sm:$0xff]
    %v248 = vld [vmem:[#allocation8 + $0xf0] sm:$0xff]
    %v249 = vld [vmem:[#allocation8 + $0xf8] sm:$0xff]
    %v250 = vld [vmem:[#allocation8 + $0x100] sm:$0xff]
    %v251 = vld [vmem:[#allocation8 + $0x108] sm:$0xff]
    %v252 = vld [vmem:[#allocation8 + $0x110] sm:$0xff]
    %v253 = vld [vmem:[#allocation8 + $0x118] sm:$0xff]
    %v254 = vld [vmem:[#allocation8 + $0x120] sm:$0xff]
    %v255 = vld [vmem:[#allocation8 + $0x128] sm:$0xff]
    %v256 = vld [vmem:[#allocation8 + $0x130] sm:$0xff]
    %v257 = vld [vmem:[#allocation8 + $0x138] sm:$0xff]
    %v258 = vld [vmem:[#allocation8 + $0x140] sm:$0xff]
    %v259 = vld [vmem:[#allocation8 + $0x148] sm:$0xff]
    %v260 = vld [vmem:[#allocation8 + $0x150] sm:$0xff]
    %v261 = vld [vmem:[#allocation8 + $0x158] sm:$0xff]
    %v262 = vld [vmem:[#allocation8 + $0x160] sm:$0xff]
    %v263 = vld [vmem:[#allocation8 + $0x168] sm:$0xff]
    %v264 = vld [vmem:[#allocation8 + $0x170] sm:$0xff]
    %v265 = vld [vmem:[#allocation8 + $0x178] sm:$0xff]
    %v266 = vld [vmem:[#allocation8 + $0x180] sm:$0xff]
    %v267 = vld [vmem:[#allocation8 + $0x188] sm:$0xff]
    %v268 = vld [vmem:[#allocation8 + $0x190] sm:$0xff]
    %v269 = vld [vmem:[#allocation8 + $0x198] sm:$0xff]
    %v270 = vld [vmem:[#allocation8 + $0x1a0] sm:$0xff]
    %v271 = vld [vmem:[#allocation8 + $0x1a8] sm:$0xff]
    %v272 = vld [vmem:[#allocation8 + $0x1b0] sm:$0xff]
    %v273 = vld [vmem:[#allocation8 + $0x1b8] sm:$0xff]
    %v274 = vld [vmem:[#allocation8 + $0x1c0] sm:$0xff]
    %v275 = vld [vmem:[#allocation8 + $0x1c8] sm:$0xff]
    %v276 = vld [vmem:[#allocation8 + $0x1d0] sm:$0xff]
    %v277 = vld [vmem:[#allocation8 + $0x1d8] sm:$0xff]
    %v278 = vld [vmem:[#allocation8 + $0x1e0] sm:$0xff]
    %v279 = vld [vmem:[#allocation8 + $0x1e8] sm:$0xff]
    %v280 = vld [vmem:[#allocation8 + $0x1f0] sm:$0xff]
    %v281 = vld [vmem:[#allocation8 + $0x1f8] sm:$0xff]
    %v282 = vld [vmem:[#allocation8 + $0x200] sm:$0xff]
    %v283 = vld [vmem:[#allocation8 + $0x208] sm:$0xff]
    %v284 = vld [vmem:[#allocation8 + $0x210] sm:$0xff]
    %v285 = vld [vmem:[#allocation8 + $0x218] sm:$0xff]
    %v286 = vld [vmem:[#allocation8 + $0x220] sm:$0xff]
    %v287 = vld [vmem:[#allocation8 + $0x228] sm:$0xff]
    %v288 = vld [vmem:[#allocation8 + $0x230] sm:$0xff]
    %v289 = vld [vmem:[#allocation8 + $0x238] sm:$0xff]
    %v290 = vld [vmem:[#allocation8 + $0x240] sm:$0xff]
    %v291 = vld [vmem:[#allocation8 + $0x248] sm:$0xff]
    %v292 = vld [vmem:[#allocation8 + $0x250] sm:$0xff]
    %v293 = vld [vmem:[#allocation8 + $0x258] sm:$0xff]
    %v294 = vld [vmem:[#allocation8 + $0x260] sm:$0xff]
    %v295 = vld [vmem:[#allocation8 + $0x268] sm:$0xff]
    %v296 = vld [vmem:[#allocation8 + $0x270] sm:$0xff]
    %v297 = vld [vmem:[#allocation8 + $0x278] sm:$0xff]
    %v298 = vld [vmem:[#allocation8 + $0x280] sm:$0xff]
    %v299 = vld [vmem:[#allocation8 + $0x288] sm:$0xff]
    %v300 = vld [vmem:[#allocation8 + $0x290] sm:$0xff]
    %v301 = vld [vmem:[#allocation8 + $0x298] sm:$0xff]
    %v302 = vld [vmem:[#allocation8 + $0x2a0] sm:$0xff]
    %v303 = vld [vmem:[#allocation8 + $0x2a8] sm:$0xff]
    %v304 = vld [vmem:[#allocation8 + $0x2b0] sm:$0xff]
    %v305 = vld [vmem:[#allocation8 + $0x2b8] sm:$0xff]
    %v306 = vld [vmem:[#allocation8 + $0x2c0] sm:$0xff]
    %v307 = vld [vmem:[#allocation8 + $0x2c8] sm:$0xff]
    %v308 = vld [vmem:[#allocation8 + $0x2d0] sm:$0xff]
    %v309 = vld [vmem:[#allocation8 + $0x2d8] sm:$0xff]
    %v310 = vld [vmem:[#allocation8 + $0x2e0] sm:$0xff]
    %v311 = vld [vmem:[#allocation8 + $0x2e8] sm:$0xff]
    %v312 = vld [vmem:[#allocation8 + $0x2f0] sm:$0xff]
    %v313 = vld [vmem:[#allocation8 + $0x2f8] sm:$0xff]
    %v314 = vld [vmem:[#allocation8 + $0x300] sm:$0xff]
    %v315 = vld [vmem:[#allocation8 + $0x308] sm:$0xff]
    %v316 = vld [vmem:[#allocation8 + $0x310] sm:$0xff]
    %v317 = vld [vmem:[#allocation8 + $0x318] sm:$0xff]
    %v318 = vld [vmem:[#allocation8 + $0x320] sm:$0xff]
    %v319 = vld [vmem:[#allocation8 + $0x328] sm:$0xff]
    %v320 = vld [vmem:[#allocation8 + $0x330] sm:$0xff]
    %v321 = vld [vmem:[#allocation8 + $0x338] sm:$0xff]
    %v322 = vld [vmem:[#allocation8 + $0x340] sm:$0xff]
    %v323 = vld [vmem:[#allocation8 + $0x348] sm:$0xff]
    %v324 = vld [vmem:[#allocation8 + $0x350] sm:$0xff]
    %v325 = vld [vmem:[#allocation8 + $0x358] sm:$0xff]
    %v326 = vld [vmem:[#allocation8 + $0x360] sm:$0xff]
    %v327 = vld [vmem:[#allocation8 + $0x368] sm:$0xff]
    %v328 = vld [vmem:[#allocation8 + $0x370] sm:$0xff]
    %v329 = vld [vmem:[#allocation8 + $0x378] sm:$0xff]
    %v330 = vld [vmem:[#allocation8 + $0x380] sm:$0xff]
    %v331 = vld [vmem:[#allocation8 + $0x388] sm:$0xff]
    %v332 = vld [vmem:[#allocation8 + $0x390] sm:$0xff]
    %v333 = vld [vmem:[#allocation8 + $0x398] sm:$0xff]
    %v334 = vld [vmem:[#allocation8 + $0x3a0] sm:$0xff]
    %v335 = vld [vmem:[#allocation8 + $0x3a8] sm:$0xff]
    %v336 = vld [vmem:[#allocation8 + $0x3b0] sm:$0xff]
    %v337 = vld [vmem:[#allocation8 + $0x3b8] sm:$0xff]
    %v338 = vld [vmem:[#allocation8 + $0x3c0] sm:$0xff]
    %v339 = vld [vmem:[#allocation8 + $0x3c8] sm:$0xff]
    %v340 = vld [vmem:[#allocation8 + $0x3d0] sm:$0xff]
    %v341 = vld [vmem:[#allocation8 + $0x3d8] sm:$0xff]
    %v342 = vld [vmem:[#allocation8 + $0x3e0] sm:$0xff]
    %v343 = vld [vmem:[#allocation8 + $0x3e8] sm:$0xff]
    %v344 = vld [vmem:[#allocation8 + $0x3f0] sm:$0xff]
    %v345 = vld [vmem:[#allocation8 + $0x3f8] sm:$0xff]
    %v346 = vld [vmem:[#allocation8 + $0x400] sm:$0xff]
    %v347 = vld [vmem:[#allocation8 + $0x408] sm:$0xff]
    %v348 = vld [vmem:[#allocation8 + $0x410] sm:$0xff]
    %v349 = vld [vmem:[#allocation8 + $0x418] sm:$0xff]
    %v350 = vld [vmem:[#allocation8 + $0x420] sm:$0xff]
    %v351 = vld [vmem:[#allocation8 + $0x428] sm:$0xff]
    %v352 = vld [vmem:[#allocation8 + $0x430] sm:$0xff]
    %v353 = vld [vmem:[#allocation8 + $0x438] sm:$0xff]
    %v354 = vld [vmem:[#allocation8 + $0x440] sm:$0xff]
    %v355 = vld [vmem:[#allocation8 + $0x448] sm:$0xff]
    %v356 = vld [vmem:[#allocation8 + $0x450] sm:$0xff]
    %v357 = vld [vmem:[#allocation8 + $0x458] sm:$0xff]
    %v358 = vld [vmem:[#allocation8 + $0x460] sm:$0xff]
    %v359 = vld [vmem:[#allocation8 + $0x468] sm:$0xff]
    %v360 = vld [vmem:[#allocation8 + $0x470] sm:$0xff]
    %v361 = vld [vmem:[#allocation8 + $0x478] sm:$0xff]
    %v362 = vld [vmem:[#allocation8 + $0x480] sm:$0xff]
    %v363 = vld [vmem:[#allocation8 + $0x488] sm:$0xff]
    %v364 = vld [vmem:[#allocation8 + $0x490] sm:$0xff]
    %v365 = vld [vmem:[#allocation8 + $0x498] sm:$0xff]
    %v366 = vld [vmem:[#allocation8 + $0x4a0] sm:$0xff]
    %v367 = vld [vmem:[#allocation8 + $0x4a8] sm:$0xff]
    %v368 = vld [vmem:[#allocation8 + $0x4b0] sm:$0xff]
    %v369 = vld [vmem:[#allocation8 + $0x4b8] sm:$0xff]
    %v370 = vld [vmem:[#allocation8 + $0x4c0] sm:$0xff]
    %v371 = vld [vmem:[#allocation8 + $0x4c8] sm:$0xff]
    %v372 = vld [vmem:[#allocation8 + $0x4d0] sm:$0xff]
    %v373 = vld [vmem:[#allocation8 + $0x4d8] sm:$0xff]
    %v374 = vld [vmem:[#allocation8 + $0x4e0] sm:$0xff]
    %v375 = vld [vmem:[#allocation8 + $0x4e8] sm:$0xff]
    %v376 = vld [vmem:[#allocation8 + $0x4f0] sm:$0xff]
    %v377 = vld [vmem:[#allocation8 + $0x4f8] sm:$0xff]
    %v378 = vld [vmem:[#allocation8 + $0x500] sm:$0xff]
    %v379 = vld [vmem:[#allocation8 + $0x508] sm:$0xff]
    %v380 = vld [vmem:[#allocation8 + $0x510] sm:$0xff]
    %v381 = vld [vmem:[#allocation8 + $0x518] sm:$0xff]
    %v382 = vld [vmem:[#allocation8 + $0x520] sm:$0xff]
    %v383 = vld [vmem:[#allocation8 + $0x528] sm:$0xff]
    %v384 = vld [vmem:[#allocation8 + $0x530] sm:$0xff]
    %v385 = vld [vmem:[#allocation8 + $0x538] sm:$0xff]
    %v386 = vld [vmem:[#allocation8 + $0x540] sm:$0xff]
    %v387 = vld [vmem:[#allocation8 + $0x548] sm:$0xff]
    %v388 = vld [vmem:[#allocation8 + $0x550] sm:$0xff]
    %v389 = vld [vmem:[#allocation8 + $0x558] sm:$0xff]
    %v390 = vld [vmem:[#allocation8 + $0x560] sm:$0xff]
    %v391 = vld [vmem:[#allocation8 + $0x568] sm:$0xff]
    %v392 = vld [vmem:[#allocation8 + $0x570] sm:$0xff]
    %v393 = vld [vmem:[#allocation8 + $0x578] sm:$0xff]
    %v394 = vld [vmem:[#allocation8 + $0x580] sm:$0xff]
    %v395 = vld [vmem:[#allocation8 + $0x588] sm:$0xff]
    %v396 = vld [vmem:[#allocation8 + $0x590] sm:$0xff]
    %v397 = vld [vmem:[#allocation8 + $0x598] sm:$0xff]
    %v398 = vld [vmem:[#allocation8 + $0x5a0] sm:$0xff]
    %v399 = vld [vmem:[#allocation8 + $0x5a8] sm:$0xff]
    %v400 = vld [vmem:[#allocation8 + $0x5b0] sm:$0xff]
    %v401 = vld [vmem:[#allocation8 + $0x5b8] sm:$0xff]
    %v402 = vld [vmem:[#allocation8 + $0x5c0] sm:$0xff]
    %v403 = vld [vmem:[#allocation8 + $0x5c8] sm:$0xff]
    %v404 = vld [vmem:[#allocation8 + $0x5d0] sm:$0xff]
    %v405 = vld [vmem:[#allocation8 + $0x5d8] sm:$0xff]
    %v406 = vld [vmem:[#allocation8 + $0x5e0] sm:$0xff]
    %v407 = vld [vmem:[#allocation8 + $0x5e8] sm:$0xff]
    %v408 = vld [vmem:[#allocation8 + $0x5f0] sm:$0xff]
    %v409 = vld [vmem:[#allocation8 + $0x5f8] sm:$0xff]
    %v410 = vld [vmem:[#allocation8 + $0x600] sm:$0xff]
    %v411 = vld [vmem:[#allocation8 + $0x608] sm:$0xff]
    %v412 = vld [vmem:[#allocation8 + $0x610] sm:$0xff]
    %v413 = vld [vmem:[#allocation8 + $0x618] sm:$0xff]
    %v414 = vld [vmem:[#allocation8 + $0x620] sm:$0xff]
    %v415 = vld [vmem:[#allocation8 + $0x628] sm:$0xff]
    %v416 = vld [vmem:[#allocation8 + $0x630] sm:$0xff]
    %v417 = vld [vmem:[#allocation8 + $0x638] sm:$0xff]
    %v418 = vld [vmem:[#allocation8 + $0x640] sm:$0xff]
    %v419 = vld [vmem:[#allocation8 + $0x648] sm:$0xff]
    %v420 = vld [vmem:[#allocation8 + $0x650] sm:$0xff]
    %v421 = vld [vmem:[#allocation8 + $0x658] sm:$0xff]
    %v422 = vld [vmem:[#allocation8 + $0x660] sm:$0xff]
    %v423 = vld [vmem:[#allocation8 + $0x668] sm:$0xff]
    %v424 = vld [vmem:[#allocation8 + $0x670] sm:$0xff]
    %v425 = vld [vmem:[#allocation8 + $0x678] sm:$0xff]
    %v426 = vld [vmem:[#allocation8 + $0x680] sm:$0xff]
    %v427 = vld [vmem:[#allocation8 + $0x688] sm:$0xff]
    %v428 = vld [vmem:[#allocation8 + $0x690] sm:$0xff]
    %v429 = vld [vmem:[#allocation8 + $0x698] sm:$0xff]
    %v430 = vld [vmem:[#allocation8 + $0x6a0] sm:$0xff]
    %v431 = vld [vmem:[#allocation8 + $0x6a8] sm:$0xff]
    %v432 = vld [vmem:[#allocation8 + $0x6b0] sm:$0xff]
    %v433 = vld [vmem:[#allocation8 + $0x6b8] sm:$0xff]
    %v434 = vld [vmem:[#allocation8 + $0x6c0] sm:$0xff]
    %v435 = vld [vmem:[#allocation8 + $0x6c8] sm:$0xff]
    %v436 = vld [vmem:[#allocation8 + $0x6d0] sm:$0xff]
    %v437 = vld [vmem:[#allocation8 + $0x6d8] sm:$0xff]
    %v438 = vld [vmem:[#allocation8 + $0x6e0] sm:$0xff]
    %v439 = vld [vmem:[#allocation8 + $0x6e8] sm:$0xff]
    %v440 = vld [vmem:[#allocation8 + $0x6f0] sm:$0xff]
    %v441 = vld [vmem:[#allocation8 + $0x6f8] sm:$0xff]
    %v442 = vld [vmem:[#allocation8 + $0x700] sm:$0xff]
    %v443 = vld [vmem:[#allocation8 + $0x708] sm:$0xff]
    %v444 = vld [vmem:[#allocation8 + $0x710] sm:$0xff]
    %v445 = vld [vmem:[#allocation8 + $0x718] sm:$0xff]
    %v446 = vld [vmem:[#allocation8 + $0x720] sm:$0xff]
    %v447 = vld [vmem:[#allocation8 + $0x728] sm:$0xff]
    %v448 = vld [vmem:[#allocation8 + $0x730] sm:$0xff]
    %v449 = vld [vmem:[#allocation8 + $0x738] sm:$0xff]
    %v450 = vld [vmem:[#allocation8 + $0x740] sm:$0xff]
    %v451 = vld [vmem:[#allocation8 + $0x748] sm:$0xff]
    %v452 = vld [vmem:[#allocation8 + $0x750] sm:$0xff]
    %v453 = vld [vmem:[#allocation8 + $0x758] sm:$0xff]
    %v454 = vld [vmem:[#allocation8 + $0x760] sm:$0xff]
    %v455 = vld [vmem:[#allocation8 + $0x768] sm:$0xff]
    %v456 = vld [vmem:[#allocation8 + $0x770] sm:$0xff]
    %v457 = vld [vmem:[#allocation8 + $0x778] sm:$0xff]
    %v458 = vld [vmem:[#allocation8 + $0x780] sm:$0xff]
    %v459 = vld [vmem:[#allocation8 + $0x788] sm:$0xff]
    %v460 = vld [vmem:[#allocation8 + $0x790] sm:$0xff]
    %v461 = vld [vmem:[#allocation8 + $0x798] sm:$0xff]
    %v462 = vld [vmem:[#allocation8 + $0x7a0] sm:$0xff]
    %v463 = vld [vmem:[#allocation8 + $0x7a8] sm:$0xff]
    %v464 = vld [vmem:[#allocation8 + $0x7b0] sm:$0xff]
    %v465 = vld [vmem:[#allocation8 + $0x7b8] sm:$0xff]
    %v466 = vld [vmem:[#allocation8 + $0x7c0] sm:$0xff]
    %v467 = vld [vmem:[#allocation8 + $0x7c8] sm:$0xff]
    %v468 = vld [vmem:[#allocation8 + $0x7d0] sm:$0xff]
    %v469 = vld [vmem:[#allocation8 + $0x7d8] sm:$0xff]
    %v470 = vld [vmem:[#allocation8 + $0x7e0] sm:$0xff]
    %v471 = vld [vmem:[#allocation8 + $0x7e8] sm:$0xff]
    %v472 = vld [vmem:[#allocation8 + $0x7f0] sm:$0xff]
    %v473 = vld [vmem:[#allocation8 + $0x7f8] sm:$0xff]
    %v474 = vld [vmem:[#allocation8 + $0x800] sm:$0xff]
    %v475 = vld [vmem:[#allocation8 + $0x808] sm:$0xff]
    %v476 = vld [vmem:[#allocation8 + $0x810] sm:$0xff]
    %v477 = vld [vmem:[#allocation8 + $0x818] sm:$0xff]
    %v478 = vld [vmem:[#allocation8 + $0x820] sm:$0xff]
    %v479 = vld [vmem:[#allocation8 + $0x828] sm:$0xff]
    %v480 = vld [vmem:[#allocation8 + $0x830] sm:$0xff]
    %v481 = vld [vmem:[#allocation8 + $0x838] sm:$0xff]
    %v482 = vld [vmem:[#allocation8 + $0x840] sm:$0xff]
    %v483 = vld [vmem:[#allocation8 + $0x848] sm:$0xff]
    %v484 = vld [vmem:[#allocation8 + $0x850] sm:$0xff]
    %v485 = vld [vmem:[#allocation8 + $0x858] sm:$0xff]
    %v486 = vld [vmem:[#allocation8 + $0x860] sm:$0xff]
    %v487 = vld [vmem:[#allocation8 + $0x868] sm:$0xff]
    %v488 = vld [vmem:[#allocation8 + $0x870] sm:$0xff]
    %v489 = vld [vmem:[#allocation8 + $0x878] sm:$0xff]
    %v490 = vld [vmem:[#allocation8 + $0x880] sm:$0xff]
    %v491 = vld [vmem:[#allocation8 + $0x888] sm:$0xff]
    %v492 = vld [vmem:[#allocation8 + $0x890] sm:$0xff]
    %v493 = vld [vmem:[#allocation8 + $0x898] sm:$0xff]
    %v494 = vld [vmem:[#allocation8 + $0x8a0] sm:$0xff]
    %v495 = vld [vmem:[#allocation8 + $0x8a8] sm:$0xff]
    %v496 = vld [vmem:[#allocation8 + $0x8b0] sm:$0xff]
    %v497 = vld [vmem:[#allocation8 + $0x8b8] sm:$0xff]
    %v498 = vld [vmem:[#allocation8 + $0x8c0] sm:$0xff]
    %v499 = vld [vmem:[#allocation8 + $0x8c8] sm:$0xff]
    %v500 = vld [vmem:[#allocation8 + $0x8d0] sm:$0xff]
    %v501 = vld [vmem:[#allocation8 + $0x8d8] sm:$0xff]
    %v502 = vld [vmem:[#allocation8 + $0x8e0] sm:$0xff]
    %v503 = vld [vmem:[#allocation8 + $0x8e8] sm:$0xff]
    %v504 = vld [vmem:[#allocation8 + $0x8f0] sm:$0xff]
    %v505 = vld [vmem:[#allocation8 + $0x8f8] sm:$0xff]
    %v506 = vld [vmem:[#allocation8 + $0x900] sm:$0xff]
    %v507 = vld [vmem:[#allocation8 + $0x908] sm:$0xff]
    %v508 = vld [vmem:[#allocation8 + $0x910] sm:$0xff]
    %v509 = vld [vmem:[#allocation8 + $0x918] sm:$0xff]
    %v510 = vld [vmem:[#allocation8 + $0x920] sm:$0xff]
    %v511 = vld [vmem:[#allocation8 + $0x928] sm:$0xff]
    %v512 = vld [vmem:[#allocation8 + $0x930] sm:$0xff]
    %v513 = vld [vmem:[#allocation8 + $0x938] sm:$0xff]
    %v514 = vld [vmem:[#allocation8 + $0x940] sm:$0xff]
    %v515 = vld [vmem:[#allocation8 + $0x948] sm:$0xff]
    %v516 = vld [vmem:[#allocation8 + $0x950] sm:$0xff]
    %v517 = vld [vmem:[#allocation8 + $0x958] sm:$0xff]
    %v518 = vld [vmem:[#allocation8 + $0x960] sm:$0xff]
    %v519 = vld [vmem:[#allocation8 + $0x968] sm:$0xff]
    %v520 = vld [vmem:[#allocation8 + $0x970] sm:$0xff]
    %v521 = vld [vmem:[#allocation8 + $0x978] sm:$0xff]
    %v522 = vld [vmem:[#allocation8 + $0x980] sm:$0xff]
    %v523 = vld [vmem:[#allocation8 + $0x988] sm:$0xff]
    %v524 = vld [vmem:[#allocation8 + $0x990] sm:$0xff]
    %v525 = vld [vmem:[#allocation8 + $0x998] sm:$0xff]
    %v526 = vld [vmem:[#allocation8 + $0x9a0] sm:$0xff]
    %v527 = vld [vmem:[#allocation8 + $0x9a8] sm:$0xff]
    %v528 = vld [vmem:[#allocation8 + $0x9b0] sm:$0xff]
    %v529 = vld [vmem:[#allocation8 + $0x9b8] sm:$0xff]
    %v530 = vld [vmem:[#allocation8 + $0x9c0] sm:$0xff]
    %v531 = vld [vmem:[#allocation8 + $0x9c8] sm:$0xff]
    %v532 = vld [vmem:[#allocation8 + $0x9d0] sm:$0xff]
    %v533 = vld [vmem:[#allocation8 + $0x9d8] sm:$0xff]
    %v534 = vld [vmem:[#allocation8 + $0x9e0] sm:$0xff]
    %v535 = vld [vmem:[#allocation8 + $0x9e8] sm:$0xff]
    %v536 = vld [vmem:[#allocation8 + $0x9f0] sm:$0xff]
    %v537 = vld [vmem:[#allocation8 + $0x9f8] sm:$0xff]
    %v538 = vld [vmem:[#allocation13] sm:$0xff]
    %v540 = vlaneseq
    %v541 = vshrl.u32 %v540, 7
    %v542 = vsub.s32 0, %v541
    %v543 = vrot.slane %v538, %v542
    %v544 = vlaneseq
    %v545 = vshrl.u32 %v544, 7
    %v546 = vsub.s32 1, %v545
    %v547 = vrot.slane %v538, %v546
    %v548 = vlaneseq
    %v549 = vshrl.u32 %v548, 7
    %v550 = vsub.s32 2, %v549
    %v551 = vrot.slane %v538, %v550
    %v552 = vlaneseq
    %v553 = vshrl.u32 %v552, 7
    %v554 = vsub.s32 3, %v553
    %v555 = vrot.slane %v538, %v554
    %v556 = vlaneseq
    %v557 = vshrl.u32 %v556, 7
    %v558 = vsub.s32 4, %v557
    %v559 = vrot.slane %v538, %v558
    %v560 = vlaneseq
    %v561 = vshrl.u32 %v560, 7
    %v562 = vsub.s32 5, %v561
    %v563 = vrot.slane %v538, %v562
    %v564 = vlaneseq
    %v565 = vshrl.u32 %v564, 7
    %v566 = vsub.s32 6, %v565
    %v567 = vrot.slane %v538, %v566
    %v568 = vlaneseq
    %v569 = vshrl.u32 %v568, 7
    %v570 = vsub.s32 7, %v569
    %v571 = vrot.slane %v538, %v570
    %v900 = vunpack.c.l.b16 %v218
    %v901 = vunpack.c.h.b16 %v218
    %v902 = vunpack.c.l.b16 %v219
    %v903 = vunpack.c.h.b16 %v219
    %v904 = vunpack.c.l.b16 %v220
    %v905 = vunpack.c.h.b16 %v220
    %v906 = vunpack.c.l.b16 %v221
    %v907 = vunpack.c.h.b16 %v221
    %v908 = vunpack.c.l.b16 %v222
    %v909 = vunpack.c.h.b16 %v222
    %v910 = vunpack.c.l.b16 %v223
    %v911 = vunpack.c.h.b16 %v223
    %v912 = vunpack.c.l.b16 %v224
    %v913 = vunpack.c.h.b16 %v224
    %v914 = vunpack.c.l.b16 %v225
    %v915 = vunpack.c.h.b16 %v225
    %v916 = vunpack.c.l.b16 %v226
    %v917 = vunpack.c.h.b16 %v226
    %v918 = vunpack.c.l.b16 %v227
    %v919 = vunpack.c.h.b16 %v227
    %v920 = vunpack.c.l.b16 %v228
    %v921 = vunpack.c.h.b16 %v228
    %v922 = vunpack.c.l.b16 %v229
    %v923 = vunpack.c.h.b16 %v229
    %v924 = vunpack.c.l.b16 %v230
    %v925 = vunpack.c.h.b16 %v230
    %v926 = vunpack.c.l.b16 %v231
    %v927 = vunpack.c.h.b16 %v231
    %v928 = vunpack.c.l.b16 %v232
    %v929 = vunpack.c.h.b16 %v232
    %v930 = vunpack.c.l.b16 %v233
    %v931 = vunpack.c.h.b16 %v233
    %v932 = vunpack.c.l.b16 %v234
    %v933 = vunpack.c.h.b16 %v234
    %v934 = vunpack.c.l.b16 %v235
    %v935 = vunpack.c.h.b16 %v235
    %v936 = vunpack.c.l.b16 %v236
    %v937 = vunpack.c.h.b16 %v236
    %v938 = vunpack.c.l.b16 %v237
    %v939 = vunpack.c.h.b16 %v237
    %v940 = vunpack.c.l.b16 %v238
    %v941 = vunpack.c.h.b16 %v238
    %v942 = vunpack.c.l.b16 %v239
    %v943 = vunpack.c.h.b16 %v239
    %v944 = vunpack.c.l.b16 %v240
    %v945 = vunpack.c.h.b16 %v240
    %v946 = vunpack.c.l.b16 %v241
    %v947 = vunpack.c.h.b16 %v241
    %v948 = vunpack.c.l.b16 %v242
    %v949 = vunpack.c.h.b16 %v242
    %v950 = vunpack.c.l.b16 %v243
    %v951 = vunpack.c.h.b16 %v243
    %v952 = vunpack.c.l.b16 %v244
    %v953 = vunpack.c.h.b16 %v244
    %v954 = vunpack.c.l.b16 %v245
    %v955 = vunpack.c.h.b16 %v245
    %v956 = vunpack.c.l.b16 %v246
    %v957 = vunpack.c.h.b16 %v246
    %v958 = vunpack.c.l.b16 %v247
    %v959 = vunpack.c.h.b16 %v247
    %v960 = vunpack.c.l.b16 %v248
    %v961 = vunpack.c.h.b16 %v248
    %v962 = vunpack.c.l.b16 %v249
    %v963 = vunpack.c.h.b16 %v249
    %v964 = vunpack.c.l.b16 %v250
    %v965 = vunpack.c.h.b16 %v250
    %v966 = vunpack.c.l.b16 %v251
    %v967 = vunpack.c.h.b16 %v251
    %v968 = vunpack.c.l.b16 %v252
    %v969 = vunpack.c.h.b16 %v252
    %v970 = vunpack.c.l.b16 %v253
    %v971 = vunpack.c.h.b16 %v253
    %v972 = vunpack.c.l.b16 %v254
    %v973 = vunpack.c.h.b16 %v254
    %v974 = vunpack.c.l.b16 %v255
    %v975 = vunpack.c.h.b16 %v255
    %v976 = vunpack.c.l.b16 %v256
    %v977 = vunpack.c.h.b16 %v256
    %v978 = vunpack.c.l.b16 %v257
    %v979 = vunpack.c.h.b16 %v257
    %v980 = vunpack.c.l.b16 %v258
    %v981 = vunpack.c.h.b16 %v258
    %v982 = vunpack.c.l.b16 %v259
    %v983 = vunpack.c.h.b16 %v259
    %v984 = vunpack.c.l.b16 %v260
    %v985 = vunpack.c.h.b16 %v260
    %v986 = vunpack.c.l.b16 %v261
    %v987 = vunpack.c.h.b16 %v261
    %v988 = vunpack.c.l.b16 %v262
    %v989 = vunpack.c.h.b16 %v262
    %v990 = vunpack.c.l.b16 %v263
    %v991 = vunpack.c.h.b16 %v263
    %v992 = vunpack.c.l.b16 %v264
    %v993 = vunpack.c.h.b16 %v264
    %v994 = vunpack.c.l.b16 %v265
    %v995 = vunpack.c.h.b16 %v265
    %v996 = vunpack.c.l.b16 %v266
    %v997 = vunpack.c.h.b16 %v266
    %v998 = vunpack.c.l.b16 %v267
    %v999 = vunpack.c.h.b16 %v267
    %v1000 = vunpack.c.l.b16 %v268
    %v1001 = vunpack.c.h.b16 %v268
    %v1002 = vunpack.c.l.b16 %v269
    %v1003 = vunpack.c.h.b16 %v269
    %v1004 = vunpack.c.l.b16 %v270
    %v1005 = vunpack.c.h.b16 %v270
    %v1006 = vunpack.c.l.b16 %v271
    %v1007 = vunpack.c.h.b16 %v271
    %v1008 = vunpack.c.l.b16 %v272
    %v1009 = vunpack.c.h.b16 %v272
    %v1010 = vunpack.c.l.b16 %v273
    %v1011 = vunpack.c.h.b16 %v273
    %v1012 = vunpack.c.l.b16 %v274
    %v1013 = vunpack.c.h.b16 %v274
    %v1014 = vunpack.c.l.b16 %v275
    %v1015 = vunpack.c.h.b16 %v275
    %v1016 = vunpack.c.l.b16 %v276
    %v1017 = vunpack.c.h.b16 %v276
    %v1018 = vunpack.c.l.b16 %v277
    %v1019 = vunpack.c.h.b16 %v277
    %v1020 = vunpack.c.l.b16 %v278
    %v1021 = vunpack.c.h.b16 %v278
    %v1022 = vunpack.c.l.b16 %v279
    %v1023 = vunpack.c.h.b16 %v279
    %v1024 = vunpack.c.l.b16 %v280
    %v1025 = vunpack.c.h.b16 %v280
    %v1026 = vunpack.c.l.b16 %v281
    %v1027 = vunpack.c.h.b16 %v281
    %v1028 = vunpack.c.l.b16 %v282
    %v1029 = vunpack.c.h.b16 %v282
    %v1030 = vunpack.c.l.b16 %v283
    %v1031 = vunpack.c.h.b16 %v283
    %v1032 = vunpack.c.l.b16 %v284
    %v1033 = vunpack.c.h.b16 %v284
    %v1034 = vunpack.c.l.b16 %v285
    %v1035 = vunpack.c.h.b16 %v285
    %v1036 = vunpack.c.l.b16 %v286
    %v1037 = vunpack.c.h.b16 %v286
    %v1038 = vunpack.c.l.b16 %v287
    %v1039 = vunpack.c.h.b16 %v287
    %v1040 = vunpack.c.l.b16 %v288
    %v1041 = vunpack.c.h.b16 %v288
    %v1042 = vunpack.c.l.b16 %v289
    %v1043 = vunpack.c.h.b16 %v289
    %v1044 = vunpack.c.l.b16 %v290
    %v1045 = vunpack.c.h.b16 %v290
    %v1046 = vunpack.c.l.b16 %v291
    %v1047 = vunpack.c.h.b16 %v291
    %v1048 = vunpack.c.l.b16 %v292
    %v1049 = vunpack.c.h.b16 %v292
    %v1050 = vunpack.c.l.b16 %v293
    %v1051 = vunpack.c.h.b16 %v293
    %v1052 = vunpack.c.l.b16 %v294
    %v1053 = vunpack.c.h.b16 %v294
    %v1054 = vunpack.c.l.b16 %v295
    %v1055 = vunpack.c.h.b16 %v295
    %v1056 = vunpack.c.l.b16 %v296
    %v1057 = vunpack.c.h.b16 %v296
    %v1058 = vunpack.c.l.b16 %v297
    %v1059 = vunpack.c.h.b16 %v297
    %v1060 = vunpack.c.l.b16 %v298
    %v1061 = vunpack.c.h.b16 %v298
    %v1062 = vunpack.c.l.b16 %v299
    %v1063 = vunpack.c.h.b16 %v299
    %v1064 = vunpack.c.l.b16 %v300
    %v1065 = vunpack.c.h.b16 %v300
    %v1066 = vunpack.c.l.b16 %v301
    %v1067 = vunpack.c.h.b16 %v301
    %v1068 = vunpack.c.l.b16 %v302
    %v1069 = vunpack.c.h.b16 %v302
    %v1070 = vunpack.c.l.b16 %v303
    %v1071 = vunpack.c.h.b16 %v303
    %v1072 = vunpack.c.l.b16 %v304
    %v1073 = vunpack.c.h.b16 %v304
    %v1074 = vunpack.c.l.b16 %v305
    %v1075 = vunpack.c.h.b16 %v305
    %v1076 = vunpack.c.l.b16 %v306
    %v1077 = vunpack.c.h.b16 %v306
    %v1078 = vunpack.c.l.b16 %v307
    %v1079 = vunpack.c.h.b16 %v307
    %v1080 = vunpack.c.l.b16 %v308
    %v1081 = vunpack.c.h.b16 %v308
    %v1082 = vunpack.c.l.b16 %v309
    %v1083 = vunpack.c.h.b16 %v309
    %v1084 = vunpack.c.l.b16 %v310
    %v1085 = vunpack.c.h.b16 %v310
    %v1086 = vunpack.c.l.b16 %v311
    %v1087 = vunpack.c.h.b16 %v311
    %v1088 = vunpack.c.l.b16 %v312
    %v1089 = vunpack.c.h.b16 %v312
    %v1090 = vunpack.c.l.b16 %v313
    %v1091 = vunpack.c.h.b16 %v313
    %v1092 = vunpack.c.l.b16 %v314
    %v1093 = vunpack.c.h.b16 %v314
    %v1094 = vunpack.c.l.b16 %v315
    %v1095 = vunpack.c.h.b16 %v315
    %v1096 = vunpack.c.l.b16 %v316
    %v1097 = vunpack.c.h.b16 %v316
    %v1098 = vunpack.c.l.b16 %v317
    %v1099 = vunpack.c.h.b16 %v317
    %v1100 = vunpack.c.l.b16 %v318
    %v1101 = vunpack.c.h.b16 %v318
    %v1102 = vunpack.c.l.b16 %v319
    %v1103 = vunpack.c.h.b16 %v319
    %v1104 = vunpack.c.l.b16 %v320
    %v1105 = vunpack.c.h.b16 %v320
    %v1106 = vunpack.c.l.b16 %v321
    %v1107 = vunpack.c.h.b16 %v321
    %v1108 = vunpack.c.l.b16 %v322
    %v1109 = vunpack.c.h.b16 %v322
    %v1110 = vunpack.c.l.b16 %v323
    %v1111 = vunpack.c.h.b16 %v323
    %v1112 = vunpack.c.l.b16 %v324
    %v1113 = vunpack.c.h.b16 %v324
    %v1114 = vunpack.c.l.b16 %v325
    %v1115 = vunpack.c.h.b16 %v325
    %v1116 = vunpack.c.l.b16 %v326
    %v1117 = vunpack.c.h.b16 %v326
    %v1118 = vunpack.c.l.b16 %v327
    %v1119 = vunpack.c.h.b16 %v327
    %v1120 = vunpack.c.l.b16 %v328
    %v1121 = vunpack.c.h.b16 %v328
    %v1122 = vunpack.c.l.b16 %v329
    %v1123 = vunpack.c.h.b16 %v329
    %v1124 = vunpack.c.l.b16 %v330
    %v1125 = vunpack.c.h.b16 %v330
    %v1126 = vunpack.c.l.b16 %v331
    %v1127 = vunpack.c.h.b16 %v331
    %v1128 = vunpack.c.l.b16 %v332
    %v1129 = vunpack.c.h.b16 %v332
    %v1130 = vunpack.c.l.b16 %v333
    %v1131 = vunpack.c.h.b16 %v333
    %v1132 = vunpack.c.l.b16 %v334
    %v1133 = vunpack.c.h.b16 %v334
    %v1134 = vunpack.c.l.b16 %v335
    %v1135 = vunpack.c.h.b16 %v335
    %v1136 = vunpack.c.l.b16 %v336
    %v1137 = vunpack.c.h.b16 %v336
    %v1138 = vunpack.c.l.b16 %v337
    %v1139 = vunpack.c.h.b16 %v337
    %v1140 = vunpack.c.l.b16 %v338
    %v1141 = vunpack.c.h.b16 %v338
    %v1142 = vunpack.c.l.b16 %v339
    %v1143 = vunpack.c.h.b16 %v339
    %v1144 = vunpack.c.l.b16 %v340
    %v1145 = vunpack.c.h.b16 %v340
    %v1146 = vunpack.c.l.b16 %v341
    %v1147 = vunpack.c.h.b16 %v341
    %v1148 = vunpack.c.l.b16 %v342
    %v1149 = vunpack.c.h.b16 %v342
    %v1150 = vunpack.c.l.b16 %v343
    %v1151 = vunpack.c.h.b16 %v343
    %v1152 = vunpack.c.l.b16 %v344
    %v1153 = vunpack.c.h.b16 %v344
    %v1154 = vunpack.c.l.b16 %v345
    %v1155 = vunpack.c.h.b16 %v345
    %v1156 = vunpack.c.l.b16 %v346
    %v1157 = vunpack.c.h.b16 %v346
    %v1158 = vunpack.c.l.b16 %v347
    %v1159 = vunpack.c.h.b16 %v347
    %v1160 = vunpack.c.l.b16 %v348
    %v1161 = vunpack.c.h.b16 %v348
    %v1162 = vunpack.c.l.b16 %v349
    %v1163 = vunpack.c.h.b16 %v349
    %v1164 = vunpack.c.l.b16 %v350
    %v1165 = vunpack.c.h.b16 %v350
    %v1166 = vunpack.c.l.b16 %v351
    %v1167 = vunpack.c.h.b16 %v351
    %v1168 = vunpack.c.l.b16 %v352
    %v1169 = vunpack.c.h.b16 %v352
    %v1170 = vunpack.c.l.b16 %v353
    %v1171 = vunpack.c.h.b16 %v353
    %v1172 = vunpack.c.l.b16 %v354
    %v1173 = vunpack.c.h.b16 %v354
    %v1174 = vunpack.c.l.b16 %v355
    %v1175 = vunpack.c.h.b16 %v355
    %v1176 = vunpack.c.l.b16 %v356
    %v1177 = vunpack.c.h.b16 %v356
    %v1178 = vunpack.c.l.b16 %v357
    %v1179 = vunpack.c.h.b16 %v357
    %v1180 = vunpack.c.l.b16 %v358
    %v1181 = vunpack.c.h.b16 %v358
    %v1182 = vunpack.c.l.b16 %v359
    %v1183 = vunpack.c.h.b16 %v359
    %v1184 = vunpack.c.l.b16 %v360
    %v1185 = vunpack.c.h.b16 %v360
    %v1186 = vunpack.c.l.b16 %v361
    %v1187 = vunpack.c.h.b16 %v361
    %v1188 = vunpack.c.l.b16 %v362
    %v1189 = vunpack.c.h.b16 %v362
    %v1190 = vunpack.c.l.b16 %v363
    %v1191 = vunpack.c.h.b16 %v363
    %v1192 = vunpack.c.l.b16 %v364
    %v1193 = vunpack.c.h.b16 %v364
    %v1194 = vunpack.c.l.b16 %v365
    %v1195 = vunpack.c.h.b16 %v365
    %v1196 = vunpack.c.l.b16 %v366
    %v1197 = vunpack.c.h.b16 %v366
    %v1198 = vunpack.c.l.b16 %v367
    %v1199 = vunpack.c.h.b16 %v367
    %v1200 = vunpack.c.l.b16 %v368
    %v1201 = vunpack.c.h.b16 %v368
    %v1202 = vunpack.c.l.b16 %v369
    %v1203 = vunpack.c.h.b16 %v369
    %v1204 = vunpack.c.l.b16 %v370
    %v1205 = vunpack.c.h.b16 %v370
    %v1206 = vunpack.c.l.b16 %v371
    %v1207 = vunpack.c.h.b16 %v371
    %v1208 = vunpack.c.l.b16 %v372
    %v1209 = vunpack.c.h.b16 %v372
    %v1210 = vunpack.c.l.b16 %v373
    %v1211 = vunpack.c.h.b16 %v373
    %v1212 = vunpack.c.l.b16 %v374
    %v1213 = vunpack.c.h.b16 %v374
    %v1214 = vunpack.c.l.b16 %v375
    %v1215 = vunpack.c.h.b16 %v375
    %v1216 = vunpack.c.l.b16 %v376
    %v1217 = vunpack.c.h.b16 %v376
    %v1218 = vunpack.c.l.b16 %v377
    %v1219 = vunpack.c.h.b16 %v377
    %v1220 = vunpack.c.l.b16 %v378
    %v1221 = vunpack.c.h.b16 %v378
    %v1222 = vunpack.c.l.b16 %v379
    %v1223 = vunpack.c.h.b16 %v379
    %v1224 = vunpack.c.l.b16 %v380
    %v1225 = vunpack.c.h.b16 %v380
    %v1226 = vunpack.c.l.b16 %v381
    %v1227 = vunpack.c.h.b16 %v381
    %v1228 = vunpack.c.l.b16 %v382
    %v1229 = vunpack.c.h.b16 %v382
    %v1230 = vunpack.c.l.b16 %v383
    %v1231 = vunpack.c.h.b16 %v383
    %v1232 = vunpack.c.l.b16 %v384
    %v1233 = vunpack.c.h.b16 %v384
    %v1234 = vunpack.c.l.b16 %v385
    %v1235 = vunpack.c.h.b16 %v385
    %v1236 = vunpack.c.l.b16 %v386
    %v1237 = vunpack.c.h.b16 %v386
    %v1238 = vunpack.c.l.b16 %v387
    %v1239 = vunpack.c.h.b16 %v387
    %v1240 = vunpack.c.l.b16 %v388
    %v1241 = vunpack.c.h.b16 %v388
    %v1242 = vunpack.c.l.b16 %v389
    %v1243 = vunpack.c.h.b16 %v389
    %v1244 = vunpack.c.l.b16 %v390
    %v1245 = vunpack.c.h.b16 %v390
    %v1246 = vunpack.c.l.b16 %v391
    %v1247 = vunpack.c.h.b16 %v391
    %v1248 = vunpack.c.l.b16 %v392
    %v1249 = vunpack.c.h.b16 %v392
    %v1250 = vunpack.c.l.b16 %v393
    %v1251 = vunpack.c.h.b16 %v393
    %v1252 = vunpack.c.l.b16 %v394
    %v1253 = vunpack.c.h.b16 %v394
    %v1254 = vunpack.c.l.b16 %v395
    %v1255 = vunpack.c.h.b16 %v395
    %v1256 = vunpack.c.l.b16 %v396
    %v1257 = vunpack.c.h.b16 %v396
    %v1258 = vunpack.c.l.b16 %v397
    %v1259 = vunpack.c.h.b16 %v397
    %v1260 = vunpack.c.l.b16 %v398
    %v1261 = vunpack.c.h.b16 %v398
    %v1262 = vunpack.c.l.b16 %v399
    %v1263 = vunpack.c.h.b16 %v399
    %v1264 = vunpack.c.l.b16 %v400
    %v1265 = vunpack.c.h.b16 %v400
    %v1266 = vunpack.c.l.b16 %v401
    %v1267 = vunpack.c.h.b16 %v401
    %v1268 = vunpack.c.l.b16 %v402
    %v1269 = vunpack.c.h.b16 %v402
    %v1270 = vunpack.c.l.b16 %v403
    %v1271 = vunpack.c.h.b16 %v403
    %v1272 = vunpack.c.l.b16 %v404
    %v1273 = vunpack.c.h.b16 %v404
    %v1274 = vunpack.c.l.b16 %v405
    %v1275 = vunpack.c.h.b16 %v405
    %v1276 = vunpack.c.l.b16 %v406
    %v1277 = vunpack.c.h.b16 %v406
    %v1278 = vunpack.c.l.b16 %v407
    %v1279 = vunpack.c.h.b16 %v407
    %v1280 = vunpack.c.l.b16 %v408
    %v1281 = vunpack.c.h.b16 %v408
    %v1282 = vunpack.c.l.b16 %v409
    %v1283 = vunpack.c.h.b16 %v409
    %v1284 = vunpack.c.l.b16 %v410
    %v1285 = vunpack.c.h.b16 %v410
    %v1286 = vunpack.c.l.b16 %v411
    %v1287 = vunpack.c.h.b16 %v411
    %v1288 = vunpack.c.l.b16 %v412
    %v1289 = vunpack.c.h.b16 %v412
    %v1290 = vunpack.c.l.b16 %v413
    %v1291 = vunpack.c.h.b16 %v413
    %v1292 = vunpack.c.l.b16 %v414
    %v1293 = vunpack.c.h.b16 %v414
    %v1294 = vunpack.c.l.b16 %v415
    %v1295 = vunpack.c.h.b16 %v415
    %v1296 = vunpack.c.l.b16 %v416
    %v1297 = vunpack.c.h.b16 %v416
    %v1298 = vunpack.c.l.b16 %v417
    %v1299 = vunpack.c.h.b16 %v417
    %v1300 = vunpack.c.l.b16 %v418
    %v1301 = vunpack.c.h.b16 %v418
    %v1302 = vunpack.c.l.b16 %v419
    %v1303 = vunpack.c.h.b16 %v419
    %v1304 = vunpack.c.l.b16 %v420
    %v1305 = vunpack.c.h.b16 %v420
    %v1306 = vunpack.c.l.b16 %v421
    %v1307 = vunpack.c.h.b16 %v421
    %v1308 = vunpack.c.l.b16 %v422
    %v1309 = vunpack.c.h.b16 %v422
    %v1310 = vunpack.c.l.b16 %v423
    %v1311 = vunpack.c.h.b16 %v423
    %v1312 = vunpack.c.l.b16 %v424
    %v1313 = vunpack.c.h.b16 %v424
    %v1314 = vunpack.c.l.b16 %v425
    %v1315 = vunpack.c.h.b16 %v425
    %v1316 = vunpack.c.l.b16 %v426
    %v1317 = vunpack.c.h.b16 %v426
    %v1318 = vunpack.c.l.b16 %v427
    %v1319 = vunpack.c.h.b16 %v427
    %v1320 = vunpack.c.l.b16 %v428
    %v1321 = vunpack.c.h.b16 %v428
    %v1322 = vunpack.c.l.b16 %v429
    %v1323 = vunpack.c.h.b16 %v429
    %v1324 = vunpack.c.l.b16 %v430
    %v1325 = vunpack.c.h.b16 %v430
    %v1326 = vunpack.c.l.b16 %v431
    %v1327 = vunpack.c.h.b16 %v431
    %v1328 = vunpack.c.l.b16 %v432
    %v1329 = vunpack.c.h.b16 %v432
    %v1330 = vunpack.c.l.b16 %v433
    %v1331 = vunpack.c.h.b16 %v433
    %v1332 = vunpack.c.l.b16 %v434
    %v1333 = vunpack.c.h.b16 %v434
    %v1334 = vunpack.c.l.b16 %v435
    %v1335 = vunpack.c.h.b16 %v435
    %v1336 = vunpack.c.l.b16 %v436
    %v1337 = vunpack.c.h.b16 %v436
    %v1338 = vunpack.c.l.b16 %v437
    %v1339 = vunpack.c.h.b16 %v437
    %v1340 = vunpack.c.l.b16 %v438
    %v1341 = vunpack.c.h.b16 %v438
    %v1342 = vunpack.c.l.b16 %v439
    %v1343 = vunpack.c.h.b16 %v439
    %v1344 = vunpack.c.l.b16 %v440
    %v1345 = vunpack.c.h.b16 %v440
    %v1346 = vunpack.c.l.b16 %v441
    %v1347 = vunpack.c.h.b16 %v441
    %v1348 = vunpack.c.l.b16 %v442
    %v1349 = vunpack.c.h.b16 %v442
    %v1350 = vunpack.c.l.b16 %v443
    %v1351 = vunpack.c.h.b16 %v443
    %v1352 = vunpack.c.l.b16 %v444
    %v1353 = vunpack.c.h.b16 %v444
    %v1354 = vunpack.c.l.b16 %v445
    %v1355 = vunpack.c.h.b16 %v445
    %v1356 = vunpack.c.l.b16 %v446
    %v1357 = vunpack.c.h.b16 %v446
    %v1358 = vunpack.c.l.b16 %v447
    %v1359 = vunpack.c.h.b16 %v447
    %v1360 = vunpack.c.l.b16 %v448
    %v1361 = vunpack.c.h.b16 %v448
    %v1362 = vunpack.c.l.b16 %v449
    %v1363 = vunpack.c.h.b16 %v449
    %v1364 = vunpack.c.l.b16 %v450
    %v1365 = vunpack.c.h.b16 %v450
    %v1366 = vunpack.c.l.b16 %v451
    %v1367 = vunpack.c.h.b16 %v451
    %v1368 = vunpack.c.l.b16 %v452
    %v1369 = vunpack.c.h.b16 %v452
    %v1370 = vunpack.c.l.b16 %v453
    %v1371 = vunpack.c.h.b16 %v453
    %v1372 = vunpack.c.l.b16 %v454
    %v1373 = vunpack.c.h.b16 %v454
    %v1374 = vunpack.c.l.b16 %v455
    %v1375 = vunpack.c.h.b16 %v455
    %v1376 = vunpack.c.l.b16 %v456
    %v1377 = vunpack.c.h.b16 %v456
    %v1378 = vunpack.c.l.b16 %v457
    %v1379 = vunpack.c.h.b16 %v457
    %v1380 = vunpack.c.l.b16 %v458
    %v1381 = vunpack.c.h.b16 %v458
    %v1382 = vunpack.c.l.b16 %v459
    %v1383 = vunpack.c.h.b16 %v459
    %v1384 = vunpack.c.l.b16 %v460
    %v1385 = vunpack.c.h.b16 %v460
    %v1386 = vunpack.c.l.b16 %v461
    %v1387 = vunpack.c.h.b16 %v461
    %v1388 = vunpack.c.l.b16 %v462
    %v1389 = vunpack.c.h.b16 %v462
    %v1390 = vunpack.c.l.b16 %v463
    %v1391 = vunpack.c.h.b16 %v463
    %v1392 = vunpack.c.l.b16 %v464
    %v1393 = vunpack.c.h.b16 %v464
    %v1394 = vunpack.c.l.b16 %v465
    %v1395 = vunpack.c.h.b16 %v465
    %v1396 = vunpack.c.l.b16 %v466
    %v1397 = vunpack.c.h.b16 %v466
    %v1398 = vunpack.c.l.b16 %v467
    %v1399 = vunpack.c.h.b16 %v467
    %v1400 = vunpack.c.l.b16 %v468
    %v1401 = vunpack.c.h.b16 %v468
    %v1402 = vunpack.c.l.b16 %v469
    %v1403 = vunpack.c.h.b16 %v469
    %v1404 = vunpack.c.l.b16 %v470
    %v1405 = vunpack.c.h.b16 %v470
    %v1406 = vunpack.c.l.b16 %v471
    %v1407 = vunpack.c.h.b16 %v471
    %v1408 = vunpack.c.l.b16 %v472
    %v1409 = vunpack.c.h.b16 %v472
    %v1410 = vunpack.c.l.b16 %v473
    %v1411 = vunpack.c.h.b16 %v473
    %v1412 = vunpack.c.l.b16 %v474
    %v1413 = vunpack.c.h.b16 %v474
    %v1414 = vunpack.c.l.b16 %v475
    %v1415 = vunpack.c.h.b16 %v475
    %v1416 = vunpack.c.l.b16 %v476
    %v1417 = vunpack.c.h.b16 %v476
    %v1418 = vunpack.c.l.b16 %v477
    %v1419 = vunpack.c.h.b16 %v477
    %v1420 = vunpack.c.l.b16 %v478
    %v1421 = vunpack.c.h.b16 %v478
    %v1422 = vunpack.c.l.b16 %v479
    %v1423 = vunpack.c.h.b16 %v479
    %v1424 = vunpack.c.l.b16 %v480
    %v1425 = vunpack.c.h.b16 %v480
    %v1426 = vunpack.c.l.b16 %v481
    %v1427 = vunpack.c.h.b16 %v481
    %v1428 = vunpack.c.l.b16 %v482
    %v1429 = vunpack.c.h.b16 %v482
    %v1430 = vunpack.c.l.b16 %v483
    %v1431 = vunpack.c.h.b16 %v483
    %v1432 = vunpack.c.l.b16 %v484
    %v1433 = vunpack.c.h.b16 %v484
    %v1434 = vunpack.c.l.b16 %v485
    %v1435 = vunpack.c.h.b16 %v485
    %v1436 = vunpack.c.l.b16 %v486
    %v1437 = vunpack.c.h.b16 %v486
    %v1438 = vunpack.c.l.b16 %v487
    %v1439 = vunpack.c.h.b16 %v487
    %v1440 = vunpack.c.l.b16 %v488
    %v1441 = vunpack.c.h.b16 %v488
    %v1442 = vunpack.c.l.b16 %v489
    %v1443 = vunpack.c.h.b16 %v489
    %v1444 = vunpack.c.l.b16 %v490
    %v1445 = vunpack.c.h.b16 %v490
    %v1446 = vunpack.c.l.b16 %v491
    %v1447 = vunpack.c.h.b16 %v491
    %v1448 = vunpack.c.l.b16 %v492
    %v1449 = vunpack.c.h.b16 %v492
    %v1450 = vunpack.c.l.b16 %v493
    %v1451 = vunpack.c.h.b16 %v493
    %v1452 = vunpack.c.l.b16 %v494
    %v1453 = vunpack.c.h.b16 %v494
    %v1454 = vunpack.c.l.b16 %v495
    %v1455 = vunpack.c.h.b16 %v495
    %v1456 = vunpack.c.l.b16 %v496
    %v1457 = vunpack.c.h.b16 %v496
    %v1458 = vunpack.c.l.b16 %v497
    %v1459 = vunpack.c.h.b16 %v497
    %v1460 = vunpack.c.l.b16 %v498
    %v1461 = vunpack.c.h.b16 %v498
    %v1462 = vunpack.c.l.b16 %v499
    %v1463 = vunpack.c.h.b16 %v499
    %v1464 = vunpack.c.l.b16 %v500
    %v1465 = vunpack.c.h.b16 %v500
    %v1466 = vunpack.c.l.b16 %v501
    %v1467 = vunpack.c.h.b16 %v501
    %v1468 = vunpack.c.l.b16 %v502
    %v1469 = vunpack.c.h.b16 %v502
    %v1470 = vunpack.c.l.b16 %v503
    %v1471 = vunpack.c.h.b16 %v503
    %v1472 = vunpack.c.l.b16 %v504
    %v1473 = vunpack.c.h.b16 %v504
    %v1474 = vunpack.c.l.b16 %v505
    %v1475 = vunpack.c.h.b16 %v505
    %v1476 = vunpack.c.l.b16 %v506
    %v1477 = vunpack.c.h.b16 %v506
    %v1478 = vunpack.c.l.b16 %v507
    %v1479 = vunpack.c.h.b16 %v507
    %v1480 = vunpack.c.l.b16 %v508
    %v1481 = vunpack.c.h.b16 %v508
    %v1482 = vunpack.c.l.b16 %v509
    %v1483 = vunpack.c.h.b16 %v509
    %v1484 = vunpack.c.l.b16 %v510
    %v1485 = vunpack.c.h.b16 %v510
    %v1486 = vunpack.c.l.b16 %v511
    %v1487 = vunpack.c.h.b16 %v511
    %v1488 = vunpack.c.l.b16 %v512
    %v1489 = vunpack.c.h.b16 %v512
    %v1490 = vunpack.c.l.b16 %v513
    %v1491 = vunpack.c.h.b16 %v513
    %v1492 = vunpack.c.l.b16 %v514
    %v1493 = vunpack.c.h.b16 %v514
    %v1494 = vunpack.c.l.b16 %v515
    %v1495 = vunpack.c.h.b16 %v515
    %v1496 = vunpack.c.l.b16 %v516
    %v1497 = vunpack.c.h.b16 %v516
    %v1498 = vunpack.c.l.b16 %v517
    %v1499 = vunpack.c.h.b16 %v517
    %v1500 = vunpack.c.l.b16 %v518
    %v1501 = vunpack.c.h.b16 %v518
    %v1502 = vunpack.c.l.b16 %v519
    %v1503 = vunpack.c.h.b16 %v519
    %v1504 = vunpack.c.l.b16 %v520
    %v1505 = vunpack.c.h.b16 %v520
    %v1506 = vunpack.c.l.b16 %v521
    %v1507 = vunpack.c.h.b16 %v521
    %v1508 = vunpack.c.l.b16 %v522
    %v1509 = vunpack.c.h.b16 %v522
    %v1510 = vunpack.c.l.b16 %v523
    %v1511 = vunpack.c.h.b16 %v523
    %v1512 = vunpack.c.l.b16 %v524
    %v1513 = vunpack.c.h.b16 %v524
    %v1514 = vunpack.c.l.b16 %v525
    %v1515 = vunpack.c.h.b16 %v525
    %v1516 = vunpack.c.l.b16 %v526
    %v1517 = vunpack.c.h.b16 %v526
    %v1518 = vunpack.c.l.b16 %v527
    %v1519 = vunpack.c.h.b16 %v527
    %v1520 = vunpack.c.l.b16 %v528
    %v1521 = vunpack.c.h.b16 %v528
    %v1522 = vunpack.c.l.b16 %v529
    %v1523 = vunpack.c.h.b16 %v529
    %v1524 = vunpack.c.l.b16 %v530
    %v1525 = vunpack.c.h.b16 %v530
    %v1526 = vunpack.c.l.b16 %v531
    %v1527 = vunpack.c.h.b16 %v531
    %v1528 = vunpack.c.l.b16 %v532
    %v1529 = vunpack.c.h.b16 %v532
    %v1530 = vunpack.c.l.b16 %v533
    %v1531 = vunpack.c.h.b16 %v533
    %v1532 = vunpack.c.l.b16 %v534
    %v1533 = vunpack.c.h.b16 %v534
    %v1534 = vunpack.c.l.b16 %v535
    %v1535 = vunpack.c.h.b16 %v535
    %v1536 = vunpack.c.l.b16 %v536
    %v1537 = vunpack.c.h.b16 %v536
    %v1538 = vunpack.c.l.b16 %v537
    %v1539 = vunpack.c.h.b16 %v537
    %v1540 = vpack.c.b16 %v908, %v900
    %v1541 = vpack.c.b16 %v909, %v901
    %v1542 = vpack.c.b16 %v910, %v902
    %v1543 = vpack.c.b16 %v911, %v903
    %v1544 = vpack.c.b16 %v912, %v904
    %v1545 = vpack.c.b16 %v913, %v905
    %v1546 = vpack.c.b16 %v914, %v906
    %v1547 = vpack.c.b16 %v915, %v907
    %v1548 = vpack.c.b16 %v924, %v916
    %v1549 = vpack.c.b16 %v925, %v917
    %v1550 = vpack.c.b16 %v926, %v918
    %v1551 = vpack.c.b16 %v927, %v919
    %v1552 = vpack.c.b16 %v928, %v920
    %v1553 = vpack.c.b16 %v929, %v921
    %v1554 = vpack.c.b16 %v930, %v922
    %v1555 = vpack.c.b16 %v931, %v923
    %v1556 = vpack.c.b16 %v940, %v932
    %v1557 = vpack.c.b16 %v941, %v933
    %v1558 = vpack.c.b16 %v942, %v934
    %v1559 = vpack.c.b16 %v943, %v935
    %v1560 = vpack.c.b16 %v944, %v936
    %v1561 = vpack.c.b16 %v945, %v937
    %v1562 = vpack.c.b16 %v946, %v938
    %v1563 = vpack.c.b16 %v947, %v939
    %v1564 = vpack.c.b16 %v956, %v948
    %v1565 = vpack.c.b16 %v957, %v949
    %v1566 = vpack.c.b16 %v958, %v950
    %v1567 = vpack.c.b16 %v959, %v951
    %v1568 = vpack.c.b16 %v960, %v952
    %v1569 = vpack.c.b16 %v961, %v953
    %v1570 = vpack.c.b16 %v962, %v954
    %v1571 = vpack.c.b16 %v963, %v955
    %v1572 = vpack.c.b16 %v972, %v964
    %v1573 = vpack.c.b16 %v973, %v965
    %v1574 = vpack.c.b16 %v974, %v966
    %v1575 = vpack.c.b16 %v975, %v967
    %v1576 = vpack.c.b16 %v976, %v968
    %v1577 = vpack.c.b16 %v977, %v969
    %v1578 = vpack.c.b16 %v978, %v970
    %v1579 = vpack.c.b16 %v979, %v971
    %v1580 = vpack.c.b16 %v988, %v980
    %v1581 = vpack.c.b16 %v989, %v981
    %v1582 = vpack.c.b16 %v990, %v982
    %v1583 = vpack.c.b16 %v991, %v983
    %v1584 = vpack.c.b16 %v992, %v984
    %v1585 = vpack.c.b16 %v993, %v985
    %v1586 = vpack.c.b16 %v994, %v986
    %v1587 = vpack.c.b16 %v995, %v987
    %v1588 = vpack.c.b16 %v1004, %v996
    %v1589 = vpack.c.b16 %v1005, %v997
    %v1590 = vpack.c.b16 %v1006, %v998
    %v1591 = vpack.c.b16 %v1007, %v999
    %v1592 = vpack.c.b16 %v1008, %v1000
    %v1593 = vpack.c.b16 %v1009, %v1001
    %v1594 = vpack.c.b16 %v1010, %v1002
    %v1595 = vpack.c.b16 %v1011, %v1003
    %v1596 = vpack.c.b16 %v1020, %v1012
    %v1597 = vpack.c.b16 %v1021, %v1013
    %v1598 = vpack.c.b16 %v1022, %v1014
    %v1599 = vpack.c.b16 %v1023, %v1015
    %v1600 = vpack.c.b16 %v1024, %v1016
    %v1601 = vpack.c.b16 %v1025, %v1017
    %v1602 = vpack.c.b16 %v1026, %v1018
    %v1603 = vpack.c.b16 %v1027, %v1019
    %v1604 = vpack.c.b16 %v1036, %v1028
    %v1605 = vpack.c.b16 %v1037, %v1029
    %v1606 = vpack.c.b16 %v1038, %v1030
    %v1607 = vpack.c.b16 %v1039, %v1031
    %v1608 = vpack.c.b16 %v1040, %v1032
    %v1609 = vpack.c.b16 %v1041, %v1033
    %v1610 = vpack.c.b16 %v1042, %v1034
    %v1611 = vpack.c.b16 %v1043, %v1035
    %v1612 = vpack.c.b16 %v1052, %v1044
    %v1613 = vpack.c.b16 %v1053, %v1045
    %v1614 = vpack.c.b16 %v1054, %v1046
    %v1615 = vpack.c.b16 %v1055, %v1047
    %v1616 = vpack.c.b16 %v1056, %v1048
    %v1617 = vpack.c.b16 %v1057, %v1049
    %v1618 = vpack.c.b16 %v1058, %v1050
    %v1619 = vpack.c.b16 %v1059, %v1051
    %v1620 = vpack.c.b16 %v1068, %v1060
    %v1621 = vpack.c.b16 %v1069, %v1061
    %v1622 = vpack.c.b16 %v1070, %v1062
    %v1623 = vpack.c.b16 %v1071, %v1063
    %v1624 = vpack.c.b16 %v1072, %v1064
    %v1625 = vpack.c.b16 %v1073, %v1065
    %v1626 = vpack.c.b16 %v1074, %v1066
    %v1627 = vpack.c.b16 %v1075, %v1067
    %v1628 = vpack.c.b16 %v1084, %v1076
    %v1629 = vpack.c.b16 %v1085, %v1077
    %v1630 = vpack.c.b16 %v1086, %v1078
    %v1631 = vpack.c.b16 %v1087, %v1079
    %v1632 = vpack.c.b16 %v1088, %v1080
    %v1633 = vpack.c.b16 %v1089, %v1081
    %v1634 = vpack.c.b16 %v1090, %v1082
    %v1635 = vpack.c.b16 %v1091, %v1083
    %v1636 = vpack.c.b16 %v1100, %v1092
    %v1637 = vpack.c.b16 %v1101, %v1093
    %v1638 = vpack.c.b16 %v1102, %v1094
    %v1639 = vpack.c.b16 %v1103, %v1095
    %v1640 = vpack.c.b16 %v1104, %v1096
    %v1641 = vpack.c.b16 %v1105, %v1097
    %v1642 = vpack.c.b16 %v1106, %v1098
    %v1643 = vpack.c.b16 %v1107, %v1099
    %v1644 = vpack.c.b16 %v1116, %v1108
    %v1645 = vpack.c.b16 %v1117, %v1109
    %v1646 = vpack.c.b16 %v1118, %v1110
    %v1647 = vpack.c.b16 %v1119, %v1111
    %v1648 = vpack.c.b16 %v1120, %v1112
    %v1649 = vpack.c.b16 %v1121, %v1113
    %v1650 = vpack.c.b16 %v1122, %v1114
    %v1651 = vpack.c.b16 %v1123, %v1115
    %v1652 = vpack.c.b16 %v1132, %v1124
    %v1653 = vpack.c.b16 %v1133, %v1125
    %v1654 = vpack.c.b16 %v1134, %v1126
    %v1655 = vpack.c.b16 %v1135, %v1127
    %v1656 = vpack.c.b16 %v1136, %v1128
    %v1657 = vpack.c.b16 %v1137, %v1129
    %v1658 = vpack.c.b16 %v1138, %v1130
    %v1659 = vpack.c.b16 %v1139, %v1131
    %v1660 = vpack.c.b16 %v1148, %v1140
    %v1661 = vpack.c.b16 %v1149, %v1141
    %v1662 = vpack.c.b16 %v1150, %v1142
    %v1663 = vpack.c.b16 %v1151, %v1143
    %v1664 = vpack.c.b16 %v1152, %v1144
    %v1665 = vpack.c.b16 %v1153, %v1145
    %v1666 = vpack.c.b16 %v1154, %v1146
    %v1667 = vpack.c.b16 %v1155, %v1147
    %v1668 = vpack.c.b16 %v1164, %v1156
    %v1669 = vpack.c.b16 %v1165, %v1157
    %v1670 = vpack.c.b16 %v1166, %v1158
    %v1671 = vpack.c.b16 %v1167, %v1159
    %v1672 = vpack.c.b16 %v1168, %v1160
    %v1673 = vpack.c.b16 %v1169, %v1161
    %v1674 = vpack.c.b16 %v1170, %v1162
    %v1675 = vpack.c.b16 %v1171, %v1163
    %v1676 = vpack.c.b16 %v1180, %v1172
    %v1677 = vpack.c.b16 %v1181, %v1173
    %v1678 = vpack.c.b16 %v1182, %v1174
    %v1679 = vpack.c.b16 %v1183, %v1175
    %v1680 = vpack.c.b16 %v1184, %v1176
    %v1681 = vpack.c.b16 %v1185, %v1177
    %v1682 = vpack.c.b16 %v1186, %v1178
    %v1683 = vpack.c.b16 %v1187, %v1179
    %v1684 = vpack.c.b16 %v1196, %v1188
    %v1685 = vpack.c.b16 %v1197, %v1189
    %v1686 = vpack.c.b16 %v1198, %v1190
    %v1687 = vpack.c.b16 %v1199, %v1191
    %v1688 = vpack.c.b16 %v1200, %v1192
    %v1689 = vpack.c.b16 %v1201, %v1193
    %v1690 = vpack.c.b16 %v1202, %v1194
    %v1691 = vpack.c.b16 %v1203, %v1195
    %v1692 = vpack.c.b16 %v1212, %v1204
    %v1693 = vpack.c.b16 %v1213, %v1205
    %v1694 = vpack.c.b16 %v1214, %v1206
    %v1695 = vpack.c.b16 %v1215, %v1207
    %v1696 = vpack.c.b16 %v1216, %v1208
    %v1697 = vpack.c.b16 %v1217, %v1209
    %v1698 = vpack.c.b16 %v1218, %v1210
    %v1699 = vpack.c.b16 %v1219, %v1211
    %v1700 = vpack.c.b16 %v1228, %v1220
    %v1701 = vpack.c.b16 %v1229, %v1221
    %v1702 = vpack.c.b16 %v1230, %v1222
    %v1703 = vpack.c.b16 %v1231, %v1223
    %v1704 = vpack.c.b16 %v1232, %v1224
    %v1705 = vpack.c.b16 %v1233, %v1225
    %v1706 = vpack.c.b16 %v1234, %v1226
    %v1707 = vpack.c.b16 %v1235, %v1227
    %v1708 = vpack.c.b16 %v1244, %v1236
    %v1709 = vpack.c.b16 %v1245, %v1237
    %v1710 = vpack.c.b16 %v1246, %v1238
    %v1711 = vpack.c.b16 %v1247, %v1239
    %v1712 = vpack.c.b16 %v1248, %v1240
    %v1713 = vpack.c.b16 %v1249, %v1241
    %v1714 = vpack.c.b16 %v1250, %v1242
    %v1715 = vpack.c.b16 %v1251, %v1243
    %v1716 = vpack.c.b16 %v1260, %v1252
    %v1717 = vpack.c.b16 %v1261, %v1253
    %v1718 = vpack.c.b16 %v1262, %v1254
    %v1719 = vpack.c.b16 %v1263, %v1255
    %v1720 = vpack.c.b16 %v1264, %v1256
    %v1721 = vpack.c.b16 %v1265, %v1257
    %v1722 = vpack.c.b16 %v1266, %v1258
    %v1723 = vpack.c.b16 %v1267, %v1259
    %v1724 = vpack.c.b16 %v1276, %v1268
    %v1725 = vpack.c.b16 %v1277, %v1269
    %v1726 = vpack.c.b16 %v1278, %v1270
    %v1727 = vpack.c.b16 %v1279, %v1271
    %v1728 = vpack.c.b16 %v1280, %v1272
    %v1729 = vpack.c.b16 %v1281, %v1273
    %v1730 = vpack.c.b16 %v1282, %v1274
    %v1731 = vpack.c.b16 %v1283, %v1275
    %v1732 = vpack.c.b16 %v1292, %v1284
    %v1733 = vpack.c.b16 %v1293, %v1285
    %v1734 = vpack.c.b16 %v1294, %v1286
    %v1735 = vpack.c.b16 %v1295, %v1287
    %v1736 = vpack.c.b16 %v1296, %v1288
    %v1737 = vpack.c.b16 %v1297, %v1289
    %v1738 = vpack.c.b16 %v1298, %v1290
    %v1739 = vpack.c.b16 %v1299, %v1291
    %v1740 = vpack.c.b16 %v1308, %v1300
    %v1741 = vpack.c.b16 %v1309, %v1301
    %v1742 = vpack.c.b16 %v1310, %v1302
    %v1743 = vpack.c.b16 %v1311, %v1303
    %v1744 = vpack.c.b16 %v1312, %v1304
    %v1745 = vpack.c.b16 %v1313, %v1305
    %v1746 = vpack.c.b16 %v1314, %v1306
    %v1747 = vpack.c.b16 %v1315, %v1307
    %v1748 = vpack.c.b16 %v1324, %v1316
    %v1749 = vpack.c.b16 %v1325, %v1317
    %v1750 = vpack.c.b16 %v1326, %v1318
    %v1751 = vpack.c.b16 %v1327, %v1319
    %v1752 = vpack.c.b16 %v1328, %v1320
    %v1753 = vpack.c.b16 %v1329, %v1321
    %v1754 = vpack.c.b16 %v1330, %v1322
    %v1755 = vpack.c.b16 %v1331, %v1323
    %v1756 = vpack.c.b16 %v1340, %v1332
    %v1757 = vpack.c.b16 %v1341, %v1333
    %v1758 = vpack.c.b16 %v1342, %v1334
    %v1759 = vpack.c.b16 %v1343, %v1335
    %v1760 = vpack.c.b16 %v1344, %v1336
    %v1761 = vpack.c.b16 %v1345, %v1337
    %v1762 = vpack.c.b16 %v1346, %v1338
    %v1763 = vpack.c.b16 %v1347, %v1339
    %v1764 = vpack.c.b16 %v1356, %v1348
    %v1765 = vpack.c.b16 %v1357, %v1349
    %v1766 = vpack.c.b16 %v1358, %v1350
    %v1767 = vpack.c.b16 %v1359, %v1351
    %v1768 = vpack.c.b16 %v1360, %v1352
    %v1769 = vpack.c.b16 %v1361, %v1353
    %v1770 = vpack.c.b16 %v1362, %v1354
    %v1771 = vpack.c.b16 %v1363, %v1355
    %v1772 = vpack.c.b16 %v1372, %v1364
    %v1773 = vpack.c.b16 %v1373, %v1365
    %v1774 = vpack.c.b16 %v1374, %v1366
    %v1775 = vpack.c.b16 %v1375, %v1367
    %v1776 = vpack.c.b16 %v1376, %v1368
    %v1777 = vpack.c.b16 %v1377, %v1369
    %v1778 = vpack.c.b16 %v1378, %v1370
    %v1779 = vpack.c.b16 %v1379, %v1371
    %v1780 = vpack.c.b16 %v1388, %v1380
    %v1781 = vpack.c.b16 %v1389, %v1381
    %v1782 = vpack.c.b16 %v1390, %v1382
    %v1783 = vpack.c.b16 %v1391, %v1383
    %v1784 = vpack.c.b16 %v1392, %v1384
    %v1785 = vpack.c.b16 %v1393, %v1385
    %v1786 = vpack.c.b16 %v1394, %v1386
    %v1787 = vpack.c.b16 %v1395, %v1387
    %v1788 = vpack.c.b16 %v1404, %v1396
    %v1789 = vpack.c.b16 %v1405, %v1397
    %v1790 = vpack.c.b16 %v1406, %v1398
    %v1791 = vpack.c.b16 %v1407, %v1399
    %v1792 = vpack.c.b16 %v1408, %v1400
    %v1793 = vpack.c.b16 %v1409, %v1401
    %v1794 = vpack.c.b16 %v1410, %v1402
    %v1795 = vpack.c.b16 %v1411, %v1403
    %v1796 = vpack.c.b16 %v1420, %v1412
    %v1797 = vpack.c.b16 %v1421, %v1413
    %v1798 = vpack.c.b16 %v1422, %v1414
    %v1799 = vpack.c.b16 %v1423, %v1415
    %v1800 = vpack.c.b16 %v1424, %v1416
    %v1801 = vpack.c.b16 %v1425, %v1417
    %v1802 = vpack.c.b16 %v1426, %v1418
    %v1803 = vpack.c.b16 %v1427, %v1419
    %v1804 = vpack.c.b16 %v1436, %v1428
    %v1805 = vpack.c.b16 %v1437, %v1429
    %v1806 = vpack.c.b16 %v1438, %v1430
    %v1807 = vpack.c.b16 %v1439, %v1431
    %v1808 = vpack.c.b16 %v1440, %v1432
    %v1809 = vpack.c.b16 %v1441, %v1433
    %v1810 = vpack.c.b16 %v1442, %v1434
    %v1811 = vpack.c.b16 %v1443, %v1435
    %v1812 = vpack.c.b16 %v1452, %v1444
    %v1813 = vpack.c.b16 %v1453, %v1445
    %v1814 = vpack.c.b16 %v1454, %v1446
    %v1815 = vpack.c.b16 %v1455, %v1447
    %v1816 = vpack.c.b16 %v1456, %v1448
    %v1817 = vpack.c.b16 %v1457, %v1449
    %v1818 = vpack.c.b16 %v1458, %v1450
    %v1819 = vpack.c.b16 %v1459, %v1451
    %v1820 = vpack.c.b16 %v1468, %v1460
    %v1821 = vpack.c.b16 %v1469, %v1461
    %v1822 = vpack.c.b16 %v1470, %v1462
    %v1823 = vpack.c.b16 %v1471, %v1463
    %v1824 = vpack.c.b16 %v1472, %v1464
    %v1825 = vpack.c.b16 %v1473, %v1465
    %v1826 = vpack.c.b16 %v1474, %v1466
    %v1827 = vpack.c.b16 %v1475, %v1467
    %v1828 = vpack.c.b16 %v1484, %v1476
    %v1829 = vpack.c.b16 %v1485, %v1477
    %v1830 = vpack.c.b16 %v1486, %v1478
    %v1831 = vpack.c.b16 %v1487, %v1479
    %v1832 = vpack.c.b16 %v1488, %v1480
    %v1833 = vpack.c.b16 %v1489, %v1481
    %v1834 = vpack.c.b16 %v1490, %v1482
    %v1835 = vpack.c.b16 %v1491, %v1483
    %v1836 = vpack.c.b16 %v1500, %v1492
    %v1837 = vpack.c.b16 %v1501, %v1493
    %v1838 = vpack.c.b16 %v1502, %v1494
    %v1839 = vpack.c.b16 %v1503, %v1495
    %v1840 = vpack.c.b16 %v1504, %v1496
    %v1841 = vpack.c.b16 %v1505, %v1497
    %v1842 = vpack.c.b16 %v1506, %v1498
    %v1843 = vpack.c.b16 %v1507, %v1499
    %v1844 = vpack.c.b16 %v1516, %v1508
    %v1845 = vpack.c.b16 %v1517, %v1509
    %v1846 = vpack.c.b16 %v1518, %v1510
    %v1847 = vpack.c.b16 %v1519, %v1511
    %v1848 = vpack.c.b16 %v1520, %v1512
    %v1849 = vpack.c.b16 %v1521, %v1513
    %v1850 = vpack.c.b16 %v1522, %v1514
    %v1851 = vpack.c.b16 %v1523, %v1515
    %v1852 = vpack.c.b16 %v1532, %v1524
    %v1853 = vpack.c.b16 %v1533, %v1525
    %v1854 = vpack.c.b16 %v1534, %v1526
    %v1855 = vpack.c.b16 %v1535, %v1527
    %v1856 = vpack.c.b16 %v1536, %v1528
    %v1857 = vpack.c.b16 %v1537, %v1529
    %v1858 = vpack.c.b16 %v1538, %v1530
    %v1859 = vpack.c.b16 %v1539, %v1531
    %2180 = vmatprep.subr.bf16.mxu0 %v1597
    %2181 = vmatpush1.bf16.msra.mxu0 %v1596
    %2182 = vmatprep.subr.bf16.mxu0 %v1589
    %2183 = vmatpush1.bf16.msra.mxu0 %v1588
    %2184 = vmatprep.subr.bf16.mxu0 %v1581
    %2185 = vmatpush1.bf16.msra.mxu0 %v1580
    %2186 = vmatprep.subr.bf16.mxu0 %v1573
    %2187 = vmatpush1.bf16.msra.mxu0 %v1572
    %2188 = vmatprep.subr.bf16.mxu0 %v1565
    %2189 = vmatpush1.bf16.msra.mxu0 %v1564
    %2190 = vmatprep.subr.bf16.mxu0 %v1557
    %2191 = vmatpush1.bf16.msra.mxu0 %v1556
    %2192 = vmatprep.subr.bf16.mxu0 %v1549
    %2193 = vmatpush1.bf16.msra.mxu0 %v1548
    %2194 = vmatprep.subr.bf16.mxu0 %v1541
    %2195 = vmatpush1.bf16.msra.mxu0 %v1540
    %2196 = vmatprep.subr.bf16.mxu0 %v1661
    %2197 = vmatpush2.bf16.msra.mxu0 %v1660
    %2198 = vmatprep.subr.bf16.mxu0 %v1653
    %2199 = vmatpush2.bf16.msra.mxu0 %v1652
    %2200 = vmatprep.subr.bf16.mxu0 %v1645
    %2201 = vmatpush2.bf16.msra.mxu0 %v1644
    %2202 = vmatprep.subr.bf16.mxu0 %v1637
    %2203 = vmatpush2.bf16.msra.mxu0 %v1636
    %2204 = vmatprep.subr.bf16.mxu0 %v1629
    %2205 = vmatpush2.bf16.msra.mxu0 %v1628
    %2206 = vmatprep.subr.bf16.mxu0 %v1621
    %2207 = vmatpush2.bf16.msra.mxu0 %v1620
    %2208 = vmatprep.subr.bf16.mxu0 %v1613
    %2209 = vmatpush2.bf16.msra.mxu0 %v1612
    %2210 = vmatprep.subr.bf16.mxu0 %v1605
    %2211 = vmatpush2.bf16.msra.mxu0 %v1604
    %2212 = vmatprep.mubr.bf16.mxu0 %v213
    %2213 = vmatmul.mubr.bf16.gmra.mxu0 %v206
    %v2214 = vpop.f32.mrf.mxu0
    %v2215 = vadd.f32 %v543, %v2214
    %v2216 = vpop.f32.mrf.mxu0
    %v2217 = vadd.f32 %v547, %v2216
    %v2218 = vpop.f32.mrf.mxu0
    %v2219 = vpop.f32.mrf.mxu0
    %2220 = vdwg.mxu0
    %2221 = vmatprep.subr.bf16.mxu0 %v1725
    %2222 = vmatpush1.bf16.msra.mxu0 %v1724
    %2223 = vmatprep.subr.bf16.mxu0 %v1717
    %2224 = vmatpush1.bf16.msra.mxu0 %v1716
    %2225 = vmatprep.subr.bf16.mxu0 %v1709
    %2226 = vmatpush1.bf16.msra.mxu0 %v1708
    %2227 = vmatprep.subr.bf16.mxu0 %v1701
    %2228 = vmatpush1.bf16.msra.mxu0 %v1700
    %2229 = vmatprep.subr.bf16.mxu0 %v1693
    %2230 = vmatpush1.bf16.msra.mxu0 %v1692
    %2231 = vmatprep.subr.bf16.mxu0 %v1685
    %2232 = vmatpush1.bf16.msra.mxu0 %v1684
    %2233 = vmatprep.subr.bf16.mxu0 %v1677
    %2234 = vmatpush1.bf16.msra.mxu0 %v1676
    %2235 = vmatprep.subr.bf16.mxu0 %v1669
    %2236 = vmatpush1.bf16.msra.mxu0 %v1668
    %2237 = vmatprep.subr.bf16.mxu0 %v1789
    %2238 = vmatpush2.bf16.msra.mxu0 %v1788
    %2239 = vmatprep.subr.bf16.mxu0 %v1781
    %2240 = vmatpush2.bf16.msra.mxu0 %v1780
    %2241 = vmatprep.subr.bf16.mxu0 %v1773
    %2242 = vmatpush2.bf16.msra.mxu0 %v1772
    %2243 = vmatprep.subr.bf16.mxu0 %v1765
    %2244 = vmatpush2.bf16.msra.mxu0 %v1764
    %2245 = vmatprep.subr.bf16.mxu0 %v1757
    %2246 = vmatpush2.bf16.msra.mxu0 %v1756
    %2247 = vmatprep.subr.bf16.mxu0 %v1749
    %2248 = vmatpush2.bf16.msra.mxu0 %v1748
    %2249 = vmatprep.subr.bf16.mxu0 %v1741
    %2250 = vmatpush2.bf16.msra.mxu0 %v1740
    %2251 = vmatprep.subr.bf16.mxu0 %v1733
    %2252 = vmatpush2.bf16.msra.mxu0 %v1732
    %2253 = vmatprep.mubr.bf16.mxu0 %v163
    %2254 = vmatmul.mubr.bf16.gmra.mxu0 %v214
    %v2255 = vpop.f32.mrf.mxu0
    %v2256 = vadd.f32 %v2215, %v2255
    %v2257 = vpop.f32.mrf.mxu0
    %v2258 = vadd.f32 %v2217, %v2257
    %v2259 = vpop.f32.mrf.mxu0
    %v2260 = vpop.f32.mrf.mxu0
    %2261 = vdwg.mxu0
    %2262 = vmatprep.subr.bf16.mxu0 %v1853
    %2263 = vmatpush1.bf16.msra.mxu0 %v1852
    %2264 = vmatprep.subr.bf16.mxu0 %v1845
    %2265 = vmatpush1.bf16.msra.mxu0 %v1844
    %2266 = vmatprep.subr.bf16.mxu0 %v1837
    %2267 = vmatpush1.bf16.msra.mxu0 %v1836
    %2268 = vmatprep.subr.bf16.mxu0 %v1829
    %2269 = vmatpush1.bf16.msra.mxu0 %v1828
    %2270 = vmatprep.subr.bf16.mxu0 %v1821
    %2271 = vmatpush1.bf16.msra.mxu0 %v1820
    %2272 = vmatprep.subr.bf16.mxu0 %v1813
    %2273 = vmatpush1.bf16.msra.mxu0 %v1812
    %2274 = vmatprep.subr.bf16.mxu0 %v1805
    %2275 = vmatpush1.bf16.msra.mxu0 %v1804
    %2276 = vmatprep.subr.bf16.mxu0 %v1797
    %2277 = vmatpush1.bf16.msra.mxu0 %v1796
    %2278 = vmatprep.subr.bf16.mxu0 0
    %2279 = vmatpush2.bf16.msra.mxu0 0
    %2280 = vmatprep.subr.bf16.mxu0 0
    %2281 = vmatpush2.bf16.msra.mxu0 0
    %2282 = vmatprep.subr.bf16.mxu0 0
    %2283 = vmatpush2.bf16.msra.mxu0 0
    %2284 = vmatprep.subr.bf16.mxu0 0
    %2285 = vmatpush2.bf16.msra.mxu0 0
    %2286 = vmatprep.subr.bf16.mxu0 0
    %2287 = vmatpush2.bf16.msra.mxu0 0
    %2288 = vmatprep.subr.bf16.mxu0 0
    %2289 = vmatpush2.bf16.msra.mxu0 0
    %2290 = vmatprep.subr.bf16.mxu0 0
    %2291 = vmatpush2.bf16.msra.mxu0 0
    %2292 = vmatprep.subr.bf16.mxu0 0
    %2293 = vmatpush2.bf16.msra.mxu0 0
    %2294 = vmatprep.mubr.bf16.mxu0 0
    %2295 = vmatmul.mubr.bf16.gmra.mxu0 %v164
    %v2296 = vpop.f32.mrf.mxu0
    %v2297 = vadd.f32 %v2256, %v2296
    %v2298 = vpop.f32.mrf.mxu0
    %v2299 = vadd.f32 %v2258, %v2298
    %v2300 = vpop.f32.mrf.mxu0
    %v2301 = vpop.f32.mrf.mxu0
    %2302 = vdwg.mxu0
    %2303 = vmatprep.subr.bf16.mxu0 %v1599
    %2304 = vmatpush1.bf16.msra.mxu0 %v1598
    %2305 = vmatprep.subr.bf16.mxu0 %v1591
    %2306 = vmatpush1.bf16.msra.mxu0 %v1590
    %2307 = vmatprep.subr.bf16.mxu0 %v1583
    %2308 = vmatpush1.bf16.msra.mxu0 %v1582
    %2309 = vmatprep.subr.bf16.mxu0 %v1575
    %2310 = vmatpush1.bf16.msra.mxu0 %v1574
    %2311 = vmatprep.subr.bf16.mxu0 %v1567
    %2312 = vmatpush1.bf16.msra.mxu0 %v1566
    %2313 = vmatprep.subr.bf16.mxu0 %v1559
    %2314 = vmatpush1.bf16.msra.mxu0 %v1558
    %2315 = vmatprep.subr.bf16.mxu0 %v1551
    %2316 = vmatpush1.bf16.msra.mxu0 %v1550
    %2317 = vmatprep.subr.bf16.mxu0 %v1543
    %2318 = vmatpush1.bf16.msra.mxu0 %v1542
    %2319 = vmatprep.subr.bf16.mxu0 %v1663
    %2320 = vmatpush2.bf16.msra.mxu0 %v1662
    %2321 = vmatprep.subr.bf16.mxu0 %v1655
    %2322 = vmatpush2.bf16.msra.mxu0 %v1654
    %2323 = vmatprep.subr.bf16.mxu0 %v1647
    %2324 = vmatpush2.bf16.msra.mxu0 %v1646
    %2325 = vmatprep.subr.bf16.mxu0 %v1639
    %2326 = vmatpush2.bf16.msra.mxu0 %v1638
    %2327 = vmatprep.subr.bf16.mxu0 %v1631
    %2328 = vmatpush2.bf16.msra.mxu0 %v1630
    %2329 = vmatprep.subr.bf16.mxu0 %v1623
    %2330 = vmatpush2.bf16.msra.mxu0 %v1622
    %2331 = vmatprep.subr.bf16.mxu0 %v1615
    %2332 = vmatpush2.bf16.msra.mxu0 %v1614
    %2333 = vmatprep.subr.bf16.mxu0 %v1607
    %2334 = vmatpush2.bf16.msra.mxu0 %v1606
    %2335 = vmatprep.mubr.bf16.mxu0 %v213
    %2336 = vmatmul.mubr.bf16.gmra.mxu0 %v206
    %v2337 = vpop.f32.mrf.mxu0
    %v2338 = vadd.f32 %v551, %v2337
    %v2339 = vpop.f32.mrf.mxu0
    %v2340 = vadd.f32 %v555, %v2339
    %v2341 = vpop.f32.mrf.mxu0
    %v2342 = vpop.f32.mrf.mxu0
    %2343 = vdwg.mxu0
    %2344 = vmatprep.subr.bf16.mxu0 %v1727
    %2345 = vmatpush1.bf16.msra.mxu0 %v1726
    %2346 = vmatprep.subr.bf16.mxu0 %v1719
    %2347 = vmatpush1.bf16.msra.mxu0 %v1718
    %2348 = vmatprep.subr.bf16.mxu0 %v1711
    %2349 = vmatpush1.bf16.msra.mxu0 %v1710
    %2350 = vmatprep.subr.bf16.mxu0 %v1703
    %2351 = vmatpush1.bf16.msra.mxu0 %v1702
    %2352 = vmatprep.subr.bf16.mxu0 %v1695
    %2353 = vmatpush1.bf16.msra.mxu0 %v1694
    %2354 = vmatprep.subr.bf16.mxu0 %v1687
    %2355 = vmatpush1.bf16.msra.mxu0 %v1686
    %2356 = vmatprep.subr.bf16.mxu0 %v1679
    %2357 = vmatpush1.bf16.msra.mxu0 %v1678
    %2358 = vmatprep.subr.bf16.mxu0 %v1671
    %2359 = vmatpush1.bf16.msra.mxu0 %v1670
    %2360 = vmatprep.subr.bf16.mxu0 %v1791
    %2361 = vmatpush2.bf16.msra.mxu0 %v1790
    %2362 = vmatprep.subr.bf16.mxu0 %v1783
    %2363 = vmatpush2.bf16.msra.mxu0 %v1782
    %2364 = vmatprep.subr.bf16.mxu0 %v1775
    %2365 = vmatpush2.bf16.msra.mxu0 %v1774
    %2366 = vmatprep.subr.bf16.mxu0 %v1767
    %2367 = vmatpush2.bf16.msra.mxu0 %v1766
    %2368 = vmatprep.subr.bf16.mxu0 %v1759
    %2369 = vmatpush2.bf16.msra.mxu0 %v1758
    %2370 = vmatprep.subr.bf16.mxu0 %v1751
    %2371 = vmatpush2.bf16.msra.mxu0 %v1750
    %2372 = vmatprep.subr.bf16.mxu0 %v1743
    %2373 = vmatpush2.bf16.msra.mxu0 %v1742
    %2374 = vmatprep.subr.bf16.mxu0 %v1735
    %2375 = vmatpush2.bf16.msra.mxu0 %v1734
    %2376 = vmatprep.mubr.bf16.mxu0 %v163
    %2377 = vmatmul.mubr.bf16.gmra.mxu0 %v214
    %v2378 = vpop.f32.mrf.mxu0
    %v2379 = vadd.f32 %v2338, %v2378
    %v2380 = vpop.f32.mrf.mxu0
    %v2381 = vadd.f32 %v2340, %v2380
    %v2382 = vpop.f32.mrf.mxu0
    %v2383 = vpop.f32.mrf.mxu0
    %2384 = vdwg.mxu0
    %2385 = vmatprep.subr.bf16.mxu0 %v1855
    %2386 = vmatpush1.bf16.msra.mxu0 %v1854
    %2387 = vmatprep.subr.bf16.mxu0 %v1847
    %2388 = vmatpush1.bf16.msra.mxu0 %v1846
    %2389 = vmatprep.subr.bf16.mxu0 %v1839
    %2390 = vmatpush1.bf16.msra.mxu0 %v1838
    %2391 = vmatprep.subr.bf16.mxu0 %v1831
    %2392 = vmatpush1.bf16.msra.mxu0 %v1830
    %2393 = vmatprep.subr.bf16.mxu0 %v1823
    %2394 = vmatpush1.bf16.msra.mxu0 %v1822
    %2395 = vmatprep.subr.bf16.mxu0 %v1815
    %2396 = vmatpush1.bf16.msra.mxu0 %v1814
    %2397 = vmatprep.subr.bf16.mxu0 %v1807
    %2398 = vmatpush1.bf16.msra.mxu0 %v1806
    %2399 = vmatprep.subr.bf16.mxu0 %v1799
    %2400 = vmatpush1.bf16.msra.mxu0 %v1798
    %2401 = vmatprep.subr.bf16.mxu0 0
    %2402 = vmatpush2.bf16.msra.mxu0 0
    %2403 = vmatprep.subr.bf16.mxu0 0
    %2404 = vmatpush2.bf16.msra.mxu0 0
    %2405 = vmatprep.subr.bf16.mxu0 0
    %2406 = vmatpush2.bf16.msra.mxu0 0
    %2407 = vmatprep.subr.bf16.mxu0 0
    %2408 = vmatpush2.bf16.msra.mxu0 0
    %2409 = vmatprep.subr.bf16.mxu0 0
    %2410 = vmatpush2.bf16.msra.mxu0 0
    %2411 = vmatprep.subr.bf16.mxu0 0
    %2412 = vmatpush2.bf16.msra.mxu0 0
    %2413 = vmatprep.subr.bf16.mxu0 0
    %2414 = vmatpush2.bf16.msra.mxu0 0
    %2415 = vmatprep.subr.bf16.mxu0 0
    %2416 = vmatpush2.bf16.msra.mxu0 0
    %2417 = vmatprep.mubr.bf16.mxu0 0
    %2418 = vmatmul.mubr.bf16.gmra.mxu0 %v164
    %v2419 = vpop.f32.mrf.mxu0
    %v2420 = vadd.f32 %v2379, %v2419
    %v2421 = vpop.f32.mrf.mxu0
    %v2422 = vadd.f32 %v2381, %v2421
    %v2423 = vpop.f32.mrf.mxu0
    %v2424 = vpop.f32.mrf.mxu0
    %2425 = vdwg.mxu0
    %2426 = vmatprep.subr.bf16.mxu0 %v1601
    %2427 = vmatpush1.bf16.msra.mxu0 %v1600
    %2428 = vmatprep.subr.bf16.mxu0 %v1593
    %2429 = vmatpush1.bf16.msra.mxu0 %v1592
    %2430 = vmatprep.subr.bf16.mxu0 %v1585
    %2431 = vmatpush1.bf16.msra.mxu0 %v1584
    %2432 = vmatprep.subr.bf16.mxu0 %v1577
    %2433 = vmatpush1.bf16.msra.mxu0 %v1576
    %2434 = vmatprep.subr.bf16.mxu0 %v1569
    %2435 = vmatpush1.bf16.msra.mxu0 %v1568
    %2436 = vmatprep.subr.bf16.mxu0 %v1561
    %2437 = vmatpush1.bf16.msra.mxu0 %v1560
    %2438 = vmatprep.subr.bf16.mxu0 %v1553
    %2439 = vmatpush1.bf16.msra.mxu0 %v1552
    %2440 = vmatprep.subr.bf16.mxu0 %v1545
    %2441 = vmatpush1.bf16.msra.mxu0 %v1544
    %2442 = vmatprep.subr.bf16.mxu0 %v1665
    %2443 = vmatpush2.bf16.msra.mxu0 %v1664
    %2444 = vmatprep.subr.bf16.mxu0 %v1657
    %2445 = vmatpush2.bf16.msra.mxu0 %v1656
    %2446 = vmatprep.subr.bf16.mxu0 %v1649
    %2447 = vmatpush2.bf16.msra.mxu0 %v1648
    %2448 = vmatprep.subr.bf16.mxu0 %v1641
    %2449 = vmatpush2.bf16.msra.mxu0 %v1640
    %2450 = vmatprep.subr.bf16.mxu0 %v1633
    %2451 = vmatpush2.bf16.msra.mxu0 %v1632
    %2452 = vmatprep.subr.bf16.mxu0 %v1625
    %2453 = vmatpush2.bf16.msra.mxu0 %v1624
    %2454 = vmatprep.subr.bf16.mxu0 %v1617
    %2455 = vmatpush2.bf16.msra.mxu0 %v1616
    %2456 = vmatprep.subr.bf16.mxu0 %v1609
    %2457 = vmatpush2.bf16.msra.mxu0 %v1608
    %2458 = vmatprep.mubr.bf16.mxu0 %v213
    %2459 = vmatmul.mubr.bf16.gmra.mxu0 %v206
    %v2460 = vpop.f32.mrf.mxu0
    %v2461 = vadd.f32 %v559, %v2460
    %v2462 = vpop.f32.mrf.mxu0
    %v2463 = vadd.f32 %v563, %v2462
    %v2464 = vpop.f32.mrf.mxu0
    %v2465 = vpop.f32.mrf.mxu0
    %2466 = vdwg.mxu0
    %2467 = vmatprep.subr.bf16.mxu0 %v1729
    %2468 = vmatpush1.bf16.msra.mxu0 %v1728
    %2469 = vmatprep.subr.bf16.mxu0 %v1721
    %2470 = vmatpush1.bf16.msra.mxu0 %v1720
    %2471 = vmatprep.subr.bf16.mxu0 %v1713
    %2472 = vmatpush1.bf16.msra.mxu0 %v1712
    %2473 = vmatprep.subr.bf16.mxu0 %v1705
    %2474 = vmatpush1.bf16.msra.mxu0 %v1704
    %2475 = vmatprep.subr.bf16.mxu0 %v1697
    %2476 = vmatpush1.bf16.msra.mxu0 %v1696
    %2477 = vmatprep.subr.bf16.mxu0 %v1689
    %2478 = vmatpush1.bf16.msra.mxu0 %v1688
    %2479 = vmatprep.subr.bf16.mxu0 %v1681
    %2480 = vmatpush1.bf16.msra.mxu0 %v1680
    %2481 = vmatprep.subr.bf16.mxu0 %v1673
    %2482 = vmatpush1.bf16.msra.mxu0 %v1672
    %2483 = vmatprep.subr.bf16.mxu0 %v1793
    %2484 = vmatpush2.bf16.msra.mxu0 %v1792
    %2485 = vmatprep.subr.bf16.mxu0 %v1785
    %2486 = vmatpush2.bf16.msra.mxu0 %v1784
    %2487 = vmatprep.subr.bf16.mxu0 %v1777
    %2488 = vmatpush2.bf16.msra.mxu0 %v1776
    %2489 = vmatprep.subr.bf16.mxu0 %v1769
    %2490 = vmatpush2.bf16.msra.mxu0 %v1768
    %2491 = vmatprep.subr.bf16.mxu0 %v1761
    %2492 = vmatpush2.bf16.msra.mxu0 %v1760
    %2493 = vmatprep.subr.bf16.mxu0 %v1753
    %2494 = vmatpush2.bf16.msra.mxu0 %v1752
    %2495 = vmatprep.subr.bf16.mxu0 %v1745
    %2496 = vmatpush2.bf16.msra.mxu0 %v1744
    %2497 = vmatprep.subr.bf16.mxu0 %v1737
    %2498 = vmatpush2.bf16.msra.mxu0 %v1736
    %2499 = vmatprep.mubr.bf16.mxu0 %v163
    %2500 = vmatmul.mubr.bf16.gmra.mxu0 %v214
    %v2501 = vpop.f32.mrf.mxu0
    %v2502 = vadd.f32 %v2461, %v2501
    %v2503 = vpop.f32.mrf.mxu0
    %v2504 = vadd.f32 %v2463, %v2503
    %v2505 = vpop.f32.mrf.mxu0
    %v2506 = vpop.f32.mrf.mxu0
    %2507 = vdwg.mxu0
    %2508 = vmatprep.subr.bf16.mxu0 %v1857
    %2509 = vmatpush1.bf16.msra.mxu0 %v1856
    %2510 = vmatprep.subr.bf16.mxu0 %v1849
    %2511 = vmatpush1.bf16.msra.mxu0 %v1848
    %2512 = vmatprep.subr.bf16.mxu0 %v1841
    %2513 = vmatpush1.bf16.msra.mxu0 %v1840
    %2514 = vmatprep.subr.bf16.mxu0 %v1833
    %2515 = vmatpush1.bf16.msra.mxu0 %v1832
    %2516 = vmatprep.subr.bf16.mxu0 %v1825
    %2517 = vmatpush1.bf16.msra.mxu0 %v1824
    %2518 = vmatprep.subr.bf16.mxu0 %v1817
    %2519 = vmatpush1.bf16.msra.mxu0 %v1816
    %2520 = vmatprep.subr.bf16.mxu0 %v1809
    %2521 = vmatpush1.bf16.msra.mxu0 %v1808
    %2522 = vmatprep.subr.bf16.mxu0 %v1801
    %2523 = vmatpush1.bf16.msra.mxu0 %v1800
    %2524 = vmatprep.subr.bf16.mxu0 0
    %2525 = vmatpush2.bf16.msra.mxu0 0
    %2526 = vmatprep.subr.bf16.mxu0 0
    %2527 = vmatpush2.bf16.msra.mxu0 0
    %2528 = vmatprep.subr.bf16.mxu0 0
    %2529 = vmatpush2.bf16.msra.mxu0 0
    %2530 = vmatprep.subr.bf16.mxu0 0
    %2531 = vmatpush2.bf16.msra.mxu0 0
    %2532 = vmatprep.subr.bf16.mxu0 0
    %2533 = vmatpush2.bf16.msra.mxu0 0
    %2534 = vmatprep.subr.bf16.mxu0 0
    %2535 = vmatpush2.bf16.msra.mxu0 0
    %2536 = vmatprep.subr.bf16.mxu0 0
    %2537 = vmatpush2.bf16.msra.mxu0 0
    %2538 = vmatprep.subr.bf16.mxu0 0
    %2539 = vmatpush2.bf16.msra.mxu0 0
    %2540 = vmatprep.mubr.bf16.mxu0 0
    %2541 = vmatmul.mubr.bf16.gmra.mxu0 %v164
    %v2542 = vpop.f32.mrf.mxu0
    %v2543 = vadd.f32 %v2502, %v2542
    %v2544 = vpop.f32.mrf.mxu0
    %v2545 = vadd.f32 %v2504, %v2544
    %v2546 = vpop.f32.mrf.mxu0
    %v2547 = vpop.f32.mrf.mxu0
    %2548 = vdwg.mxu0
    %2549 = vmatprep.subr.bf16.mxu0 %v1603
    %2550 = vmatpush1.bf16.msra.mxu0 %v1602
    %2551 = vmatprep.subr.bf16.mxu0 %v1595
    %2552 = vmatpush1.bf16.msra.mxu0 %v1594
    %2553 = vmatprep.subr.bf16.mxu0 %v1587
    %2554 = vmatpush1.bf16.msra.mxu0 %v1586
    %2555 = vmatprep.subr.bf16.mxu0 %v1579
    %2556 = vmatpush1.bf16.msra.mxu0 %v1578
    %2557 = vmatprep.subr.bf16.mxu0 %v1571
    %2558 = vmatpush1.bf16.msra.mxu0 %v1570
    %2559 = vmatprep.subr.bf16.mxu0 %v1563
    %2560 = vmatpush1.bf16.msra.mxu0 %v1562
    %2561 = vmatprep.subr.bf16.mxu0 %v1555
    %2562 = vmatpush1.bf16.msra.mxu0 %v1554
    %2563 = vmatprep.subr.bf16.mxu0 %v1547
    %2564 = vmatpush1.bf16.msra.mxu0 %v1546
    %2565 = vmatprep.subr.bf16.mxu0 %v1667
    %2566 = vmatpush2.bf16.msra.mxu0 %v1666
    %2567 = vmatprep.subr.bf16.mxu0 %v1659
    %2568 = vmatpush2.bf16.msra.mxu0 %v1658
    %2569 = vmatprep.subr.bf16.mxu0 %v1651
    %2570 = vmatpush2.bf16.msra.mxu0 %v1650
    %2571 = vmatprep.subr.bf16.mxu0 %v1643
    %2572 = vmatpush2.bf16.msra.mxu0 %v1642
    %2573 = vmatprep.subr.bf16.mxu0 %v1635
    %2574 = vmatpush2.bf16.msra.mxu0 %v1634
    %2575 = vmatprep.subr.bf16.mxu0 %v1627
    %2576 = vmatpush2.bf16.msra.mxu0 %v1626
    %2577 = vmatprep.subr.bf16.mxu0 %v1619
    %2578 = vmatpush2.bf16.msra.mxu0 %v1618
    %2579 = vmatprep.subr.bf16.mxu0 %v1611
    %2580 = vmatpush2.bf16.msra.mxu0 %v1610
    %2581 = vmatprep.mubr.bf16.mxu0 %v213
    %2582 = vmatmul.mubr.bf16.gmra.mxu0 %v206
    %v2583 = vpop.f32.mrf.mxu0
    %v2584 = vadd.f32 %v567, %v2583
    %v2585 = vpop.f32.mrf.mxu0
    %v2586 = vadd.f32 %v571, %v2585
    %v2587 = vpop.f32.mrf.mxu0
    %v2588 = vpop.f32.mrf.mxu0
    %2589 = vdwg.mxu0
    %2590 = vmatprep.subr.bf16.mxu0 %v1731
    %2591 = vmatpush1.bf16.msra.mxu0 %v1730
    %2592 = vmatprep.subr.bf16.mxu0 %v1723
    %2593 = vmatpush1.bf16.msra.mxu0 %v1722
    %2594 = vmatprep.subr.bf16.mxu0 %v1715
    %2595 = vmatpush1.bf16.msra.mxu0 %v1714
    %2596 = vmatprep.subr.bf16.mxu0 %v1707
    %2597 = vmatpush1.bf16.msra.mxu0 %v1706
    %2598 = vmatprep.subr.bf16.mxu0 %v1699
    %2599 = vmatpush1.bf16.msra.mxu0 %v1698
    %2600 = vmatprep.subr.bf16.mxu0 %v1691
    %2601 = vmatpush1.bf16.msra.mxu0 %v1690
    %2602 = vmatprep.subr.bf16.mxu0 %v1683
    %2603 = vmatpush1.bf16.msra.mxu0 %v1682
    %2604 = vmatprep.subr.bf16.mxu0 %v1675
    %2605 = vmatpush1.bf16.msra.mxu0 %v1674
    %2606 = vmatprep.subr.bf16.mxu0 %v1795
    %2607 = vmatpush2.bf16.msra.mxu0 %v1794
    %2608 = vmatprep.subr.bf16.mxu0 %v1787
    %2609 = vmatpush2.bf16.msra.mxu0 %v1786
    %2610 = vmatprep.subr.bf16.mxu0 %v1779
    %2611 = vmatpush2.bf16.msra.mxu0 %v1778
    %2612 = vmatprep.subr.bf16.mxu0 %v1771
    %2613 = vmatpush2.bf16.msra.mxu0 %v1770
    %2614 = vmatprep.subr.bf16.mxu0 %v1763
    %2615 = vmatpush2.bf16.msra.mxu0 %v1762
    %2616 = vmatprep.subr.bf16.mxu0 %v1755
    %2617 = vmatpush2.bf16.msra.mxu0 %v1754
    %2618 = vmatprep.subr.bf16.mxu0 %v1747
    %2619 = vmatpush2.bf16.msra.mxu0 %v1746
    %2620 = vmatprep.subr.bf16.mxu0 %v1739
    %2621 = vmatpush2.bf16.msra.mxu0 %v1738
    %2622 = vmatprep.mubr.bf16.mxu0 %v163
    %2623 = vmatmul.mubr.bf16.gmra.mxu0 %v214
    %v2624 = vpop.f32.mrf.mxu0
    %v2625 = vadd.f32 %v2584, %v2624
    %v2626 = vpop.f32.mrf.mxu0
    %v2627 = vadd.f32 %v2586, %v2626
    %v2628 = vpop.f32.mrf.mxu0
    %v2629 = vpop.f32.mrf.mxu0
    %2630 = vdwg.mxu0
    %2631 = vmatprep.subr.bf16.mxu0 %v1859
    %2632 = vmatpush1.bf16.msra.mxu0 %v1858
    %2633 = vmatprep.subr.bf16.mxu0 %v1851
    %2634 = vmatpush1.bf16.msra.mxu0 %v1850
    %2635 = vmatprep.subr.bf16.mxu0 %v1843
    %2636 = vmatpush1.bf16.msra.mxu0 %v1842
    %2637 = vmatprep.subr.bf16.mxu0 %v1835
    %2638 = vmatpush1.bf16.msra.mxu0 %v1834
    %2639 = vmatprep.subr.bf16.mxu0 %v1827
    %2640 = vmatpush1.bf16.msra.mxu0 %v1826
    %2641 = vmatprep.subr.bf16.mxu0 %v1819
    %2642 = vmatpush1.bf16.msra.mxu0 %v1818
    %2643 = vmatprep.subr.bf16.mxu0 %v1811
    %2644 = vmatpush1.bf16.msra.mxu0 %v1810
    %2645 = vmatprep.subr.bf16.mxu0 %v1803
    %2646 = vmatpush1.bf16.msra.mxu0 %v1802
    %2647 = vmatprep.subr.bf16.mxu0 0
    %2648 = vmatpush2.bf16.msra.mxu0 0
    %2649 = vmatprep.subr.bf16.mxu0 0
    %2650 = vmatpush2.bf16.msra.mxu0 0
    %2651 = vmatprep.subr.bf16.mxu0 0
    %2652 = vmatpush2.bf16.msra.mxu0 0
    %2653 = vmatprep.subr.bf16.mxu0 0
    %2654 = vmatpush2.bf16.msra.mxu0 0
    %2655 = vmatprep.subr.bf16.mxu0 0
    %2656 = vmatpush2.bf16.msra.mxu0 0
    %2657 = vmatprep.subr.bf16.mxu0 0
    %2658 = vmatpush2.bf16.msra.mxu0 0
    %2659 = vmatprep.subr.bf16.mxu0 0
    %2660 = vmatpush2.bf16.msra.mxu0 0
    %2661 = vmatprep.subr.bf16.mxu0 0
    %2662 = vmatpush2.bf16.msra.mxu0 0
    %2663 = vmatprep.mubr.bf16.mxu0 0
    %2664 = vmatmul.mubr.bf16.gmra.mxu0 %v164
    %v2665 = vpop.f32.mrf.mxu0
    %v2666 = vadd.f32 %v2625, %v2665
    %v2667 = vpop.f32.mrf.mxu0
    %v2668 = vadd.f32 %v2627, %v2667
    %v2669 = vpop.f32.mrf.mxu0
    %v2670 = vpop.f32.mrf.mxu0
    %2671 = vdwg.mxu0
    %v2672 = vld [vmem:[#allocation10] sm:$0xff]
    %v2673 = vld [vmem:[#allocation10 + $0x8] sm:$0xff]
    %v2674 = vld [vmem:[#allocation10 + $0x10] sm:$0xff]
    %v2675 = vld [vmem:[#allocation10 + $0x18] sm:$0xff]
    %v2676 = vld [vmem:[#allocation10 + $0x20] sm:$0xff]
    %v2677 = vld [vmem:[#allocation10 + $0x28] sm:$0xff]
    %v2678 = vld [vmem:[#allocation10 + $0x30] sm:$0xff]
    %v2679 = vld [vmem:[#allocation10 + $0x38] sm:$0xff]
    %v2680 = vld [vmem:[#allocation10 + $0x40] sm:$0xff]
    %v2681 = vld [vmem:[#allocation10 + $0x48] sm:$0xff]
    %v2682 = vld [vmem:[#allocation10 + $0x50] sm:$0xff]
    %v2683 = vld [vmem:[#allocation10 + $0x58] sm:$0xff]
    %v2684 = vld [vmem:[#allocation10 + $0x60] sm:$0xff]
    %v2685 = vld [vmem:[#allocation10 + $0x68] sm:$0xff]
    %v2686 = vld [vmem:[#allocation10 + $0x70] sm:$0xff]
    %v2687 = vld [vmem:[#allocation10 + $0x78] sm:$0xff]
    %v2688 = vld [vmem:[#allocation10 + $0x80] sm:$0xff]
    %v2689 = vld [vmem:[#allocation10 + $0x88] sm:$0xff]
    %v2690 = vld [vmem:[#allocation10 + $0x90] sm:$0xff]
    %v2691 = vld [vmem:[#allocation10 + $0x98] sm:$0xff]
    %v2692 = vld [vmem:[#allocation10 + $0xa0] sm:$0xff]
    %v2693 = vld [vmem:[#allocation10 + $0xa8] sm:$0xff]
    %v2694 = vld [vmem:[#allocation10 + $0xb0] sm:$0xff]
    %v2695 = vld [vmem:[#allocation10 + $0xb8] sm:$0xff]
    %v2696 = vld [vmem:[#allocation10 + $0xc0] sm:$0xff]
    %v2697 = vld [vmem:[#allocation10 + $0xc8] sm:$0xff]
    %v2698 = vld [vmem:[#allocation10 + $0xd0] sm:$0xff]
    %v2699 = vld [vmem:[#allocation10 + $0xd8] sm:$0xff]
    %v2700 = vld [vmem:[#allocation10 + $0xe0] sm:$0xff]
    %v2701 = vld [vmem:[#allocation10 + $0xe8] sm:$0xff]
    %v2702 = vld [vmem:[#allocation10 + $0xf0] sm:$0xff]
    %v2703 = vld [vmem:[#allocation10 + $0xf8] sm:$0xff]
    %v2704 = vld [vmem:[#allocation10 + $0x100] sm:$0xff]
    %v2705 = vld [vmem:[#allocation10 + $0x108] sm:$0xff]
    %v2706 = vld [vmem:[#allocation10 + $0x110] sm:$0xff]
    %v2707 = vld [vmem:[#allocation10 + $0x118] sm:$0xff]
    %v2708 = vld [vmem:[#allocation10 + $0x120] sm:$0xff]
    %v2709 = vld [vmem:[#allocation10 + $0x128] sm:$0xff]
    %v2710 = vld [vmem:[#allocation10 + $0x130] sm:$0xff]
    %v2711 = vld [vmem:[#allocation10 + $0x138] sm:$0xff]
    %v2712 = vld [vmem:[#allocation10 + $0x140] sm:$0xff]
    %v2713 = vld [vmem:[#allocation10 + $0x148] sm:$0xff]
    %v2714 = vld [vmem:[#allocation10 + $0x150] sm:$0xff]
    %v2715 = vld [vmem:[#allocation10 + $0x158] sm:$0xff]
    %v2716 = vld [vmem:[#allocation10 + $0x160] sm:$0xff]
    %v2717 = vld [vmem:[#allocation10 + $0x168] sm:$0xff]
    %v2718 = vld [vmem:[#allocation10 + $0x170] sm:$0xff]
    %v2719 = vld [vmem:[#allocation10 + $0x178] sm:$0xff]
    %v2720 = vld [vmem:[#allocation10 + $0x180] sm:$0xff]
    %v2721 = vld [vmem:[#allocation10 + $0x188] sm:$0xff]
    %v2722 = vld [vmem:[#allocation10 + $0x190] sm:$0xff]
    %v2723 = vld [vmem:[#allocation10 + $0x198] sm:$0xff]
    %v2724 = vld [vmem:[#allocation10 + $0x1a0] sm:$0xff]
    %v2725 = vld [vmem:[#allocation10 + $0x1a8] sm:$0xff]
    %v2726 = vld [vmem:[#allocation10 + $0x1b0] sm:$0xff]
    %v2727 = vld [vmem:[#allocation10 + $0x1b8] sm:$0xff]
    %v2728 = vld [vmem:[#allocation10 + $0x1c0] sm:$0xff]
    %v2729 = vld [vmem:[#allocation10 + $0x1c8] sm:$0xff]
    %v2730 = vld [vmem:[#allocation10 + $0x1d0] sm:$0xff]
    %v2731 = vld [vmem:[#allocation10 + $0x1d8] sm:$0xff]
    %v2732 = vld [vmem:[#allocation10 + $0x1e0] sm:$0xff]
    %v2733 = vld [vmem:[#allocation10 + $0x1e8] sm:$0xff]
    %v2734 = vld [vmem:[#allocation10 + $0x1f0] sm:$0xff]
    %v2735 = vld [vmem:[#allocation10 + $0x1f8] sm:$0xff]
    %v2736 = vld [vmem:[#allocation10 + $0x200] sm:$0xff]
    %v2737 = vld [vmem:[#allocation10 + $0x208] sm:$0xff]
    %v2738 = vld [vmem:[#allocation10 + $0x210] sm:$0xff]
    %v2739 = vld [vmem:[#allocation10 + $0x218] sm:$0xff]
    %v2740 = vld [vmem:[#allocation10 + $0x220] sm:$0xff]
    %v2741 = vld [vmem:[#allocation10 + $0x228] sm:$0xff]
    %v2742 = vld [vmem:[#allocation10 + $0x230] sm:$0xff]
    %v2743 = vld [vmem:[#allocation10 + $0x238] sm:$0xff]
    %v2744 = vld [vmem:[#allocation10 + $0x240] sm:$0xff]
    %v2745 = vld [vmem:[#allocation10 + $0x248] sm:$0xff]
    %v2746 = vld [vmem:[#allocation10 + $0x250] sm:$0xff]
    %v2747 = vld [vmem:[#allocation10 + $0x258] sm:$0xff]
    %v2748 = vld [vmem:[#allocation10 + $0x260] sm:$0xff]
    %v2749 = vld [vmem:[#allocation10 + $0x268] sm:$0xff]
    %v2750 = vld [vmem:[#allocation10 + $0x270] sm:$0xff]
    %v2751 = vld [vmem:[#allocation10 + $0x278] sm:$0xff]
    %v2752 = vld [vmem:[#allocation10 + $0x280] sm:$0xff]
    %v2753 = vld [vmem:[#allocation10 + $0x288] sm:$0xff]
    %v2754 = vld [vmem:[#allocation10 + $0x290] sm:$0xff]
    %v2755 = vld [vmem:[#allocation10 + $0x298] sm:$0xff]
    %v2756 = vld [vmem:[#allocation10 + $0x2a0] sm:$0xff]
    %v2757 = vld [vmem:[#allocation10 + $0x2a8] sm:$0xff]
    %v2758 = vld [vmem:[#allocation10 + $0x2b0] sm:$0xff]
    %v2759 = vld [vmem:[#allocation10 + $0x2b8] sm:$0xff]
    %v2760 = vld [vmem:[#allocation10 + $0x2c0] sm:$0xff]
    %v2761 = vld [vmem:[#allocation10 + $0x2c8] sm:$0xff]
    %v2762 = vld [vmem:[#allocation10 + $0x2d0] sm:$0xff]
    %v2763 = vld [vmem:[#allocation10 + $0x2d8] sm:$0xff]
    %v2764 = vld [vmem:[#allocation10 + $0x2e0] sm:$0xff]
    %v2765 = vld [vmem:[#allocation10 + $0x2e8] sm:$0xff]
    %v2766 = vld [vmem:[#allocation10 + $0x2f0] sm:$0xff]
    %v2767 = vld [vmem:[#allocation10 + $0x2f8] sm:$0xff]
    %v2768 = vld [vmem:[#allocation10 + $0x300] sm:$0xff]
    %v2769 = vld [vmem:[#allocation10 + $0x308] sm:$0xff]
    %v2770 = vld [vmem:[#allocation10 + $0x310] sm:$0xff]
    %v2771 = vld [vmem:[#allocation10 + $0x318] sm:$0xff]
    %v2772 = vld [vmem:[#allocation10 + $0x320] sm:$0xff]
    %v2773 = vld [vmem:[#allocation10 + $0x328] sm:$0xff]
    %v2774 = vld [vmem:[#allocation10 + $0x330] sm:$0xff]
    %v2775 = vld [vmem:[#allocation10 + $0x338] sm:$0xff]
    %v2776 = vld [vmem:[#allocation10 + $0x340] sm:$0xff]
    %v2777 = vld [vmem:[#allocation10 + $0x348] sm:$0xff]
    %v2778 = vld [vmem:[#allocation10 + $0x350] sm:$0xff]
    %v2779 = vld [vmem:[#allocation10 + $0x358] sm:$0xff]
    %v2780 = vld [vmem:[#allocation10 + $0x360] sm:$0xff]
    %v2781 = vld [vmem:[#allocation10 + $0x368] sm:$0xff]
    %v2782 = vld [vmem:[#allocation10 + $0x370] sm:$0xff]
    %v2783 = vld [vmem:[#allocation10 + $0x378] sm:$0xff]
    %v2784 = vld [vmem:[#allocation10 + $0x380] sm:$0xff]
    %v2785 = vld [vmem:[#allocation10 + $0x388] sm:$0xff]
    %v2786 = vld [vmem:[#allocation10 + $0x390] sm:$0xff]
    %v2787 = vld [vmem:[#allocation10 + $0x398] sm:$0xff]
    %v2788 = vld [vmem:[#allocation10 + $0x3a0] sm:$0xff]
    %v2789 = vld [vmem:[#allocation10 + $0x3a8] sm:$0xff]
    %v2790 = vld [vmem:[#allocation10 + $0x3b0] sm:$0xff]
    %v2791 = vld [vmem:[#allocation10 + $0x3b8] sm:$0xff]
    %v2792 = vld [vmem:[#allocation10 + $0x3c0] sm:$0xff]
    %v2793 = vld [vmem:[#allocation10 + $0x3c8] sm:$0xff]
    %v2794 = vld [vmem:[#allocation10 + $0x3d0] sm:$0xff]
    %v2795 = vld [vmem:[#allocation10 + $0x3d8] sm:$0xff]
    %v2796 = vld [vmem:[#allocation10 + $0x3e0] sm:$0xff]
    %v2797 = vld [vmem:[#allocation10 + $0x3e8] sm:$0xff]
    %v2798 = vld [vmem:[#allocation10 + $0x3f0] sm:$0xff]
    %v2799 = vld [vmem:[#allocation10 + $0x3f8] sm:$0xff]
    %v2800 = vld [vmem:[#allocation10 + $0x400] sm:$0xff]
    %v2801 = vld [vmem:[#allocation10 + $0x408] sm:$0xff]
    %v2802 = vld [vmem:[#allocation10 + $0x410] sm:$0xff]
    %v2803 = vld [vmem:[#allocation10 + $0x418] sm:$0xff]
    %v2804 = vld [vmem:[#allocation10 + $0x420] sm:$0xff]
    %v2805 = vld [vmem:[#allocation10 + $0x428] sm:$0xff]
    %v2806 = vld [vmem:[#allocation10 + $0x430] sm:$0xff]
    %v2807 = vld [vmem:[#allocation10 + $0x438] sm:$0xff]
    %v2808 = vld [vmem:[#allocation10 + $0x440] sm:$0xff]
    %v2809 = vld [vmem:[#allocation10 + $0x448] sm:$0xff]
    %v2810 = vld [vmem:[#allocation10 + $0x450] sm:$0xff]
    %v2811 = vld [vmem:[#allocation10 + $0x458] sm:$0xff]
    %v2812 = vld [vmem:[#allocation10 + $0x460] sm:$0xff]
    %v2813 = vld [vmem:[#allocation10 + $0x468] sm:$0xff]
    %v2814 = vld [vmem:[#allocation10 + $0x470] sm:$0xff]
    %v2815 = vld [vmem:[#allocation10 + $0x478] sm:$0xff]
    %v2816 = vld [vmem:[#allocation10 + $0x480] sm:$0xff]
    %v2817 = vld [vmem:[#allocation10 + $0x488] sm:$0xff]
    %v2818 = vld [vmem:[#allocation10 + $0x490] sm:$0xff]
    %v2819 = vld [vmem:[#allocation10 + $0x498] sm:$0xff]
    %v2820 = vld [vmem:[#allocation10 + $0x4a0] sm:$0xff]
    %v2821 = vld [vmem:[#allocation10 + $0x4a8] sm:$0xff]
    %v2822 = vld [vmem:[#allocation10 + $0x4b0] sm:$0xff]
    %v2823 = vld [vmem:[#allocation10 + $0x4b8] sm:$0xff]
    %v2824 = vld [vmem:[#allocation10 + $0x4c0] sm:$0xff]
    %v2825 = vld [vmem:[#allocation10 + $0x4c8] sm:$0xff]
    %v2826 = vld [vmem:[#allocation10 + $0x4d0] sm:$0xff]
    %v2827 = vld [vmem:[#allocation10 + $0x4d8] sm:$0xff]
    %v2828 = vld [vmem:[#allocation10 + $0x4e0] sm:$0xff]
    %v2829 = vld [vmem:[#allocation10 + $0x4e8] sm:$0xff]
    %v2830 = vld [vmem:[#allocation10 + $0x4f0] sm:$0xff]
    %v2831 = vld [vmem:[#allocation10 + $0x4f8] sm:$0xff]
    %v2832 = vld [vmem:[#allocation10 + $0x500] sm:$0xff]
    %v2833 = vld [vmem:[#allocation10 + $0x508] sm:$0xff]
    %v2834 = vld [vmem:[#allocation10 + $0x510] sm:$0xff]
    %v2835 = vld [vmem:[#allocation10 + $0x518] sm:$0xff]
    %v2836 = vld [vmem:[#allocation10 + $0x520] sm:$0xff]
    %v2837 = vld [vmem:[#allocation10 + $0x528] sm:$0xff]
    %v2838 = vld [vmem:[#allocation10 + $0x530] sm:$0xff]
    %v2839 = vld [vmem:[#allocation10 + $0x538] sm:$0xff]
    %v2840 = vld [vmem:[#allocation10 + $0x540] sm:$0xff]
    %v2841 = vld [vmem:[#allocation10 + $0x548] sm:$0xff]
    %v2842 = vld [vmem:[#allocation10 + $0x550] sm:$0xff]
    %v2843 = vld [vmem:[#allocation10 + $0x558] sm:$0xff]
    %v2844 = vld [vmem:[#allocation10 + $0x560] sm:$0xff]
    %v2845 = vld [vmem:[#allocation10 + $0x568] sm:$0xff]
    %v2846 = vld [vmem:[#allocation10 + $0x570] sm:$0xff]
    %v2847 = vld [vmem:[#allocation10 + $0x578] sm:$0xff]
    %v2848 = vld [vmem:[#allocation10 + $0x580] sm:$0xff]
    %v2849 = vld [vmem:[#allocation10 + $0x588] sm:$0xff]
    %v2850 = vld [vmem:[#allocation10 + $0x590] sm:$0xff]
    %v2851 = vld [vmem:[#allocation10 + $0x598] sm:$0xff]
    %v2852 = vld [vmem:[#allocation10 + $0x5a0] sm:$0xff]
    %v2853 = vld [vmem:[#allocation10 + $0x5a8] sm:$0xff]
    %v2854 = vld [vmem:[#allocation10 + $0x5b0] sm:$0xff]
    %v2855 = vld [vmem:[#allocation10 + $0x5b8] sm:$0xff]
    %v2856 = vld [vmem:[#allocation10 + $0x5c0] sm:$0xff]
    %v2857 = vld [vmem:[#allocation10 + $0x5c8] sm:$0xff]
    %v2858 = vld [vmem:[#allocation10 + $0x5d0] sm:$0xff]
    %v2859 = vld [vmem:[#allocation10 + $0x5d8] sm:$0xff]
    %v2860 = vld [vmem:[#allocation10 + $0x5e0] sm:$0xff]
    %v2861 = vld [vmem:[#allocation10 + $0x5e8] sm:$0xff]
    %v2862 = vld [vmem:[#allocation10 + $0x5f0] sm:$0xff]
    %v2863 = vld [vmem:[#allocation10 + $0x5f8] sm:$0xff]
    %v2864 = vld [vmem:[#allocation10 + $0x600] sm:$0xff]
    %v2865 = vld [vmem:[#allocation10 + $0x608] sm:$0xff]
    %v2866 = vld [vmem:[#allocation10 + $0x610] sm:$0xff]
    %v2867 = vld [vmem:[#allocation10 + $0x618] sm:$0xff]
    %v2868 = vld [vmem:[#allocation10 + $0x620] sm:$0xff]
    %v2869 = vld [vmem:[#allocation10 + $0x628] sm:$0xff]
    %v2870 = vld [vmem:[#allocation10 + $0x630] sm:$0xff]
    %v2871 = vld [vmem:[#allocation10 + $0x638] sm:$0xff]
    %v2872 = vld [vmem:[#allocation10 + $0x640] sm:$0xff]
    %v2873 = vld [vmem:[#allocation10 + $0x648] sm:$0xff]
    %v2874 = vld [vmem:[#allocation10 + $0x650] sm:$0xff]
    %v2875 = vld [vmem:[#allocation10 + $0x658] sm:$0xff]
    %v2876 = vld [vmem:[#allocation10 + $0x660] sm:$0xff]
    %v2877 = vld [vmem:[#allocation10 + $0x668] sm:$0xff]
    %v2878 = vld [vmem:[#allocation10 + $0x670] sm:$0xff]
    %v2879 = vld [vmem:[#allocation10 + $0x678] sm:$0xff]
    %v2880 = vld [vmem:[#allocation10 + $0x680] sm:$0xff]
    %v2881 = vld [vmem:[#allocation10 + $0x688] sm:$0xff]
    %v2882 = vld [vmem:[#allocation10 + $0x690] sm:$0xff]
    %v2883 = vld [vmem:[#allocation10 + $0x698] sm:$0xff]
    %v2884 = vld [vmem:[#allocation10 + $0x6a0] sm:$0xff]
    %v2885 = vld [vmem:[#allocation10 + $0x6a8] sm:$0xff]
    %v2886 = vld [vmem:[#allocation10 + $0x6b0] sm:$0xff]
    %v2887 = vld [vmem:[#allocation10 + $0x6b8] sm:$0xff]
    %v2888 = vld [vmem:[#allocation10 + $0x6c0] sm:$0xff]
    %v2889 = vld [vmem:[#allocation10 + $0x6c8] sm:$0xff]
    %v2890 = vld [vmem:[#allocation10 + $0x6d0] sm:$0xff]
    %v2891 = vld [vmem:[#allocation10 + $0x6d8] sm:$0xff]
    %v2892 = vld [vmem:[#allocation10 + $0x6e0] sm:$0xff]
    %v2893 = vld [vmem:[#allocation10 + $0x6e8] sm:$0xff]
    %v2894 = vld [vmem:[#allocation10 + $0x6f0] sm:$0xff]
    %v2895 = vld [vmem:[#allocation10 + $0x6f8] sm:$0xff]
    %v2896 = vld [vmem:[#allocation10 + $0x700] sm:$0xff]
    %v2897 = vld [vmem:[#allocation10 + $0x708] sm:$0xff]
    %v2898 = vld [vmem:[#allocation10 + $0x710] sm:$0xff]
    %v2899 = vld [vmem:[#allocation10 + $0x718] sm:$0xff]
    %v2900 = vld [vmem:[#allocation10 + $0x720] sm:$0xff]
    %v2901 = vld [vmem:[#allocation10 + $0x728] sm:$0xff]
    %v2902 = vld [vmem:[#allocation10 + $0x730] sm:$0xff]
    %v2903 = vld [vmem:[#allocation10 + $0x738] sm:$0xff]
    %v2904 = vld [vmem:[#allocation10 + $0x740] sm:$0xff]
    %v2905 = vld [vmem:[#allocation10 + $0x748] sm:$0xff]
    %v2906 = vld [vmem:[#allocation10 + $0x750] sm:$0xff]
    %v2907 = vld [vmem:[#allocation10 + $0x758] sm:$0xff]
    %v2908 = vld [vmem:[#allocation10 + $0x760] sm:$0xff]
    %v2909 = vld [vmem:[#allocation10 + $0x768] sm:$0xff]
    %v2910 = vld [vmem:[#allocation10 + $0x770] sm:$0xff]
    %v2911 = vld [vmem:[#allocation10 + $0x778] sm:$0xff]
    %v2912 = vld [vmem:[#allocation10 + $0x780] sm:$0xff]
    %v2913 = vld [vmem:[#allocation10 + $0x788] sm:$0xff]
    %v2914 = vld [vmem:[#allocation10 + $0x790] sm:$0xff]
    %v2915 = vld [vmem:[#allocation10 + $0x798] sm:$0xff]
    %v2916 = vld [vmem:[#allocation10 + $0x7a0] sm:$0xff]
    %v2917 = vld [vmem:[#allocation10 + $0x7a8] sm:$0xff]
    %v2918 = vld [vmem:[#allocation10 + $0x7b0] sm:$0xff]
    %v2919 = vld [vmem:[#allocation10 + $0x7b8] sm:$0xff]
    %v2920 = vld [vmem:[#allocation10 + $0x7c0] sm:$0xff]
    %v2921 = vld [vmem:[#allocation10 + $0x7c8] sm:$0xff]
    %v2922 = vld [vmem:[#allocation10 + $0x7d0] sm:$0xff]
    %v2923 = vld [vmem:[#allocation10 + $0x7d8] sm:$0xff]
    %v2924 = vld [vmem:[#allocation10 + $0x7e0] sm:$0xff]
    %v2925 = vld [vmem:[#allocation10 + $0x7e8] sm:$0xff]
    %v2926 = vld [vmem:[#allocation10 + $0x7f0] sm:$0xff]
    %v2927 = vld [vmem:[#allocation10 + $0x7f8] sm:$0xff]
    %s2928 = scalar_lea.vmem [#allocation13], 8
    %v2929 = vld [vmem:[%s2928] sm:$0xff]
    %v2931 = vlaneseq
    %v2932 = vshrl.u32 %v2931, 7
    %v2933 = vsub.s32 0, %v2932
    %v2934 = vrot.slane %v2929, %v2933
    %v2935 = vlaneseq
    %v2936 = vshrl.u32 %v2935, 7
    %v2937 = vsub.s32 1, %v2936
    %v2938 = vrot.slane %v2929, %v2937
    %v2939 = vlaneseq
    %v2940 = vshrl.u32 %v2939, 7
    %v2941 = vsub.s32 2, %v2940
    %v2942 = vrot.slane %v2929, %v2941
    %v2943 = vlaneseq
    %v2944 = vshrl.u32 %v2943, 7
    %v2945 = vsub.s32 3, %v2944
    %v2946 = vrot.slane %v2929, %v2945
    %v2947 = vlaneseq
    %v2948 = vshrl.u32 %v2947, 7
    %v2949 = vsub.s32 4, %v2948
    %v2950 = vrot.slane %v2929, %v2949
    %v2951 = vlaneseq
    %v2952 = vshrl.u32 %v2951, 7
    %v2953 = vsub.s32 5, %v2952
    %v2954 = vrot.slane %v2929, %v2953
    %v2955 = vlaneseq
    %v2956 = vshrl.u32 %v2955, 7
    %v2957 = vsub.s32 6, %v2956
    %v2958 = vrot.slane %v2929, %v2957
    %v2959 = vlaneseq
    %v2960 = vshrl.u32 %v2959, 7
    %v2961 = vsub.s32 7, %v2960
    %v2962 = vrot.slane %v2929, %v2961
    %v3227 = vunpack.c.l.b16 %v2672
    %v3228 = vunpack.c.h.b16 %v2672
    %v3229 = vunpack.c.l.b16 %v2673
    %v3230 = vunpack.c.h.b16 %v2673
    %v3231 = vunpack.c.l.b16 %v2674
    %v3232 = vunpack.c.h.b16 %v2674
    %v3233 = vunpack.c.l.b16 %v2675
    %v3234 = vunpack.c.h.b16 %v2675
    %v3235 = vunpack.c.l.b16 %v2676
    %v3236 = vunpack.c.h.b16 %v2676
    %v3237 = vunpack.c.l.b16 %v2677
    %v3238 = vunpack.c.h.b16 %v2677
    %v3239 = vunpack.c.l.b16 %v2678
    %v3240 = vunpack.c.h.b16 %v2678
    %v3241 = vunpack.c.l.b16 %v2679
    %v3242 = vunpack.c.h.b16 %v2679
    %v3243 = vunpack.c.l.b16 %v2680
    %v3244 = vunpack.c.h.b16 %v2680
    %v3245 = vunpack.c.l.b16 %v2681
    %v3246 = vunpack.c.h.b16 %v2681
    %v3247 = vunpack.c.l.b16 %v2682
    %v3248 = vunpack.c.h.b16 %v2682
    %v3249 = vunpack.c.l.b16 %v2683
    %v3250 = vunpack.c.h.b16 %v2683
    %v3251 = vunpack.c.l.b16 %v2684
    %v3252 = vunpack.c.h.b16 %v2684
    %v3253 = vunpack.c.l.b16 %v2685
    %v3254 = vunpack.c.h.b16 %v2685
    %v3255 = vunpack.c.l.b16 %v2686
    %v3256 = vunpack.c.h.b16 %v2686
    %v3257 = vunpack.c.l.b16 %v2687
    %v3258 = vunpack.c.h.b16 %v2687
    %v3259 = vunpack.c.l.b16 %v2688
    %v3260 = vunpack.c.h.b16 %v2688
    %v3261 = vunpack.c.l.b16 %v2689
    %v3262 = vunpack.c.h.b16 %v2689
    %v3263 = vunpack.c.l.b16 %v2690
    %v3264 = vunpack.c.h.b16 %v2690
    %v3265 = vunpack.c.l.b16 %v2691
    %v3266 = vunpack.c.h.b16 %v2691
    %v3267 = vunpack.c.l.b16 %v2692
    %v3268 = vunpack.c.h.b16 %v2692
    %v3269 = vunpack.c.l.b16 %v2693
    %v3270 = vunpack.c.h.b16 %v2693
    %v3271 = vunpack.c.l.b16 %v2694
    %v3272 = vunpack.c.h.b16 %v2694
    %v3273 = vunpack.c.l.b16 %v2695
    %v3274 = vunpack.c.h.b16 %v2695
    %v3275 = vunpack.c.l.b16 %v2696
    %v3276 = vunpack.c.h.b16 %v2696
    %v3277 = vunpack.c.l.b16 %v2697
    %v3278 = vunpack.c.h.b16 %v2697
    %v3279 = vunpack.c.l.b16 %v2698
    %v3280 = vunpack.c.h.b16 %v2698
    %v3281 = vunpack.c.l.b16 %v2699
    %v3282 = vunpack.c.h.b16 %v2699
    %v3283 = vunpack.c.l.b16 %v2700
    %v3284 = vunpack.c.h.b16 %v2700
    %v3285 = vunpack.c.l.b16 %v2701
    %v3286 = vunpack.c.h.b16 %v2701
    %v3287 = vunpack.c.l.b16 %v2702
    %v3288 = vunpack.c.h.b16 %v2702
    %v3289 = vunpack.c.l.b16 %v2703
    %v3290 = vunpack.c.h.b16 %v2703
    %v3291 = vunpack.c.l.b16 %v2704
    %v3292 = vunpack.c.h.b16 %v2704
    %v3293 = vunpack.c.l.b16 %v2705
    %v3294 = vunpack.c.h.b16 %v2705
    %v3295 = vunpack.c.l.b16 %v2706
    %v3296 = vunpack.c.h.b16 %v2706
    %v3297 = vunpack.c.l.b16 %v2707
    %v3298 = vunpack.c.h.b16 %v2707
    %v3299 = vunpack.c.l.b16 %v2708
    %v3300 = vunpack.c.h.b16 %v2708
    %v3301 = vunpack.c.l.b16 %v2709
    %v3302 = vunpack.c.h.b16 %v2709
    %v3303 = vunpack.c.l.b16 %v2710
    %v3304 = vunpack.c.h.b16 %v2710
    %v3305 = vunpack.c.l.b16 %v2711
    %v3306 = vunpack.c.h.b16 %v2711
    %v3307 = vunpack.c.l.b16 %v2712
    %v3308 = vunpack.c.h.b16 %v2712
    %v3309 = vunpack.c.l.b16 %v2713
    %v3310 = vunpack.c.h.b16 %v2713
    %v3311 = vunpack.c.l.b16 %v2714
    %v3312 = vunpack.c.h.b16 %v2714
    %v3313 = vunpack.c.l.b16 %v2715
    %v3314 = vunpack.c.h.b16 %v2715
    %v3315 = vunpack.c.l.b16 %v2716
    %v3316 = vunpack.c.h.b16 %v2716
    %v3317 = vunpack.c.l.b16 %v2717
    %v3318 = vunpack.c.h.b16 %v2717
    %v3319 = vunpack.c.l.b16 %v2718
    %v3320 = vunpack.c.h.b16 %v2718
    %v3321 = vunpack.c.l.b16 %v2719
    %v3322 = vunpack.c.h.b16 %v2719
    %v3323 = vunpack.c.l.b16 %v2720
    %v3324 = vunpack.c.h.b16 %v2720
    %v3325 = vunpack.c.l.b16 %v2721
    %v3326 = vunpack.c.h.b16 %v2721
    %v3327 = vunpack.c.l.b16 %v2722
    %v3328 = vunpack.c.h.b16 %v2722
    %v3329 = vunpack.c.l.b16 %v2723
    %v3330 = vunpack.c.h.b16 %v2723
    %v3331 = vunpack.c.l.b16 %v2724
    %v3332 = vunpack.c.h.b16 %v2724
    %v3333 = vunpack.c.l.b16 %v2725
    %v3334 = vunpack.c.h.b16 %v2725
    %v3335 = vunpack.c.l.b16 %v2726
    %v3336 = vunpack.c.h.b16 %v2726
    %v3337 = vunpack.c.l.b16 %v2727
    %v3338 = vunpack.c.h.b16 %v2727
    %v3339 = vunpack.c.l.b16 %v2728
    %v3340 = vunpack.c.h.b16 %v2728
    %v3341 = vunpack.c.l.b16 %v2729
    %v3342 = vunpack.c.h.b16 %v2729
    %v3343 = vunpack.c.l.b16 %v2730
    %v3344 = vunpack.c.h.b16 %v2730
    %v3345 = vunpack.c.l.b16 %v2731
    %v3346 = vunpack.c.h.b16 %v2731
    %v3347 = vunpack.c.l.b16 %v2732
    %v3348 = vunpack.c.h.b16 %v2732
    %v3349 = vunpack.c.l.b16 %v2733
    %v3350 = vunpack.c.h.b16 %v2733
    %v3351 = vunpack.c.l.b16 %v2734
    %v3352 = vunpack.c.h.b16 %v2734
    %v3353 = vunpack.c.l.b16 %v2735
    %v3354 = vunpack.c.h.b16 %v2735
    %v3355 = vunpack.c.l.b16 %v2736
    %v3356 = vunpack.c.h.b16 %v2736
    %v3357 = vunpack.c.l.b16 %v2737
    %v3358 = vunpack.c.h.b16 %v2737
    %v3359 = vunpack.c.l.b16 %v2738
    %v3360 = vunpack.c.h.b16 %v2738
    %v3361 = vunpack.c.l.b16 %v2739
    %v3362 = vunpack.c.h.b16 %v2739
    %v3363 = vunpack.c.l.b16 %v2740
    %v3364 = vunpack.c.h.b16 %v2740
    %v3365 = vunpack.c.l.b16 %v2741
    %v3366 = vunpack.c.h.b16 %v2741
    %v3367 = vunpack.c.l.b16 %v2742
    %v3368 = vunpack.c.h.b16 %v2742
    %v3369 = vunpack.c.l.b16 %v2743
    %v3370 = vunpack.c.h.b16 %v2743
    %v3371 = vunpack.c.l.b16 %v2744
    %v3372 = vunpack.c.h.b16 %v2744
    %v3373 = vunpack.c.l.b16 %v2745
    %v3374 = vunpack.c.h.b16 %v2745
    %v3375 = vunpack.c.l.b16 %v2746
    %v3376 = vunpack.c.h.b16 %v2746
    %v3377 = vunpack.c.l.b16 %v2747
    %v3378 = vunpack.c.h.b16 %v2747
    %v3379 = vunpack.c.l.b16 %v2748
    %v3380 = vunpack.c.h.b16 %v2748
    %v3381 = vunpack.c.l.b16 %v2749
    %v3382 = vunpack.c.h.b16 %v2749
    %v3383 = vunpack.c.l.b16 %v2750
    %v3384 = vunpack.c.h.b16 %v2750
    %v3385 = vunpack.c.l.b16 %v2751
    %v3386 = vunpack.c.h.b16 %v2751
    %v3387 = vunpack.c.l.b16 %v2752
    %v3388 = vunpack.c.h.b16 %v2752
    %v3389 = vunpack.c.l.b16 %v2753
    %v3390 = vunpack.c.h.b16 %v2753
    %v3391 = vunpack.c.l.b16 %v2754
    %v3392 = vunpack.c.h.b16 %v2754
    %v3393 = vunpack.c.l.b16 %v2755
    %v3394 = vunpack.c.h.b16 %v2755
    %v3395 = vunpack.c.l.b16 %v2756
    %v3396 = vunpack.c.h.b16 %v2756
    %v3397 = vunpack.c.l.b16 %v2757
    %v3398 = vunpack.c.h.b16 %v2757
    %v3399 = vunpack.c.l.b16 %v2758
    %v3400 = vunpack.c.h.b16 %v2758
    %v3401 = vunpack.c.l.b16 %v2759
    %v3402 = vunpack.c.h.b16 %v2759
    %v3403 = vunpack.c.l.b16 %v2760
    %v3404 = vunpack.c.h.b16 %v2760
    %v3405 = vunpack.c.l.b16 %v2761
    %v3406 = vunpack.c.h.b16 %v2761
    %v3407 = vunpack.c.l.b16 %v2762
    %v3408 = vunpack.c.h.b16 %v2762
    %v3409 = vunpack.c.l.b16 %v2763
    %v3410 = vunpack.c.h.b16 %v2763
    %v3411 = vunpack.c.l.b16 %v2764
    %v3412 = vunpack.c.h.b16 %v2764
    %v3413 = vunpack.c.l.b16 %v2765
    %v3414 = vunpack.c.h.b16 %v2765
    %v3415 = vunpack.c.l.b16 %v2766
    %v3416 = vunpack.c.h.b16 %v2766
    %v3417 = vunpack.c.l.b16 %v2767
    %v3418 = vunpack.c.h.b16 %v2767
    %v3419 = vunpack.c.l.b16 %v2768
    %v3420 = vunpack.c.h.b16 %v2768
    %v3421 = vunpack.c.l.b16 %v2769
    %v3422 = vunpack.c.h.b16 %v2769
    %v3423 = vunpack.c.l.b16 %v2770
    %v3424 = vunpack.c.h.b16 %v2770
    %v3425 = vunpack.c.l.b16 %v2771
    %v3426 = vunpack.c.h.b16 %v2771
    %v3427 = vunpack.c.l.b16 %v2772
    %v3428 = vunpack.c.h.b16 %v2772
    %v3429 = vunpack.c.l.b16 %v2773
    %v3430 = vunpack.c.h.b16 %v2773
    %v3431 = vunpack.c.l.b16 %v2774
    %v3432 = vunpack.c.h.b16 %v2774
    %v3433 = vunpack.c.l.b16 %v2775
    %v3434 = vunpack.c.h.b16 %v2775
    %v3435 = vunpack.c.l.b16 %v2776
    %v3436 = vunpack.c.h.b16 %v2776
    %v3437 = vunpack.c.l.b16 %v2777
    %v3438 = vunpack.c.h.b16 %v2777
    %v3439 = vunpack.c.l.b16 %v2778
    %v3440 = vunpack.c.h.b16 %v2778
    %v3441 = vunpack.c.l.b16 %v2779
    %v3442 = vunpack.c.h.b16 %v2779
    %v3443 = vunpack.c.l.b16 %v2780
    %v3444 = vunpack.c.h.b16 %v2780
    %v3445 = vunpack.c.l.b16 %v2781
    %v3446 = vunpack.c.h.b16 %v2781
    %v3447 = vunpack.c.l.b16 %v2782
    %v3448 = vunpack.c.h.b16 %v2782
    %v3449 = vunpack.c.l.b16 %v2783
    %v3450 = vunpack.c.h.b16 %v2783
    %v3451 = vunpack.c.l.b16 %v2784
    %v3452 = vunpack.c.h.b16 %v2784
    %v3453 = vunpack.c.l.b16 %v2785
    %v3454 = vunpack.c.h.b16 %v2785
    %v3455 = vunpack.c.l.b16 %v2786
    %v3456 = vunpack.c.h.b16 %v2786
    %v3457 = vunpack.c.l.b16 %v2787
    %v3458 = vunpack.c.h.b16 %v2787
    %v3459 = vunpack.c.l.b16 %v2788
    %v3460 = vunpack.c.h.b16 %v2788
    %v3461 = vunpack.c.l.b16 %v2789
    %v3462 = vunpack.c.h.b16 %v2789
    %v3463 = vunpack.c.l.b16 %v2790
    %v3464 = vunpack.c.h.b16 %v2790
    %v3465 = vunpack.c.l.b16 %v2791
    %v3466 = vunpack.c.h.b16 %v2791
    %v3467 = vunpack.c.l.b16 %v2792
    %v3468 = vunpack.c.h.b16 %v2792
    %v3469 = vunpack.c.l.b16 %v2793
    %v3470 = vunpack.c.h.b16 %v2793
    %v3471 = vunpack.c.l.b16 %v2794
    %v3472 = vunpack.c.h.b16 %v2794
    %v3473 = vunpack.c.l.b16 %v2795
    %v3474 = vunpack.c.h.b16 %v2795
    %v3475 = vunpack.c.l.b16 %v2796
    %v3476 = vunpack.c.h.b16 %v2796
    %v3477 = vunpack.c.l.b16 %v2797
    %v3478 = vunpack.c.h.b16 %v2797
    %v3479 = vunpack.c.l.b16 %v2798
    %v3480 = vunpack.c.h.b16 %v2798
    %v3481 = vunpack.c.l.b16 %v2799
    %v3482 = vunpack.c.h.b16 %v2799
    %v3483 = vunpack.c.l.b16 %v2800
    %v3484 = vunpack.c.h.b16 %v2800
    %v3485 = vunpack.c.l.b16 %v2801
    %v3486 = vunpack.c.h.b16 %v2801
    %v3487 = vunpack.c.l.b16 %v2802
    %v3488 = vunpack.c.h.b16 %v2802
    %v3489 = vunpack.c.l.b16 %v2803
    %v3490 = vunpack.c.h.b16 %v2803
    %v3491 = vunpack.c.l.b16 %v2804
    %v3492 = vunpack.c.h.b16 %v2804
    %v3493 = vunpack.c.l.b16 %v2805
    %v3494 = vunpack.c.h.b16 %v2805
    %v3495 = vunpack.c.l.b16 %v2806
    %v3496 = vunpack.c.h.b16 %v2806
    %v3497 = vunpack.c.l.b16 %v2807
    %v3498 = vunpack.c.h.b16 %v2807
    %v3499 = vunpack.c.l.b16 %v2808
    %v3500 = vunpack.c.h.b16 %v2808
    %v3501 = vunpack.c.l.b16 %v2809
    %v3502 = vunpack.c.h.b16 %v2809
    %v3503 = vunpack.c.l.b16 %v2810
    %v3504 = vunpack.c.h.b16 %v2810
    %v3505 = vunpack.c.l.b16 %v2811
    %v3506 = vunpack.c.h.b16 %v2811
    %v3507 = vunpack.c.l.b16 %v2812
    %v3508 = vunpack.c.h.b16 %v2812
    %v3509 = vunpack.c.l.b16 %v2813
    %v3510 = vunpack.c.h.b16 %v2813
    %v3511 = vunpack.c.l.b16 %v2814
    %v3512 = vunpack.c.h.b16 %v2814
    %v3513 = vunpack.c.l.b16 %v2815
    %v3514 = vunpack.c.h.b16 %v2815
    %v3515 = vunpack.c.l.b16 %v2816
    %v3516 = vunpack.c.h.b16 %v2816
    %v3517 = vunpack.c.l.b16 %v2817
    %v3518 = vunpack.c.h.b16 %v2817
    %v3519 = vunpack.c.l.b16 %v2818
    %v3520 = vunpack.c.h.b16 %v2818
    %v3521 = vunpack.c.l.b16 %v2819
    %v3522 = vunpack.c.h.b16 %v2819
    %v3523 = vunpack.c.l.b16 %v2820
    %v3524 = vunpack.c.h.b16 %v2820
    %v3525 = vunpack.c.l.b16 %v2821
    %v3526 = vunpack.c.h.b16 %v2821
    %v3527 = vunpack.c.l.b16 %v2822
    %v3528 = vunpack.c.h.b16 %v2822
    %v3529 = vunpack.c.l.b16 %v2823
    %v3530 = vunpack.c.h.b16 %v2823
    %v3531 = vunpack.c.l.b16 %v2824
    %v3532 = vunpack.c.h.b16 %v2824
    %v3533 = vunpack.c.l.b16 %v2825
    %v3534 = vunpack.c.h.b16 %v2825
    %v3535 = vunpack.c.l.b16 %v2826
    %v3536 = vunpack.c.h.b16 %v2826
    %v3537 = vunpack.c.l.b16 %v2827
    %v3538 = vunpack.c.h.b16 %v2827
    %v3539 = vunpack.c.l.b16 %v2828
    %v3540 = vunpack.c.h.b16 %v2828
    %v3541 = vunpack.c.l.b16 %v2829
    %v3542 = vunpack.c.h.b16 %v2829
    %v3543 = vunpack.c.l.b16 %v2830
    %v3544 = vunpack.c.h.b16 %v2830
    %v3545 = vunpack.c.l.b16 %v2831
    %v3546 = vunpack.c.h.b16 %v2831
    %v3547 = vunpack.c.l.b16 %v2832
    %v3548 = vunpack.c.h.b16 %v2832
    %v3549 = vunpack.c.l.b16 %v2833
    %v3550 = vunpack.c.h.b16 %v2833
    %v3551 = vunpack.c.l.b16 %v2834
    %v3552 = vunpack.c.h.b16 %v2834
    %v3553 = vunpack.c.l.b16 %v2835
    %v3554 = vunpack.c.h.b16 %v2835
    %v3555 = vunpack.c.l.b16 %v2836
    %v3556 = vunpack.c.h.b16 %v2836
    %v3557 = vunpack.c.l.b16 %v2837
    %v3558 = vunpack.c.h.b16 %v2837
    %v3559 = vunpack.c.l.b16 %v2838
    %v3560 = vunpack.c.h.b16 %v2838
    %v3561 = vunpack.c.l.b16 %v2839
    %v3562 = vunpack.c.h.b16 %v2839
    %v3563 = vunpack.c.l.b16 %v2840
    %v3564 = vunpack.c.h.b16 %v2840
    %v3565 = vunpack.c.l.b16 %v2841
    %v3566 = vunpack.c.h.b16 %v2841
    %v3567 = vunpack.c.l.b16 %v2842
    %v3568 = vunpack.c.h.b16 %v2842
    %v3569 = vunpack.c.l.b16 %v2843
    %v3570 = vunpack.c.h.b16 %v2843
    %v3571 = vunpack.c.l.b16 %v2844
    %v3572 = vunpack.c.h.b16 %v2844
    %v3573 = vunpack.c.l.b16 %v2845
    %v3574 = vunpack.c.h.b16 %v2845
    %v3575 = vunpack.c.l.b16 %v2846
    %v3576 = vunpack.c.h.b16 %v2846
    %v3577 = vunpack.c.l.b16 %v2847
    %v3578 = vunpack.c.h.b16 %v2847
    %v3579 = vunpack.c.l.b16 %v2848
    %v3580 = vunpack.c.h.b16 %v2848
    %v3581 = vunpack.c.l.b16 %v2849
    %v3582 = vunpack.c.h.b16 %v2849
    %v3583 = vunpack.c.l.b16 %v2850
    %v3584 = vunpack.c.h.b16 %v2850
    %v3585 = vunpack.c.l.b16 %v2851
    %v3586 = vunpack.c.h.b16 %v2851
    %v3587 = vunpack.c.l.b16 %v2852
    %v3588 = vunpack.c.h.b16 %v2852
    %v3589 = vunpack.c.l.b16 %v2853
    %v3590 = vunpack.c.h.b16 %v2853
    %v3591 = vunpack.c.l.b16 %v2854
    %v3592 = vunpack.c.h.b16 %v2854
    %v3593 = vunpack.c.l.b16 %v2855
    %v3594 = vunpack.c.h.b16 %v2855
    %v3595 = vunpack.c.l.b16 %v2856
    %v3596 = vunpack.c.h.b16 %v2856
    %v3597 = vunpack.c.l.b16 %v2857
    %v3598 = vunpack.c.h.b16 %v2857
    %v3599 = vunpack.c.l.b16 %v2858
    %v3600 = vunpack.c.h.b16 %v2858
    %v3601 = vunpack.c.l.b16 %v2859
    %v3602 = vunpack.c.h.b16 %v2859
    %v3603 = vunpack.c.l.b16 %v2860
    %v3604 = vunpack.c.h.b16 %v2860
    %v3605 = vunpack.c.l.b16 %v2861
    %v3606 = vunpack.c.h.b16 %v2861
    %v3607 = vunpack.c.l.b16 %v2862
    %v3608 = vunpack.c.h.b16 %v2862
    %v3609 = vunpack.c.l.b16 %v2863
    %v3610 = vunpack.c.h.b16 %v2863
    %v3611 = vunpack.c.l.b16 %v2864
    %v3612 = vunpack.c.h.b16 %v2864
    %v3613 = vunpack.c.l.b16 %v2865
    %v3614 = vunpack.c.h.b16 %v2865
    %v3615 = vunpack.c.l.b16 %v2866
    %v3616 = vunpack.c.h.b16 %v2866
    %v3617 = vunpack.c.l.b16 %v2867
    %v3618 = vunpack.c.h.b16 %v2867
    %v3619 = vunpack.c.l.b16 %v2868
    %v3620 = vunpack.c.h.b16 %v2868
    %v3621 = vunpack.c.l.b16 %v2869
    %v3622 = vunpack.c.h.b16 %v2869
    %v3623 = vunpack.c.l.b16 %v2870
    %v3624 = vunpack.c.h.b16 %v2870
    %v3625 = vunpack.c.l.b16 %v2871
    %v3626 = vunpack.c.h.b16 %v2871
    %v3627 = vunpack.c.l.b16 %v2872
    %v3628 = vunpack.c.h.b16 %v2872
    %v3629 = vunpack.c.l.b16 %v2873
    %v3630 = vunpack.c.h.b16 %v2873
    %v3631 = vunpack.c.l.b16 %v2874
    %v3632 = vunpack.c.h.b16 %v2874
    %v3633 = vunpack.c.l.b16 %v2875
    %v3634 = vunpack.c.h.b16 %v2875
    %v3635 = vunpack.c.l.b16 %v2876
    %v3636 = vunpack.c.h.b16 %v2876
    %v3637 = vunpack.c.l.b16 %v2877
    %v3638 = vunpack.c.h.b16 %v2877
    %v3639 = vunpack.c.l.b16 %v2878
    %v3640 = vunpack.c.h.b16 %v2878
    %v3641 = vunpack.c.l.b16 %v2879
    %v3642 = vunpack.c.h.b16 %v2879
    %v3643 = vunpack.c.l.b16 %v2880
    %v3644 = vunpack.c.h.b16 %v2880
    %v3645 = vunpack.c.l.b16 %v2881
    %v3646 = vunpack.c.h.b16 %v2881
    %v3647 = vunpack.c.l.b16 %v2882
    %v3648 = vunpack.c.h.b16 %v2882
    %v3649 = vunpack.c.l.b16 %v2883
    %v3650 = vunpack.c.h.b16 %v2883
    %v3651 = vunpack.c.l.b16 %v2884
    %v3652 = vunpack.c.h.b16 %v2884
    %v3653 = vunpack.c.l.b16 %v2885
    %v3654 = vunpack.c.h.b16 %v2885
    %v3655 = vunpack.c.l.b16 %v2886
    %v3656 = vunpack.c.h.b16 %v2886
    %v3657 = vunpack.c.l.b16 %v2887
    %v3658 = vunpack.c.h.b16 %v2887
    %v3659 = vunpack.c.l.b16 %v2888
    %v3660 = vunpack.c.h.b16 %v2888
    %v3661 = vunpack.c.l.b16 %v2889
    %v3662 = vunpack.c.h.b16 %v2889
    %v3663 = vunpack.c.l.b16 %v2890
    %v3664 = vunpack.c.h.b16 %v2890
    %v3665 = vunpack.c.l.b16 %v2891
    %v3666 = vunpack.c.h.b16 %v2891
    %v3667 = vunpack.c.l.b16 %v2892
    %v3668 = vunpack.c.h.b16 %v2892
    %v3669 = vunpack.c.l.b16 %v2893
    %v3670 = vunpack.c.h.b16 %v2893
    %v3671 = vunpack.c.l.b16 %v2894
    %v3672 = vunpack.c.h.b16 %v2894
    %v3673 = vunpack.c.l.b16 %v2895
    %v3674 = vunpack.c.h.b16 %v2895
    %v3675 = vunpack.c.l.b16 %v2896
    %v3676 = vunpack.c.h.b16 %v2896
    %v3677 = vunpack.c.l.b16 %v2897
    %v3678 = vunpack.c.h.b16 %v2897
    %v3679 = vunpack.c.l.b16 %v2898
    %v3680 = vunpack.c.h.b16 %v2898
    %v3681 = vunpack.c.l.b16 %v2899
    %v3682 = vunpack.c.h.b16 %v2899
    %v3683 = vunpack.c.l.b16 %v2900
    %v3684 = vunpack.c.h.b16 %v2900
    %v3685 = vunpack.c.l.b16 %v2901
    %v3686 = vunpack.c.h.b16 %v2901
    %v3687 = vunpack.c.l.b16 %v2902
    %v3688 = vunpack.c.h.b16 %v2902
    %v3689 = vunpack.c.l.b16 %v2903
    %v3690 = vunpack.c.h.b16 %v2903
    %v3691 = vunpack.c.l.b16 %v2904
    %v3692 = vunpack.c.h.b16 %v2904
    %v3693 = vunpack.c.l.b16 %v2905
    %v3694 = vunpack.c.h.b16 %v2905
    %v3695 = vunpack.c.l.b16 %v2906
    %v3696 = vunpack.c.h.b16 %v2906
    %v3697 = vunpack.c.l.b16 %v2907
    %v3698 = vunpack.c.h.b16 %v2907
    %v3699 = vunpack.c.l.b16 %v2908
    %v3700 = vunpack.c.h.b16 %v2908
    %v3701 = vunpack.c.l.b16 %v2909
    %v3702 = vunpack.c.h.b16 %v2909
    %v3703 = vunpack.c.l.b16 %v2910
    %v3704 = vunpack.c.h.b16 %v2910
    %v3705 = vunpack.c.l.b16 %v2911
    %v3706 = vunpack.c.h.b16 %v2911
    %v3707 = vunpack.c.l.b16 %v2912
    %v3708 = vunpack.c.h.b16 %v2912
    %v3709 = vunpack.c.l.b16 %v2913
    %v3710 = vunpack.c.h.b16 %v2913
    %v3711 = vunpack.c.l.b16 %v2914
    %v3712 = vunpack.c.h.b16 %v2914
    %v3713 = vunpack.c.l.b16 %v2915
    %v3714 = vunpack.c.h.b16 %v2915
    %v3715 = vunpack.c.l.b16 %v2916
    %v3716 = vunpack.c.h.b16 %v2916
    %v3717 = vunpack.c.l.b16 %v2917
    %v3718 = vunpack.c.h.b16 %v2917
    %v3719 = vunpack.c.l.b16 %v2918
    %v3720 = vunpack.c.h.b16 %v2918
    %v3721 = vunpack.c.l.b16 %v2919
    %v3722 = vunpack.c.h.b16 %v2919
    %v3723 = vunpack.c.l.b16 %v2920
    %v3724 = vunpack.c.h.b16 %v2920
    %v3725 = vunpack.c.l.b16 %v2921
    %v3726 = vunpack.c.h.b16 %v2921
    %v3727 = vunpack.c.l.b16 %v2922
    %v3728 = vunpack.c.h.b16 %v2922
    %v3729 = vunpack.c.l.b16 %v2923
    %v3730 = vunpack.c.h.b16 %v2923
    %v3731 = vunpack.c.l.b16 %v2924
    %v3732 = vunpack.c.h.b16 %v2924
    %v3733 = vunpack.c.l.b16 %v2925
    %v3734 = vunpack.c.h.b16 %v2925
    %v3735 = vunpack.c.l.b16 %v2926
    %v3736 = vunpack.c.h.b16 %v2926
    %v3737 = vunpack.c.l.b16 %v2927
    %v3738 = vunpack.c.h.b16 %v2927
    %v3739 = vpack.c.b16 %v3235, %v3227
    %v3740 = vpack.c.b16 %v3236, %v3228
    %v3741 = vpack.c.b16 %v3237, %v3229
    %v3742 = vpack.c.b16 %v3238, %v3230
    %v3743 = vpack.c.b16 %v3239, %v3231
    %v3744 = vpack.c.b16 %v3240, %v3232
    %v3745 = vpack.c.b16 %v3241, %v3233
    %v3746 = vpack.c.b16 %v3242, %v3234
    %v3747 = vpack.c.b16 %v3251, %v3243
    %v3748 = vpack.c.b16 %v3252, %v3244
    %v3749 = vpack.c.b16 %v3253, %v3245
    %v3750 = vpack.c.b16 %v3254, %v3246
    %v3751 = vpack.c.b16 %v3255, %v3247
    %v3752 = vpack.c.b16 %v3256, %v3248
    %v3753 = vpack.c.b16 %v3257, %v3249
    %v3754 = vpack.c.b16 %v3258, %v3250
    %v3755 = vpack.c.b16 %v3267, %v3259
    %v3756 = vpack.c.b16 %v3268, %v3260
    %v3757 = vpack.c.b16 %v3269, %v3261
    %v3758 = vpack.c.b16 %v3270, %v3262
    %v3759 = vpack.c.b16 %v3271, %v3263
    %v3760 = vpack.c.b16 %v3272, %v3264
    %v3761 = vpack.c.b16 %v3273, %v3265
    %v3762 = vpack.c.b16 %v3274, %v3266
    %v3763 = vpack.c.b16 %v3283, %v3275
    %v3764 = vpack.c.b16 %v3284, %v3276
    %v3765 = vpack.c.b16 %v3285, %v3277
    %v3766 = vpack.c.b16 %v3286, %v3278
    %v3767 = vpack.c.b16 %v3287, %v3279
    %v3768 = vpack.c.b16 %v3288, %v3280
    %v3769 = vpack.c.b16 %v3289, %v3281
    %v3770 = vpack.c.b16 %v3290, %v3282
    %v3771 = vpack.c.b16 %v3299, %v3291
    %v3772 = vpack.c.b16 %v3300, %v3292
    %v3773 = vpack.c.b16 %v3301, %v3293
    %v3774 = vpack.c.b16 %v3302, %v3294
    %v3775 = vpack.c.b16 %v3303, %v3295
    %v3776 = vpack.c.b16 %v3304, %v3296
    %v3777 = vpack.c.b16 %v3305, %v3297
    %v3778 = vpack.c.b16 %v3306, %v3298
    %v3779 = vpack.c.b16 %v3315, %v3307
    %v3780 = vpack.c.b16 %v3316, %v3308
    %v3781 = vpack.c.b16 %v3317, %v3309
    %v3782 = vpack.c.b16 %v3318, %v3310
    %v3783 = vpack.c.b16 %v3319, %v3311
    %v3784 = vpack.c.b16 %v3320, %v3312
    %v3785 = vpack.c.b16 %v3321, %v3313
    %v3786 = vpack.c.b16 %v3322, %v3314
    %v3787 = vpack.c.b16 %v3331, %v3323
    %v3788 = vpack.c.b16 %v3332, %v3324
    %v3789 = vpack.c.b16 %v3333, %v3325
    %v3790 = vpack.c.b16 %v3334, %v3326
    %v3791 = vpack.c.b16 %v3335, %v3327
    %v3792 = vpack.c.b16 %v3336, %v3328
    %v3793 = vpack.c.b16 %v3337, %v3329
    %v3794 = vpack.c.b16 %v3338, %v3330
    %v3795 = vpack.c.b16 %v3347, %v3339
    %v3796 = vpack.c.b16 %v3348, %v3340
    %v3797 = vpack.c.b16 %v3349, %v3341
    %v3798 = vpack.c.b16 %v3350, %v3342
    %v3799 = vpack.c.b16 %v3351, %v3343
    %v3800 = vpack.c.b16 %v3352, %v3344
    %v3801 = vpack.c.b16 %v3353, %v3345
    %v3802 = vpack.c.b16 %v3354, %v3346
    %v3803 = vpack.c.b16 %v3363, %v3355
    %v3804 = vpack.c.b16 %v3364, %v3356
    %v3805 = vpack.c.b16 %v3365, %v3357
    %v3806 = vpack.c.b16 %v3366, %v3358
    %v3807 = vpack.c.b16 %v3367, %v3359
    %v3808 = vpack.c.b16 %v3368, %v3360
    %v3809 = vpack.c.b16 %v3369, %v3361
    %v3810 = vpack.c.b16 %v3370, %v3362
    %v3811 = vpack.c.b16 %v3379, %v3371
    %v3812 = vpack.c.b16 %v3380, %v3372
    %v3813 = vpack.c.b16 %v3381, %v3373
    %v3814 = vpack.c.b16 %v3382, %v3374
    %v3815 = vpack.c.b16 %v3383, %v3375
    %v3816 = vpack.c.b16 %v3384, %v3376
    %v3817 = vpack.c.b16 %v3385, %v3377
    %v3818 = vpack.c.b16 %v3386, %v3378
    %v3819 = vpack.c.b16 %v3395, %v3387
    %v3820 = vpack.c.b16 %v3396, %v3388
    %v3821 = vpack.c.b16 %v3397, %v3389
    %v3822 = vpack.c.b16 %v3398, %v3390
    %v3823 = vpack.c.b16 %v3399, %v3391
    %v3824 = vpack.c.b16 %v3400, %v3392
    %v3825 = vpack.c.b16 %v3401, %v3393
    %v3826 = vpack.c.b16 %v3402, %v3394
    %v3827 = vpack.c.b16 %v3411, %v3403
    %v3828 = vpack.c.b16 %v3412, %v3404
    %v3829 = vpack.c.b16 %v3413, %v3405
    %v3830 = vpack.c.b16 %v3414, %v3406
    %v3831 = vpack.c.b16 %v3415, %v3407
    %v3832 = vpack.c.b16 %v3416, %v3408
    %v3833 = vpack.c.b16 %v3417, %v3409
    %v3834 = vpack.c.b16 %v3418, %v3410
    %v3835 = vpack.c.b16 %v3427, %v3419
    %v3836 = vpack.c.b16 %v3428, %v3420
    %v3837 = vpack.c.b16 %v3429, %v3421
    %v3838 = vpack.c.b16 %v3430, %v3422
    %v3839 = vpack.c.b16 %v3431, %v3423
    %v3840 = vpack.c.b16 %v3432, %v3424
    %v3841 = vpack.c.b16 %v3433, %v3425
    %v3842 = vpack.c.b16 %v3434, %v3426
    %v3843 = vpack.c.b16 %v3443, %v3435
    %v3844 = vpack.c.b16 %v3444, %v3436
    %v3845 = vpack.c.b16 %v3445, %v3437
    %v3846 = vpack.c.b16 %v3446, %v3438
    %v3847 = vpack.c.b16 %v3447, %v3439
    %v3848 = vpack.c.b16 %v3448, %v3440
    %v3849 = vpack.c.b16 %v3449, %v3441
    %v3850 = vpack.c.b16 %v3450, %v3442
    %v3851 = vpack.c.b16 %v3459, %v3451
    %v3852 = vpack.c.b16 %v3460, %v3452
    %v3853 = vpack.c.b16 %v3461, %v3453
    %v3854 = vpack.c.b16 %v3462, %v3454
    %v3855 = vpack.c.b16 %v3463, %v3455
    %v3856 = vpack.c.b16 %v3464, %v3456
    %v3857 = vpack.c.b16 %v3465, %v3457
    %v3858 = vpack.c.b16 %v3466, %v3458
    %v3859 = vpack.c.b16 %v3475, %v3467
    %v3860 = vpack.c.b16 %v3476, %v3468
    %v3861 = vpack.c.b16 %v3477, %v3469
    %v3862 = vpack.c.b16 %v3478, %v3470
    %v3863 = vpack.c.b16 %v3479, %v3471
    %v3864 = vpack.c.b16 %v3480, %v3472
    %v3865 = vpack.c.b16 %v3481, %v3473
    %v3866 = vpack.c.b16 %v3482, %v3474
    %v3867 = vpack.c.b16 %v3491, %v3483
    %v3868 = vpack.c.b16 %v3492, %v3484
    %v3869 = vpack.c.b16 %v3493, %v3485
    %v3870 = vpack.c.b16 %v3494, %v3486
    %v3871 = vpack.c.b16 %v3495, %v3487
    %v3872 = vpack.c.b16 %v3496, %v3488
    %v3873 = vpack.c.b16 %v3497, %v3489
    %v3874 = vpack.c.b16 %v3498, %v3490
    %v3875 = vpack.c.b16 %v3507, %v3499
    %v3876 = vpack.c.b16 %v3508, %v3500
    %v3877 = vpack.c.b16 %v3509, %v3501
    %v3878 = vpack.c.b16 %v3510, %v3502
    %v3879 = vpack.c.b16 %v3511, %v3503
    %v3880 = vpack.c.b16 %v3512, %v3504
    %v3881 = vpack.c.b16 %v3513, %v3505
    %v3882 = vpack.c.b16 %v3514, %v3506
    %v3883 = vpack.c.b16 %v3523, %v3515
    %v3884 = vpack.c.b16 %v3524, %v3516
    %v3885 = vpack.c.b16 %v3525, %v3517
    %v3886 = vpack.c.b16 %v3526, %v3518
    %v3887 = vpack.c.b16 %v3527, %v3519
    %v3888 = vpack.c.b16 %v3528, %v3520
    %v3889 = vpack.c.b16 %v3529, %v3521
    %v3890 = vpack.c.b16 %v3530, %v3522
    %v3891 = vpack.c.b16 %v3539, %v3531
    %v3892 = vpack.c.b16 %v3540, %v3532
    %v3893 = vpack.c.b16 %v3541, %v3533
    %v3894 = vpack.c.b16 %v3542, %v3534
    %v3895 = vpack.c.b16 %v3543, %v3535
    %v3896 = vpack.c.b16 %v3544, %v3536
    %v3897 = vpack.c.b16 %v3545, %v3537
    %v3898 = vpack.c.b16 %v3546, %v3538
    %v3899 = vpack.c.b16 %v3555, %v3547
    %v3900 = vpack.c.b16 %v3556, %v3548
    %v3901 = vpack.c.b16 %v3557, %v3549
    %v3902 = vpack.c.b16 %v3558, %v3550
    %v3903 = vpack.c.b16 %v3559, %v3551
    %v3904 = vpack.c.b16 %v3560, %v3552
    %v3905 = vpack.c.b16 %v3561, %v3553
    %v3906 = vpack.c.b16 %v3562, %v3554
    %v3907 = vpack.c.b16 %v3571, %v3563
    %v3908 = vpack.c.b16 %v3572, %v3564
    %v3909 = vpack.c.b16 %v3573, %v3565
    %v3910 = vpack.c.b16 %v3574, %v3566
    %v3911 = vpack.c.b16 %v3575, %v3567
    %v3912 = vpack.c.b16 %v3576, %v3568
    %v3913 = vpack.c.b16 %v3577, %v3569
    %v3914 = vpack.c.b16 %v3578, %v3570
    %v3915 = vpack.c.b16 %v3587, %v3579
    %v3916 = vpack.c.b16 %v3588, %v3580
    %v3917 = vpack.c.b16 %v3589, %v3581
    %v3918 = vpack.c.b16 %v3590, %v3582
    %v3919 = vpack.c.b16 %v3591, %v3583
    %v3920 = vpack.c.b16 %v3592, %v3584
    %v3921 = vpack.c.b16 %v3593, %v3585
    %v3922 = vpack.c.b16 %v3594, %v3586
    %v3923 = vpack.c.b16 %v3603, %v3595
    %v3924 = vpack.c.b16 %v3604, %v3596
    %v3925 = vpack.c.b16 %v3605, %v3597
    %v3926 = vpack.c.b16 %v3606, %v3598
    %v3927 = vpack.c.b16 %v3607, %v3599
    %v3928 = vpack.c.b16 %v3608, %v3600
    %v3929 = vpack.c.b16 %v3609, %v3601
    %v3930 = vpack.c.b16 %v3610, %v3602
    %v3931 = vpack.c.b16 %v3619, %v3611
    %v3932 = vpack.c.b16 %v3620, %v3612
    %v3933 = vpack.c.b16 %v3621, %v3613
    %v3934 = vpack.c.b16 %v3622, %v3614
    %v3935 = vpack.c.b16 %v3623, %v3615
    %v3936 = vpack.c.b16 %v3624, %v3616
    %v3937 = vpack.c.b16 %v3625, %v3617
    %v3938 = vpack.c.b16 %v3626, %v3618
    %v3939 = vpack.c.b16 %v3635, %v3627
    %v3940 = vpack.c.b16 %v3636, %v3628
    %v3941 = vpack.c.b16 %v3637, %v3629
    %v3942 = vpack.c.b16 %v3638, %v3630
    %v3943 = vpack.c.b16 %v3639, %v3631
    %v3944 = vpack.c.b16 %v3640, %v3632
    %v3945 = vpack.c.b16 %v3641, %v3633
    %v3946 = vpack.c.b16 %v3642, %v3634
    %v3947 = vpack.c.b16 %v3651, %v3643
    %v3948 = vpack.c.b16 %v3652, %v3644
    %v3949 = vpack.c.b16 %v3653, %v3645
    %v3950 = vpack.c.b16 %v3654, %v3646
    %v3951 = vpack.c.b16 %v3655, %v3647
    %v3952 = vpack.c.b16 %v3656, %v3648
    %v3953 = vpack.c.b16 %v3657, %v3649
    %v3954 = vpack.c.b16 %v3658, %v3650
    %v3955 = vpack.c.b16 %v3667, %v3659
    %v3956 = vpack.c.b16 %v3668, %v3660
    %v3957 = vpack.c.b16 %v3669, %v3661
    %v3958 = vpack.c.b16 %v3670, %v3662
    %v3959 = vpack.c.b16 %v3671, %v3663
    %v3960 = vpack.c.b16 %v3672, %v3664
    %v3961 = vpack.c.b16 %v3673, %v3665
    %v3962 = vpack.c.b16 %v3674, %v3666
    %v3963 = vpack.c.b16 %v3683, %v3675
    %v3964 = vpack.c.b16 %v3684, %v3676
    %v3965 = vpack.c.b16 %v3685, %v3677
    %v3966 = vpack.c.b16 %v3686, %v3678
    %v3967 = vpack.c.b16 %v3687, %v3679
    %v3968 = vpack.c.b16 %v3688, %v3680
    %v3969 = vpack.c.b16 %v3689, %v3681
    %v3970 = vpack.c.b16 %v3690, %v3682
    %v3971 = vpack.c.b16 %v3699, %v3691
    %v3972 = vpack.c.b16 %v3700, %v3692
    %v3973 = vpack.c.b16 %v3701, %v3693
    %v3974 = vpack.c.b16 %v3702, %v3694
    %v3975 = vpack.c.b16 %v3703, %v3695
    %v3976 = vpack.c.b16 %v3704, %v3696
    %v3977 = vpack.c.b16 %v3705, %v3697
    %v3978 = vpack.c.b16 %v3706, %v3698
    %v3979 = vpack.c.b16 %v3715, %v3707
    %v3980 = vpack.c.b16 %v3716, %v3708
    %v3981 = vpack.c.b16 %v3717, %v3709
    %v3982 = vpack.c.b16 %v3718, %v3710
    %v3983 = vpack.c.b16 %v3719, %v3711
    %v3984 = vpack.c.b16 %v3720, %v3712
    %v3985 = vpack.c.b16 %v3721, %v3713
    %v3986 = vpack.c.b16 %v3722, %v3714
    %v3987 = vpack.c.b16 %v3731, %v3723
    %v3988 = vpack.c.b16 %v3732, %v3724
    %v3989 = vpack.c.b16 %v3733, %v3725
    %v3990 = vpack.c.b16 %v3734, %v3726
    %v3991 = vpack.c.b16 %v3735, %v3727
    %v3992 = vpack.c.b16 %v3736, %v3728
    %v3993 = vpack.c.b16 %v3737, %v3729
    %v3994 = vpack.c.b16 %v3738, %v3730
    %4251 = vmatprep.subr.bf16.mxu0 %v3796
    %4252 = vmatpush1.bf16.msra.mxu0 %v3795
    %4253 = vmatprep.subr.bf16.mxu0 %v3788
    %4254 = vmatpush1.bf16.msra.mxu0 %v3787
    %4255 = vmatprep.subr.bf16.mxu0 %v3780
    %4256 = vmatpush1.bf16.msra.mxu0 %v3779
    %4257 = vmatprep.subr.bf16.mxu0 %v3772
    %4258 = vmatpush1.bf16.msra.mxu0 %v3771
    %4259 = vmatprep.subr.bf16.mxu0 %v3764
    %4260 = vmatpush1.bf16.msra.mxu0 %v3763
    %4261 = vmatprep.subr.bf16.mxu0 %v3756
    %4262 = vmatpush1.bf16.msra.mxu0 %v3755
    %4263 = vmatprep.subr.bf16.mxu0 %v3748
    %4264 = vmatpush1.bf16.msra.mxu0 %v3747
    %4265 = vmatprep.subr.bf16.mxu0 %v3740
    %4266 = vmatpush1.bf16.msra.mxu0 %v3739
    %4267 = vmatprep.subr.bf16.mxu0 %v3860
    %4268 = vmatpush2.bf16.msra.mxu0 %v3859
    %4269 = vmatprep.subr.bf16.mxu0 %v3852
    %4270 = vmatpush2.bf16.msra.mxu0 %v3851
    %4271 = vmatprep.subr.bf16.mxu0 %v3844
    %4272 = vmatpush2.bf16.msra.mxu0 %v3843
    %4273 = vmatprep.subr.bf16.mxu0 %v3836
    %4274 = vmatpush2.bf16.msra.mxu0 %v3835
    %4275 = vmatprep.subr.bf16.mxu0 %v3828
    %4276 = vmatpush2.bf16.msra.mxu0 %v3827
    %4277 = vmatprep.subr.bf16.mxu0 %v3820
    %4278 = vmatpush2.bf16.msra.mxu0 %v3819
    %4279 = vmatprep.subr.bf16.mxu0 %v3812
    %4280 = vmatpush2.bf16.msra.mxu0 %v3811
    %4281 = vmatprep.subr.bf16.mxu0 %v3804
    %4282 = vmatpush2.bf16.msra.mxu0 %v3803
    %4283 = vmatprep.mubr.bf16.mxu0 %v164
    %4284 = vmatmul.mubr.bf16.gmra.mxu0 %v163
    %v4285 = vpop.f32.mrf.mxu0
    %v4286 = vadd.f32 %v2934, %v4285
    %v4287 = vpop.f32.mrf.mxu0
    %v4288 = vadd.f32 %v2938, %v4287
    %v4289 = vpop.f32.mrf.mxu0
    %v4290 = vpop.f32.mrf.mxu0
    %4291 = vdwg.mxu0
    %4292 = vmatprep.subr.bf16.mxu0 %v3924
    %4293 = vmatpush1.bf16.msra.mxu0 %v3923
    %4294 = vmatprep.subr.bf16.mxu0 %v3916
    %4295 = vmatpush1.bf16.msra.mxu0 %v3915
    %4296 = vmatprep.subr.bf16.mxu0 %v3908
    %4297 = vmatpush1.bf16.msra.mxu0 %v3907
    %4298 = vmatprep.subr.bf16.mxu0 %v3900
    %4299 = vmatpush1.bf16.msra.mxu0 %v3899
    %4300 = vmatprep.subr.bf16.mxu0 %v3892
    %4301 = vmatpush1.bf16.msra.mxu0 %v3891
    %4302 = vmatprep.subr.bf16.mxu0 %v3884
    %4303 = vmatpush1.bf16.msra.mxu0 %v3883
    %4304 = vmatprep.subr.bf16.mxu0 %v3876
    %4305 = vmatpush1.bf16.msra.mxu0 %v3875
    %4306 = vmatprep.subr.bf16.mxu0 %v3868
    %4307 = vmatpush1.bf16.msra.mxu0 %v3867
    %4308 = vmatprep.subr.bf16.mxu0 %v3988
    %4309 = vmatpush2.bf16.msra.mxu0 %v3987
    %4310 = vmatprep.subr.bf16.mxu0 %v3980
    %4311 = vmatpush2.bf16.msra.mxu0 %v3979
    %4312 = vmatprep.subr.bf16.mxu0 %v3972
    %4313 = vmatpush2.bf16.msra.mxu0 %v3971
    %4314 = vmatprep.subr.bf16.mxu0 %v3964
    %4315 = vmatpush2.bf16.msra.mxu0 %v3963
    %4316 = vmatprep.subr.bf16.mxu0 %v3956
    %4317 = vmatpush2.bf16.msra.mxu0 %v3955
    %4318 = vmatprep.subr.bf16.mxu0 %v3948
    %4319 = vmatpush2.bf16.msra.mxu0 %v3947
    %4320 = vmatprep.subr.bf16.mxu0 %v3940
    %4321 = vmatpush2.bf16.msra.mxu0 %v3939
    %4322 = vmatprep.subr.bf16.mxu0 %v3932
    %4323 = vmatpush2.bf16.msra.mxu0 %v3931
    %4324 = vmatprep.mubr.bf16.mxu0 %v177
    %4325 = vmatmul.mubr.bf16.gmra.mxu0 %v176
    %v4326 = vpop.f32.mrf.mxu0
    %v4327 = vadd.f32 %v4286, %v4326
    %v4328 = vpop.f32.mrf.mxu0
    %v4329 = vadd.f32 %v4288, %v4328
    %v4330 = vpop.f32.mrf.mxu0
    %v4331 = vpop.f32.mrf.mxu0
    %4332 = vdwg.mxu0
    %4333 = vmatprep.subr.bf16.mxu0 %v3798
    %4334 = vmatpush1.bf16.msra.mxu0 %v3797
    %4335 = vmatprep.subr.bf16.mxu0 %v3790
    %4336 = vmatpush1.bf16.msra.mxu0 %v3789
    %4337 = vmatprep.subr.bf16.mxu0 %v3782
    %4338 = vmatpush1.bf16.msra.mxu0 %v3781
    %4339 = vmatprep.subr.bf16.mxu0 %v3774
    %4340 = vmatpush1.bf16.msra.mxu0 %v3773
    %4341 = vmatprep.subr.bf16.mxu0 %v3766
    %4342 = vmatpush1.bf16.msra.mxu0 %v3765
    %4343 = vmatprep.subr.bf16.mxu0 %v3758
    %4344 = vmatpush1.bf16.msra.mxu0 %v3757
    %4345 = vmatprep.subr.bf16.mxu0 %v3750
    %4346 = vmatpush1.bf16.msra.mxu0 %v3749
    %4347 = vmatprep.subr.bf16.mxu0 %v3742
    %4348 = vmatpush1.bf16.msra.mxu0 %v3741
    %4349 = vmatprep.subr.bf16.mxu0 %v3862
    %4350 = vmatpush2.bf16.msra.mxu0 %v3861
    %4351 = vmatprep.subr.bf16.mxu0 %v3854
    %4352 = vmatpush2.bf16.msra.mxu0 %v3853
    %4353 = vmatprep.subr.bf16.mxu0 %v3846
    %4354 = vmatpush2.bf16.msra.mxu0 %v3845
    %4355 = vmatprep.subr.bf16.mxu0 %v3838
    %4356 = vmatpush2.bf16.msra.mxu0 %v3837
    %4357 = vmatprep.subr.bf16.mxu0 %v3830
    %4358 = vmatpush2.bf16.msra.mxu0 %v3829
    %4359 = vmatprep.subr.bf16.mxu0 %v3822
    %4360 = vmatpush2.bf16.msra.mxu0 %v3821
    %4361 = vmatprep.subr.bf16.mxu0 %v3814
    %4362 = vmatpush2.bf16.msra.mxu0 %v3813
    %4363 = vmatprep.subr.bf16.mxu0 %v3806
    %4364 = vmatpush2.bf16.msra.mxu0 %v3805
    %4365 = vmatprep.mubr.bf16.mxu0 %v164
    %4366 = vmatmul.mubr.bf16.gmra.mxu0 %v163
    %v4367 = vpop.f32.mrf.mxu0
    %v4368 = vadd.f32 %v2942, %v4367
    %v4369 = vpop.f32.mrf.mxu0
    %v4370 = vadd.f32 %v2946, %v4369
    %v4371 = vpop.f32.mrf.mxu0
    %v4372 = vpop.f32.mrf.mxu0
    %4373 = vdwg.mxu0
    %4374 = vmatprep.subr.bf16.mxu0 %v3926
    %4375 = vmatpush1.bf16.msra.mxu0 %v3925
    %4376 = vmatprep.subr.bf16.mxu0 %v3918
    %4377 = vmatpush1.bf16.msra.mxu0 %v3917
    %4378 = vmatprep.subr.bf16.mxu0 %v3910
    %4379 = vmatpush1.bf16.msra.mxu0 %v3909
    %4380 = vmatprep.subr.bf16.mxu0 %v3902
    %4381 = vmatpush1.bf16.msra.mxu0 %v3901
    %4382 = vmatprep.subr.bf16.mxu0 %v3894
    %4383 = vmatpush1.bf16.msra.mxu0 %v3893
    %4384 = vmatprep.subr.bf16.mxu0 %v3886
    %4385 = vmatpush1.bf16.msra.mxu0 %v3885
    %4386 = vmatprep.subr.bf16.mxu0 %v3878
    %4387 = vmatpush1.bf16.msra.mxu0 %v3877
    %4388 = vmatprep.subr.bf16.mxu0 %v3870
    %4389 = vmatpush1.bf16.msra.mxu0 %v3869
    %4390 = vmatprep.subr.bf16.mxu0 %v3990
    %4391 = vmatpush2.bf16.msra.mxu0 %v3989
    %4392 = vmatprep.subr.bf16.mxu0 %v3982
    %4393 = vmatpush2.bf16.msra.mxu0 %v3981
    %4394 = vmatprep.subr.bf16.mxu0 %v3974
    %4395 = vmatpush2.bf16.msra.mxu0 %v3973
    %4396 = vmatprep.subr.bf16.mxu0 %v3966
    %4397 = vmatpush2.bf16.msra.mxu0 %v3965
    %4398 = vmatprep.subr.bf16.mxu0 %v3958
    %4399 = vmatpush2.bf16.msra.mxu0 %v3957
    %4400 = vmatprep.subr.bf16.mxu0 %v3950
    %4401 = vmatpush2.bf16.msra.mxu0 %v3949
    %4402 = vmatprep.subr.bf16.mxu0 %v3942
    %4403 = vmatpush2.bf16.msra.mxu0 %v3941
    %4404 = vmatprep.subr.bf16.mxu0 %v3934
    %4405 = vmatpush2.bf16.msra.mxu0 %v3933
    %4406 = vmatprep.mubr.bf16.mxu0 %v177
    %4407 = vmatmul.mubr.bf16.gmra.mxu0 %v176
    %v4408 = vpop.f32.mrf.mxu0
    %v4409 = vadd.f32 %v4368, %v4408
    %v4410 = vpop.f32.mrf.mxu0
    %v4411 = vadd.f32 %v4370, %v4410
    %v4412 = vpop.f32.mrf.mxu0
    %v4413 = vpop.f32.mrf.mxu0
    %4414 = vdwg.mxu0
    %4415 = vmatprep.subr.bf16.mxu0 %v3800
    %4416 = vmatpush1.bf16.msra.mxu0 %v3799
    %4417 = vmatprep.subr.bf16.mxu0 %v3792
    %4418 = vmatpush1.bf16.msra.mxu0 %v3791
    %4419 = vmatprep.subr.bf16.mxu0 %v3784
    %4420 = vmatpush1.bf16.msra.mxu0 %v3783
    %4421 = vmatprep.subr.bf16.mxu0 %v3776
    %4422 = vmatpush1.bf16.msra.mxu0 %v3775
    %4423 = vmatprep.subr.bf16.mxu0 %v3768
    %4424 = vmatpush1.bf16.msra.mxu0 %v3767
    %4425 = vmatprep.subr.bf16.mxu0 %v3760
    %4426 = vmatpush1.bf16.msra.mxu0 %v3759
    %4427 = vmatprep.subr.bf16.mxu0 %v3752
    %4428 = vmatpush1.bf16.msra.mxu0 %v3751
    %4429 = vmatprep.subr.bf16.mxu0 %v3744
    %4430 = vmatpush1.bf16.msra.mxu0 %v3743
    %4431 = vmatprep.subr.bf16.mxu0 %v3864
    %4432 = vmatpush2.bf16.msra.mxu0 %v3863
    %4433 = vmatprep.subr.bf16.mxu0 %v3856
    %4434 = vmatpush2.bf16.msra.mxu0 %v3855
    %4435 = vmatprep.subr.bf16.mxu0 %v3848
    %4436 = vmatpush2.bf16.msra.mxu0 %v3847
    %4437 = vmatprep.subr.bf16.mxu0 %v3840
    %4438 = vmatpush2.bf16.msra.mxu0 %v3839
    %4439 = vmatprep.subr.bf16.mxu0 %v3832
    %4440 = vmatpush2.bf16.msra.mxu0 %v3831
    %4441 = vmatprep.subr.bf16.mxu0 %v3824
    %4442 = vmatpush2.bf16.msra.mxu0 %v3823
    %4443 = vmatprep.subr.bf16.mxu0 %v3816
    %4444 = vmatpush2.bf16.msra.mxu0 %v3815
    %4445 = vmatprep.subr.bf16.mxu0 %v3808
    %4446 = vmatpush2.bf16.msra.mxu0 %v3807
    %4447 = vmatprep.mubr.bf16.mxu0 %v164
    %4448 = vmatmul.mubr.bf16.gmra.mxu0 %v163
    %v4449 = vpop.f32.mrf.mxu0
    %v4450 = vadd.f32 %v2950, %v4449
    %v4451 = vpop.f32.mrf.mxu0
    %v4452 = vadd.f32 %v2954, %v4451
    %v4453 = vpop.f32.mrf.mxu0
    %v4454 = vpop.f32.mrf.mxu0
    %4455 = vdwg.mxu0
    %4456 = vmatprep.subr.bf16.mxu0 %v3928
    %4457 = vmatpush1.bf16.msra.mxu0 %v3927
    %4458 = vmatprep.subr.bf16.mxu0 %v3920
    %4459 = vmatpush1.bf16.msra.mxu0 %v3919
    %4460 = vmatprep.subr.bf16.mxu0 %v3912
    %4461 = vmatpush1.bf16.msra.mxu0 %v3911
    %4462 = vmatprep.subr.bf16.mxu0 %v3904
    %4463 = vmatpush1.bf16.msra.mxu0 %v3903
    %4464 = vmatprep.subr.bf16.mxu0 %v3896
    %4465 = vmatpush1.bf16.msra.mxu0 %v3895
    %4466 = vmatprep.subr.bf16.mxu0 %v3888
    %4467 = vmatpush1.bf16.msra.mxu0 %v3887
    %4468 = vmatprep.subr.bf16.mxu0 %v3880
    %4469 = vmatpush1.bf16.msra.mxu0 %v3879
    %4470 = vmatprep.subr.bf16.mxu0 %v3872
    %4471 = vmatpush1.bf16.msra.mxu0 %v3871
    %4472 = vmatprep.subr.bf16.mxu0 %v3992
    %4473 = vmatpush2.bf16.msra.mxu0 %v3991
    %4474 = vmatprep.subr.bf16.mxu0 %v3984
    %4475 = vmatpush2.bf16.msra.mxu0 %v3983
    %4476 = vmatprep.subr.bf16.mxu0 %v3976
    %4477 = vmatpush2.bf16.msra.mxu0 %v3975
    %4478 = vmatprep.subr.bf16.mxu0 %v3968
    %4479 = vmatpush2.bf16.msra.mxu0 %v3967
    %4480 = vmatprep.subr.bf16.mxu0 %v3960
    %4481 = vmatpush2.bf16.msra.mxu0 %v3959
    %4482 = vmatprep.subr.bf16.mxu0 %v3952
    %4483 = vmatpush2.bf16.msra.mxu0 %v3951
    %4484 = vmatprep.subr.bf16.mxu0 %v3944
    %4485 = vmatpush2.bf16.msra.mxu0 %v3943
    %4486 = vmatprep.subr.bf16.mxu0 %v3936
    %4487 = vmatpush2.bf16.msra.mxu0 %v3935
    %4488 = vmatprep.mubr.bf16.mxu0 %v177
    %4489 = vmatmul.mubr.bf16.gmra.mxu0 %v176
    %v4490 = vpop.f32.mrf.mxu0
    %v4491 = vadd.f32 %v4450, %v4490
    %v4492 = vpop.f32.mrf.mxu0
    %v4493 = vadd.f32 %v4452, %v4492
    %v4494 = vpop.f32.mrf.mxu0
    %v4495 = vpop.f32.mrf.mxu0
    %4496 = vdwg.mxu0
    %4497 = vmatprep.subr.bf16.mxu0 %v3802
    %4498 = vmatpush1.bf16.msra.mxu0 %v3801
    %4499 = vmatprep.subr.bf16.mxu0 %v3794
    %4500 = vmatpush1.bf16.msra.mxu0 %v3793
    %4501 = vmatprep.subr.bf16.mxu0 %v3786
    %4502 = vmatpush1.bf16.msra.mxu0 %v3785
    %4503 = vmatprep.subr.bf16.mxu0 %v3778
    %4504 = vmatpush1.bf16.msra.mxu0 %v3777
    %4505 = vmatprep.subr.bf16.mxu0 %v3770
    %4506 = vmatpush1.bf16.msra.mxu0 %v3769
    %4507 = vmatprep.subr.bf16.mxu0 %v3762
    %4508 = vmatpush1.bf16.msra.mxu0 %v3761
    %4509 = vmatprep.subr.bf16.mxu0 %v3754
    %4510 = vmatpush1.bf16.msra.mxu0 %v3753
    %4511 = vmatprep.subr.bf16.mxu0 %v3746
    %4512 = vmatpush1.bf16.msra.mxu0 %v3745
    %4513 = vmatprep.subr.bf16.mxu0 %v3866
    %4514 = vmatpush2.bf16.msra.mxu0 %v3865
    %4515 = vmatprep.subr.bf16.mxu0 %v3858
    %4516 = vmatpush2.bf16.msra.mxu0 %v3857
    %4517 = vmatprep.subr.bf16.mxu0 %v3850
    %4518 = vmatpush2.bf16.msra.mxu0 %v3849
    %4519 = vmatprep.subr.bf16.mxu0 %v3842
    %4520 = vmatpush2.bf16.msra.mxu0 %v3841
    %4521 = vmatprep.subr.bf16.mxu0 %v3834
    %4522 = vmatpush2.bf16.msra.mxu0 %v3833
    %4523 = vmatprep.subr.bf16.mxu0 %v3826
    %4524 = vmatpush2.bf16.msra.mxu0 %v3825
    %4525 = vmatprep.subr.bf16.mxu0 %v3818
    %4526 = vmatpush2.bf16.msra.mxu0 %v3817
    %4527 = vmatprep.subr.bf16.mxu0 %v3810
    %4528 = vmatpush2.bf16.msra.mxu0 %v3809
    %4529 = vmatprep.mubr.bf16.mxu0 %v164
    %4530 = vmatmul.mubr.bf16.gmra.mxu0 %v163
    %v4531 = vpop.f32.mrf.mxu0
    %v4532 = vadd.f32 %v2958, %v4531
    %v4533 = vpop.f32.mrf.mxu0
    %v4534 = vadd.f32 %v2962, %v4533
    %v4535 = vpop.f32.mrf.mxu0
    %v4536 = vpop.f32.mrf.mxu0
    %4537 = vdwg.mxu0
    %4538 = vmatprep.subr.bf16.mxu0 %v3930
    %4539 = vmatpush1.bf16.msra.mxu0 %v3929
    %4540 = vmatprep.subr.bf16.mxu0 %v3922
    %4541 = vmatpush1.bf16.msra.mxu0 %v3921
    %4542 = vmatprep.subr.bf16.mxu0 %v3914
    %4543 = vmatpush1.bf16.msra.mxu0 %v3913
    %4544 = vmatprep.subr.bf16.mxu0 %v3906
    %4545 = vmatpush1.bf16.msra.mxu0 %v3905
    %4546 = vmatprep.subr.bf16.mxu0 %v3898
    %4547 = vmatpush1.bf16.msra.mxu0 %v3897
    %4548 = vmatprep.subr.bf16.mxu0 %v3890
    %4549 = vmatpush1.bf16.msra.mxu0 %v3889
    %4550 = vmatprep.subr.bf16.mxu0 %v3882
    %4551 = vmatpush1.bf16.msra.mxu0 %v3881
    %4552 = vmatprep.subr.bf16.mxu0 %v3874
    %4553 = vmatpush1.bf16.msra.mxu0 %v3873
    %4554 = vmatprep.subr.bf16.mxu0 %v3994
    %4555 = vmatpush2.bf16.msra.mxu0 %v3993
    %4556 = vmatprep.subr.bf16.mxu0 %v3986
    %4557 = vmatpush2.bf16.msra.mxu0 %v3985
    %4558 = vmatprep.subr.bf16.mxu0 %v3978
    %4559 = vmatpush2.bf16.msra.mxu0 %v3977
    %4560 = vmatprep.subr.bf16.mxu0 %v3970
    %4561 = vmatpush2.bf16.msra.mxu0 %v3969
    %4562 = vmatprep.subr.bf16.mxu0 %v3962
    %4563 = vmatpush2.bf16.msra.mxu0 %v3961
    %4564 = vmatprep.subr.bf16.mxu0 %v3954
    %4565 = vmatpush2.bf16.msra.mxu0 %v3953
    %4566 = vmatprep.subr.bf16.mxu0 %v3946
    %4567 = vmatpush2.bf16.msra.mxu0 %v3945
    %4568 = vmatprep.subr.bf16.mxu0 %v3938
    %4569 = vmatpush2.bf16.msra.mxu0 %v3937
    %4570 = vmatprep.mubr.bf16.mxu0 %v177
    %4571 = vmatmul.mubr.bf16.gmra.mxu0 %v176
    %v4572 = vpop.f32.mrf.mxu0
    %v4573 = vadd.f32 %v4532, %v4572
    %v4574 = vpop.f32.mrf.mxu0
    %v4575 = vadd.f32 %v4534, %v4574
    %v4576 = vpop.f32.mrf.mxu0
    %v4577 = vpop.f32.mrf.mxu0
    %4578 = vdwg.mxu0
    %v4579 = vld [vmem:[#allocation11] sm:$0xff]
    %v4580 = vld [vmem:[#allocation11 + $0x8] sm:$0xff]
    %v4581 = vld [vmem:[#allocation11 + $0x10] sm:$0xff]
    %v4582 = vld [vmem:[#allocation11 + $0x18] sm:$0xff]
    %v4583 = vld [vmem:[#allocation11 + $0x20] sm:$0xff]
    %v4584 = vld [vmem:[#allocation11 + $0x28] sm:$0xff]
    %v4585 = vld [vmem:[#allocation11 + $0x30] sm:$0xff]
    %v4586 = vld [vmem:[#allocation11 + $0x38] sm:$0xff]
    %v4587 = vld [vmem:[#allocation11 + $0x40] sm:$0xff]
    %v4588 = vld [vmem:[#allocation11 + $0x48] sm:$0xff]
    %v4589 = vld [vmem:[#allocation11 + $0x50] sm:$0xff]
    %v4590 = vld [vmem:[#allocation11 + $0x58] sm:$0xff]
    %v4591 = vld [vmem:[#allocation11 + $0x60] sm:$0xff]
    %v4592 = vld [vmem:[#allocation11 + $0x68] sm:$0xff]
    %v4593 = vld [vmem:[#allocation11 + $0x70] sm:$0xff]
    %v4594 = vld [vmem:[#allocation11 + $0x78] sm:$0xff]
    %v4595 = vld [vmem:[#allocation11 + $0x80] sm:$0xff]
    %v4596 = vld [vmem:[#allocation11 + $0x88] sm:$0xff]
    %v4597 = vld [vmem:[#allocation11 + $0x90] sm:$0xff]
    %v4598 = vld [vmem:[#allocation11 + $0x98] sm:$0xff]
    %v4599 = vld [vmem:[#allocation11 + $0xa0] sm:$0xff]
    %v4600 = vld [vmem:[#allocation11 + $0xa8] sm:$0xff]
    %v4601 = vld [vmem:[#allocation11 + $0xb0] sm:$0xff]
    %v4602 = vld [vmem:[#allocation11 + $0xb8] sm:$0xff]
    %v4603 = vld [vmem:[#allocation11 + $0xc0] sm:$0xff]
    %v4604 = vld [vmem:[#allocation11 + $0xc8] sm:$0xff]
    %v4605 = vld [vmem:[#allocation11 + $0xd0] sm:$0xff]
    %v4606 = vld [vmem:[#allocation11 + $0xd8] sm:$0xff]
    %v4607 = vld [vmem:[#allocation11 + $0xe0] sm:$0xff]
    %v4608 = vld [vmem:[#allocation11 + $0xe8] sm:$0xff]
    %v4609 = vld [vmem:[#allocation11 + $0xf0] sm:$0xff]
    %v4610 = vld [vmem:[#allocation11 + $0xf8] sm:$0xff]
    %v4611 = vld [vmem:[#allocation11 + $0x100] sm:$0xff]
    %v4612 = vld [vmem:[#allocation11 + $0x108] sm:$0xff]
    %v4613 = vld [vmem:[#allocation11 + $0x110] sm:$0xff]
    %v4614 = vld [vmem:[#allocation11 + $0x118] sm:$0xff]
    %v4615 = vld [vmem:[#allocation11 + $0x120] sm:$0xff]
    %v4616 = vld [vmem:[#allocation11 + $0x128] sm:$0xff]
    %v4617 = vld [vmem:[#allocation11 + $0x130] sm:$0xff]
    %v4618 = vld [vmem:[#allocation11 + $0x138] sm:$0xff]
    %v4619 = vld [vmem:[#allocation11 + $0x140] sm:$0xff]
    %v4620 = vld [vmem:[#allocation11 + $0x148] sm:$0xff]
    %v4621 = vld [vmem:[#allocation11 + $0x150] sm:$0xff]
    %v4622 = vld [vmem:[#allocation11 + $0x158] sm:$0xff]
    %v4623 = vld [vmem:[#allocation11 + $0x160] sm:$0xff]
    %v4624 = vld [vmem:[#allocation11 + $0x168] sm:$0xff]
    %v4625 = vld [vmem:[#allocation11 + $0x170] sm:$0xff]
    %v4626 = vld [vmem:[#allocation11 + $0x178] sm:$0xff]
    %v4627 = vld [vmem:[#allocation11 + $0x180] sm:$0xff]
    %v4628 = vld [vmem:[#allocation11 + $0x188] sm:$0xff]
    %v4629 = vld [vmem:[#allocation11 + $0x190] sm:$0xff]
    %v4630 = vld [vmem:[#allocation11 + $0x198] sm:$0xff]
    %v4631 = vld [vmem:[#allocation11 + $0x1a0] sm:$0xff]
    %v4632 = vld [vmem:[#allocation11 + $0x1a8] sm:$0xff]
    %v4633 = vld [vmem:[#allocation11 + $0x1b0] sm:$0xff]
    %v4634 = vld [vmem:[#allocation11 + $0x1b8] sm:$0xff]
    %v4635 = vld [vmem:[#allocation11 + $0x1c0] sm:$0xff]
    %v4636 = vld [vmem:[#allocation11 + $0x1c8] sm:$0xff]
    %v4637 = vld [vmem:[#allocation11 + $0x1d0] sm:$0xff]
    %v4638 = vld [vmem:[#allocation11 + $0x1d8] sm:$0xff]
    %v4639 = vld [vmem:[#allocation11 + $0x1e0] sm:$0xff]
    %v4640 = vld [vmem:[#allocation11 + $0x1e8] sm:$0xff]
    %v4641 = vld [vmem:[#allocation11 + $0x1f0] sm:$0xff]
    %v4642 = vld [vmem:[#allocation11 + $0x1f8] sm:$0xff]
    %v4643 = vld [vmem:[#allocation11 + $0x200] sm:$0xff]
    %v4644 = vld [vmem:[#allocation11 + $0x208] sm:$0xff]
    %v4645 = vld [vmem:[#allocation11 + $0x210] sm:$0xff]
    %v4646 = vld [vmem:[#allocation11 + $0x218] sm:$0xff]
    %v4647 = vld [vmem:[#allocation11 + $0x220] sm:$0xff]
    %v4648 = vld [vmem:[#allocation11 + $0x228] sm:$0xff]
    %v4649 = vld [vmem:[#allocation11 + $0x230] sm:$0xff]
    %v4650 = vld [vmem:[#allocation11 + $0x238] sm:$0xff]
    %v4651 = vld [vmem:[#allocation11 + $0x240] sm:$0xff]
    %v4652 = vld [vmem:[#allocation11 + $0x248] sm:$0xff]
    %v4653 = vld [vmem:[#allocation11 + $0x250] sm:$0xff]
    %v4654 = vld [vmem:[#allocation11 + $0x258] sm:$0xff]
    %v4655 = vld [vmem:[#allocation11 + $0x260] sm:$0xff]
    %v4656 = vld [vmem:[#allocation11 + $0x268] sm:$0xff]
    %v4657 = vld [vmem:[#allocation11 + $0x270] sm:$0xff]
    %v4658 = vld [vmem:[#allocation11 + $0x278] sm:$0xff]
    %v4659 = vld [vmem:[#allocation11 + $0x280] sm:$0xff]
    %v4660 = vld [vmem:[#allocation11 + $0x288] sm:$0xff]
    %v4661 = vld [vmem:[#allocation11 + $0x290] sm:$0xff]
    %v4662 = vld [vmem:[#allocation11 + $0x298] sm:$0xff]
    %v4663 = vld [vmem:[#allocation11 + $0x2a0] sm:$0xff]
    %v4664 = vld [vmem:[#allocation11 + $0x2a8] sm:$0xff]
    %v4665 = vld [vmem:[#allocation11 + $0x2b0] sm:$0xff]
    %v4666 = vld [vmem:[#allocation11 + $0x2b8] sm:$0xff]
    %v4667 = vld [vmem:[#allocation11 + $0x2c0] sm:$0xff]
    %v4668 = vld [vmem:[#allocation11 + $0x2c8] sm:$0xff]
    %v4669 = vld [vmem:[#allocation11 + $0x2d0] sm:$0xff]
    %v4670 = vld [vmem:[#allocation11 + $0x2d8] sm:$0xff]
    %v4671 = vld [vmem:[#allocation11 + $0x2e0] sm:$0xff]
    %v4672 = vld [vmem:[#allocation11 + $0x2e8] sm:$0xff]
    %v4673 = vld [vmem:[#allocation11 + $0x2f0] sm:$0xff]
    %v4674 = vld [vmem:[#allocation11 + $0x2f8] sm:$0xff]
    %v4675 = vld [vmem:[#allocation11 + $0x300] sm:$0xff]
    %v4676 = vld [vmem:[#allocation11 + $0x308] sm:$0xff]
    %v4677 = vld [vmem:[#allocation11 + $0x310] sm:$0xff]
    %v4678 = vld [vmem:[#allocation11 + $0x318] sm:$0xff]
    %v4679 = vld [vmem:[#allocation11 + $0x320] sm:$0xff]
    %v4680 = vld [vmem:[#allocation11 + $0x328] sm:$0xff]
    %v4681 = vld [vmem:[#allocation11 + $0x330] sm:$0xff]
    %v4682 = vld [vmem:[#allocation11 + $0x338] sm:$0xff]
    %v4683 = vld [vmem:[#allocation11 + $0x340] sm:$0xff]
    %v4684 = vld [vmem:[#allocation11 + $0x348] sm:$0xff]
    %v4685 = vld [vmem:[#allocation11 + $0x350] sm:$0xff]
    %v4686 = vld [vmem:[#allocation11 + $0x358] sm:$0xff]
    %v4687 = vld [vmem:[#allocation11 + $0x360] sm:$0xff]
    %v4688 = vld [vmem:[#allocation11 + $0x368] sm:$0xff]
    %v4689 = vld [vmem:[#allocation11 + $0x370] sm:$0xff]
    %v4690 = vld [vmem:[#allocation11 + $0x378] sm:$0xff]
    %v4691 = vld [vmem:[#allocation11 + $0x380] sm:$0xff]
    %v4692 = vld [vmem:[#allocation11 + $0x388] sm:$0xff]
    %v4693 = vld [vmem:[#allocation11 + $0x390] sm:$0xff]
    %v4694 = vld [vmem:[#allocation11 + $0x398] sm:$0xff]
    %v4695 = vld [vmem:[#allocation11 + $0x3a0] sm:$0xff]
    %v4696 = vld [vmem:[#allocation11 + $0x3a8] sm:$0xff]
    %v4697 = vld [vmem:[#allocation11 + $0x3b0] sm:$0xff]
    %v4698 = vld [vmem:[#allocation11 + $0x3b8] sm:$0xff]
    %v4699 = vld [vmem:[#allocation11 + $0x3c0] sm:$0xff]
    %v4700 = vld [vmem:[#allocation11 + $0x3c8] sm:$0xff]
    %v4701 = vld [vmem:[#allocation11 + $0x3d0] sm:$0xff]
    %v4702 = vld [vmem:[#allocation11 + $0x3d8] sm:$0xff]
    %v4703 = vld [vmem:[#allocation11 + $0x3e0] sm:$0xff]
    %v4704 = vld [vmem:[#allocation11 + $0x3e8] sm:$0xff]
    %v4705 = vld [vmem:[#allocation11 + $0x3f0] sm:$0xff]
    %v4706 = vld [vmem:[#allocation11 + $0x3f8] sm:$0xff]
    %v4707 = vld [vmem:[#allocation11 + $0x400] sm:$0xff]
    %v4708 = vld [vmem:[#allocation11 + $0x408] sm:$0xff]
    %v4709 = vld [vmem:[#allocation11 + $0x410] sm:$0xff]
    %v4710 = vld [vmem:[#allocation11 + $0x418] sm:$0xff]
    %v4711 = vld [vmem:[#allocation11 + $0x420] sm:$0xff]
    %v4712 = vld [vmem:[#allocation11 + $0x428] sm:$0xff]
    %v4713 = vld [vmem:[#allocation11 + $0x430] sm:$0xff]
    %v4714 = vld [vmem:[#allocation11 + $0x438] sm:$0xff]
    %v4715 = vld [vmem:[#allocation11 + $0x440] sm:$0xff]
    %v4716 = vld [vmem:[#allocation11 + $0x448] sm:$0xff]
    %v4717 = vld [vmem:[#allocation11 + $0x450] sm:$0xff]
    %v4718 = vld [vmem:[#allocation11 + $0x458] sm:$0xff]
    %v4719 = vld [vmem:[#allocation11 + $0x460] sm:$0xff]
    %v4720 = vld [vmem:[#allocation11 + $0x468] sm:$0xff]
    %v4721 = vld [vmem:[#allocation11 + $0x470] sm:$0xff]
    %v4722 = vld [vmem:[#allocation11 + $0x478] sm:$0xff]
    %v4723 = vld [vmem:[#allocation11 + $0x480] sm:$0xff]
    %v4724 = vld [vmem:[#allocation11 + $0x488] sm:$0xff]
    %v4725 = vld [vmem:[#allocation11 + $0x490] sm:$0xff]
    %v4726 = vld [vmem:[#allocation11 + $0x498] sm:$0xff]
    %v4727 = vld [vmem:[#allocation11 + $0x4a0] sm:$0xff]
    %v4728 = vld [vmem:[#allocation11 + $0x4a8] sm:$0xff]
    %v4729 = vld [vmem:[#allocation11 + $0x4b0] sm:$0xff]
    %v4730 = vld [vmem:[#allocation11 + $0x4b8] sm:$0xff]
    %v4731 = vld [vmem:[#allocation11 + $0x4c0] sm:$0xff]
    %v4732 = vld [vmem:[#allocation11 + $0x4c8] sm:$0xff]
    %v4733 = vld [vmem:[#allocation11 + $0x4d0] sm:$0xff]
    %v4734 = vld [vmem:[#allocation11 + $0x4d8] sm:$0xff]
    %v4735 = vld [vmem:[#allocation11 + $0x4e0] sm:$0xff]
    %v4736 = vld [vmem:[#allocation11 + $0x4e8] sm:$0xff]
    %v4737 = vld [vmem:[#allocation11 + $0x4f0] sm:$0xff]
    %v4738 = vld [vmem:[#allocation11 + $0x4f8] sm:$0xff]
    %v4739 = vld [vmem:[#allocation11 + $0x500] sm:$0xff]
    %v4740 = vld [vmem:[#allocation11 + $0x508] sm:$0xff]
    %v4741 = vld [vmem:[#allocation11 + $0x510] sm:$0xff]
    %v4742 = vld [vmem:[#allocation11 + $0x518] sm:$0xff]
    %v4743 = vld [vmem:[#allocation11 + $0x520] sm:$0xff]
    %v4744 = vld [vmem:[#allocation11 + $0x528] sm:$0xff]
    %v4745 = vld [vmem:[#allocation11 + $0x530] sm:$0xff]
    %v4746 = vld [vmem:[#allocation11 + $0x538] sm:$0xff]
    %v4747 = vld [vmem:[#allocation11 + $0x540] sm:$0xff]
    %v4748 = vld [vmem:[#allocation11 + $0x548] sm:$0xff]
    %v4749 = vld [vmem:[#allocation11 + $0x550] sm:$0xff]
    %v4750 = vld [vmem:[#allocation11 + $0x558] sm:$0xff]
    %v4751 = vld [vmem:[#allocation11 + $0x560] sm:$0xff]
    %v4752 = vld [vmem:[#allocation11 + $0x568] sm:$0xff]
    %v4753 = vld [vmem:[#allocation11 + $0x570] sm:$0xff]
    %v4754 = vld [vmem:[#allocation11 + $0x578] sm:$0xff]
    %v4755 = vld [vmem:[#allocation11 + $0x580] sm:$0xff]
    %v4756 = vld [vmem:[#allocation11 + $0x588] sm:$0xff]
    %v4757 = vld [vmem:[#allocation11 + $0x590] sm:$0xff]
    %v4758 = vld [vmem:[#allocation11 + $0x598] sm:$0xff]
    %v4759 = vld [vmem:[#allocation11 + $0x5a0] sm:$0xff]
    %v4760 = vld [vmem:[#allocation11 + $0x5a8] sm:$0xff]
    %v4761 = vld [vmem:[#allocation11 + $0x5b0] sm:$0xff]
    %v4762 = vld [vmem:[#allocation11 + $0x5b8] sm:$0xff]
    %v4763 = vld [vmem:[#allocation11 + $0x5c0] sm:$0xff]
    %v4764 = vld [vmem:[#allocation11 + $0x5c8] sm:$0xff]
    %v4765 = vld [vmem:[#allocation11 + $0x5d0] sm:$0xff]
    %v4766 = vld [vmem:[#allocation11 + $0x5d8] sm:$0xff]
    %v4767 = vld [vmem:[#allocation11 + $0x5e0] sm:$0xff]
    %v4768 = vld [vmem:[#allocation11 + $0x5e8] sm:$0xff]
    %v4769 = vld [vmem:[#allocation11 + $0x5f0] sm:$0xff]
    %v4770 = vld [vmem:[#allocation11 + $0x5f8] sm:$0xff]
    %v4771 = vld [vmem:[#allocation11 + $0x600] sm:$0xff]
    %v4772 = vld [vmem:[#allocation11 + $0x608] sm:$0xff]
    %v4773 = vld [vmem:[#allocation11 + $0x610] sm:$0xff]
    %v4774 = vld [vmem:[#allocation11 + $0x618] sm:$0xff]
    %v4775 = vld [vmem:[#allocation11 + $0x620] sm:$0xff]
    %v4776 = vld [vmem:[#allocation11 + $0x628] sm:$0xff]
    %v4777 = vld [vmem:[#allocation11 + $0x630] sm:$0xff]
    %v4778 = vld [vmem:[#allocation11 + $0x638] sm:$0xff]
    %v4779 = vld [vmem:[#allocation11 + $0x640] sm:$0xff]
    %v4780 = vld [vmem:[#allocation11 + $0x648] sm:$0xff]
    %v4781 = vld [vmem:[#allocation11 + $0x650] sm:$0xff]
    %v4782 = vld [vmem:[#allocation11 + $0x658] sm:$0xff]
    %v4783 = vld [vmem:[#allocation11 + $0x660] sm:$0xff]
    %v4784 = vld [vmem:[#allocation11 + $0x668] sm:$0xff]
    %v4785 = vld [vmem:[#allocation11 + $0x670] sm:$0xff]
    %v4786 = vld [vmem:[#allocation11 + $0x678] sm:$0xff]
    %v4787 = vld [vmem:[#allocation11 + $0x680] sm:$0xff]
    %v4788 = vld [vmem:[#allocation11 + $0x688] sm:$0xff]
    %v4789 = vld [vmem:[#allocation11 + $0x690] sm:$0xff]
    %v4790 = vld [vmem:[#allocation11 + $0x698] sm:$0xff]
    %v4791 = vld [vmem:[#allocation11 + $0x6a0] sm:$0xff]
    %v4792 = vld [vmem:[#allocation11 + $0x6a8] sm:$0xff]
    %v4793 = vld [vmem:[#allocation11 + $0x6b0] sm:$0xff]
    %v4794 = vld [vmem:[#allocation11 + $0x6b8] sm:$0xff]
    %v4795 = vld [vmem:[#allocation11 + $0x6c0] sm:$0xff]
    %v4796 = vld [vmem:[#allocation11 + $0x6c8] sm:$0xff]
    %v4797 = vld [vmem:[#allocation11 + $0x6d0] sm:$0xff]
    %v4798 = vld [vmem:[#allocation11 + $0x6d8] sm:$0xff]
    %v4799 = vld [vmem:[#allocation11 + $0x6e0] sm:$0xff]
    %v4800 = vld [vmem:[#allocation11 + $0x6e8] sm:$0xff]
    %v4801 = vld [vmem:[#allocation11 + $0x6f0] sm:$0xff]
    %v4802 = vld [vmem:[#allocation11 + $0x6f8] sm:$0xff]
    %v4803 = vld [vmem:[#allocation11 + $0x700] sm:$0xff]
    %v4804 = vld [vmem:[#allocation11 + $0x708] sm:$0xff]
    %v4805 = vld [vmem:[#allocation11 + $0x710] sm:$0xff]
    %v4806 = vld [vmem:[#allocation11 + $0x718] sm:$0xff]
    %v4807 = vld [vmem:[#allocation11 + $0x720] sm:$0xff]
    %v4808 = vld [vmem:[#allocation11 + $0x728] sm:$0xff]
    %v4809 = vld [vmem:[#allocation11 + $0x730] sm:$0xff]
    %v4810 = vld [vmem:[#allocation11 + $0x738] sm:$0xff]
    %v4811 = vld [vmem:[#allocation11 + $0x740] sm:$0xff]
    %v4812 = vld [vmem:[#allocation11 + $0x748] sm:$0xff]
    %v4813 = vld [vmem:[#allocation11 + $0x750] sm:$0xff]
    %v4814 = vld [vmem:[#allocation11 + $0x758] sm:$0xff]
    %v4815 = vld [vmem:[#allocation11 + $0x760] sm:$0xff]
    %v4816 = vld [vmem:[#allocation11 + $0x768] sm:$0xff]
    %v4817 = vld [vmem:[#allocation11 + $0x770] sm:$0xff]
    %v4818 = vld [vmem:[#allocation11 + $0x778] sm:$0xff]
    %v4819 = vld [vmem:[#allocation11 + $0x780] sm:$0xff]
    %v4820 = vld [vmem:[#allocation11 + $0x788] sm:$0xff]
    %v4821 = vld [vmem:[#allocation11 + $0x790] sm:$0xff]
    %v4822 = vld [vmem:[#allocation11 + $0x798] sm:$0xff]
    %v4823 = vld [vmem:[#allocation11 + $0x7a0] sm:$0xff]
    %v4824 = vld [vmem:[#allocation11 + $0x7a8] sm:$0xff]
    %v4825 = vld [vmem:[#allocation11 + $0x7b0] sm:$0xff]
    %v4826 = vld [vmem:[#allocation11 + $0x7b8] sm:$0xff]
    %v4827 = vld [vmem:[#allocation11 + $0x7c0] sm:$0xff]
    %v4828 = vld [vmem:[#allocation11 + $0x7c8] sm:$0xff]
    %v4829 = vld [vmem:[#allocation11 + $0x7d0] sm:$0xff]
    %v4830 = vld [vmem:[#allocation11 + $0x7d8] sm:$0xff]
    %v4831 = vld [vmem:[#allocation11 + $0x7e0] sm:$0xff]
    %v4832 = vld [vmem:[#allocation11 + $0x7e8] sm:$0xff]
    %v4833 = vld [vmem:[#allocation11 + $0x7f0] sm:$0xff]
    %v4834 = vld [vmem:[#allocation11 + $0x7f8] sm:$0xff]
    %s4835 = scalar_lea.vmem [#allocation13], 16
    %v4836 = vld [vmem:[%s4835] sm:$0xff]
    %v4838 = vlaneseq
    %v4839 = vshrl.u32 %v4838, 7
    %v4840 = vsub.s32 0, %v4839
    %v4841 = vrot.slane %v4836, %v4840
    %v4842 = vlaneseq
    %v4843 = vshrl.u32 %v4842, 7
    %v4844 = vsub.s32 1, %v4843
    %v4845 = vrot.slane %v4836, %v4844
    %v4846 = vlaneseq
    %v4847 = vshrl.u32 %v4846, 7
    %v4848 = vsub.s32 2, %v4847
    %v4849 = vrot.slane %v4836, %v4848
    %v4850 = vlaneseq
    %v4851 = vshrl.u32 %v4850, 7
    %v4852 = vsub.s32 3, %v4851
    %v4853 = vrot.slane %v4836, %v4852
    %v4854 = vlaneseq
    %v4855 = vshrl.u32 %v4854, 7
    %v4856 = vsub.s32 4, %v4855
    %v4857 = vrot.slane %v4836, %v4856
    %v4858 = vlaneseq
    %v4859 = vshrl.u32 %v4858, 7
    %v4860 = vsub.s32 5, %v4859
    %v4861 = vrot.slane %v4836, %v4860
    %v4862 = vlaneseq
    %v4863 = vshrl.u32 %v4862, 7
    %v4864 = vsub.s32 6, %v4863
    %v4865 = vrot.slane %v4836, %v4864
    %v4866 = vlaneseq
    %v4867 = vshrl.u32 %v4866, 7
    %v4868 = vsub.s32 7, %v4867
    %v4869 = vrot.slane %v4836, %v4868
    %v5134 = vunpack.c.l.b16 %v4579
    %v5135 = vunpack.c.h.b16 %v4579
    %v5136 = vunpack.c.l.b16 %v4580
    %v5137 = vunpack.c.h.b16 %v4580
    %v5138 = vunpack.c.l.b16 %v4581
    %v5139 = vunpack.c.h.b16 %v4581
    %v5140 = vunpack.c.l.b16 %v4582
    %v5141 = vunpack.c.h.b16 %v4582
    %v5142 = vunpack.c.l.b16 %v4583
    %v5143 = vunpack.c.h.b16 %v4583
    %v5144 = vunpack.c.l.b16 %v4584
    %v5145 = vunpack.c.h.b16 %v4584
    %v5146 = vunpack.c.l.b16 %v4585
    %v5147 = vunpack.c.h.b16 %v4585
    %v5148 = vunpack.c.l.b16 %v4586
    %v5149 = vunpack.c.h.b16 %v4586
    %v5150 = vunpack.c.l.b16 %v4587
    %v5151 = vunpack.c.h.b16 %v4587
    %v5152 = vunpack.c.l.b16 %v4588
    %v5153 = vunpack.c.h.b16 %v4588
    %v5154 = vunpack.c.l.b16 %v4589
    %v5155 = vunpack.c.h.b16 %v4589
    %v5156 = vunpack.c.l.b16 %v4590
    %v5157 = vunpack.c.h.b16 %v4590
    %v5158 = vunpack.c.l.b16 %v4591
    %v5159 = vunpack.c.h.b16 %v4591
    %v5160 = vunpack.c.l.b16 %v4592
    %v5161 = vunpack.c.h.b16 %v4592
    %v5162 = vunpack.c.l.b16 %v4593
    %v5163 = vunpack.c.h.b16 %v4593
    %v5164 = vunpack.c.l.b16 %v4594
    %v5165 = vunpack.c.h.b16 %v4594
    %v5166 = vunpack.c.l.b16 %v4595
    %v5167 = vunpack.c.h.b16 %v4595
    %v5168 = vunpack.c.l.b16 %v4596
    %v5169 = vunpack.c.h.b16 %v4596
    %v5170 = vunpack.c.l.b16 %v4597
    %v5171 = vunpack.c.h.b16 %v4597
    %v5172 = vunpack.c.l.b16 %v4598
    %v5173 = vunpack.c.h.b16 %v4598
    %v5174 = vunpack.c.l.b16 %v4599
    %v5175 = vunpack.c.h.b16 %v4599
    %v5176 = vunpack.c.l.b16 %v4600
    %v5177 = vunpack.c.h.b16 %v4600
    %v5178 = vunpack.c.l.b16 %v4601
    %v5179 = vunpack.c.h.b16 %v4601
    %v5180 = vunpack.c.l.b16 %v4602
    %v5181 = vunpack.c.h.b16 %v4602
    %v5182 = vunpack.c.l.b16 %v4603
    %v5183 = vunpack.c.h.b16 %v4603
    %v5184 = vunpack.c.l.b16 %v4604
    %v5185 = vunpack.c.h.b16 %v4604
    %v5186 = vunpack.c.l.b16 %v4605
    %v5187 = vunpack.c.h.b16 %v4605
    %v5188 = vunpack.c.l.b16 %v4606
    %v5189 = vunpack.c.h.b16 %v4606
    %v5190 = vunpack.c.l.b16 %v4607
    %v5191 = vunpack.c.h.b16 %v4607
    %v5192 = vunpack.c.l.b16 %v4608
    %v5193 = vunpack.c.h.b16 %v4608
    %v5194 = vunpack.c.l.b16 %v4609
    %v5195 = vunpack.c.h.b16 %v4609
    %v5196 = vunpack.c.l.b16 %v4610
    %v5197 = vunpack.c.h.b16 %v4610
    %v5198 = vunpack.c.l.b16 %v4611
    %v5199 = vunpack.c.h.b16 %v4611
    %v5200 = vunpack.c.l.b16 %v4612
    %v5201 = vunpack.c.h.b16 %v4612
    %v5202 = vunpack.c.l.b16 %v4613
    %v5203 = vunpack.c.h.b16 %v4613
    %v5204 = vunpack.c.l.b16 %v4614
    %v5205 = vunpack.c.h.b16 %v4614
    %v5206 = vunpack.c.l.b16 %v4615
    %v5207 = vunpack.c.h.b16 %v4615
    %v5208 = vunpack.c.l.b16 %v4616
    %v5209 = vunpack.c.h.b16 %v4616
    %v5210 = vunpack.c.l.b16 %v4617
    %v5211 = vunpack.c.h.b16 %v4617
    %v5212 = vunpack.c.l.b16 %v4618
    %v5213 = vunpack.c.h.b16 %v4618
    %v5214 = vunpack.c.l.b16 %v4619
    %v5215 = vunpack.c.h.b16 %v4619
    %v5216 = vunpack.c.l.b16 %v4620
    %v5217 = vunpack.c.h.b16 %v4620
    %v5218 = vunpack.c.l.b16 %v4621
    %v5219 = vunpack.c.h.b16 %v4621
    %v5220 = vunpack.c.l.b16 %v4622
    %v5221 = vunpack.c.h.b16 %v4622
    %v5222 = vunpack.c.l.b16 %v4623
    %v5223 = vunpack.c.h.b16 %v4623
    %v5224 = vunpack.c.l.b16 %v4624
    %v5225 = vunpack.c.h.b16 %v4624
    %v5226 = vunpack.c.l.b16 %v4625
    %v5227 = vunpack.c.h.b16 %v4625
    %v5228 = vunpack.c.l.b16 %v4626
    %v5229 = vunpack.c.h.b16 %v4626
    %v5230 = vunpack.c.l.b16 %v4627
    %v5231 = vunpack.c.h.b16 %v4627
    %v5232 = vunpack.c.l.b16 %v4628
    %v5233 = vunpack.c.h.b16 %v4628
    %v5234 = vunpack.c.l.b16 %v4629
    %v5235 = vunpack.c.h.b16 %v4629
    %v5236 = vunpack.c.l.b16 %v4630
    %v5237 = vunpack.c.h.b16 %v4630
    %v5238 = vunpack.c.l.b16 %v4631
    %v5239 = vunpack.c.h.b16 %v4631
    %v5240 = vunpack.c.l.b16 %v4632
    %v5241 = vunpack.c.h.b16 %v4632
    %v5242 = vunpack.c.l.b16 %v4633
    %v5243 = vunpack.c.h.b16 %v4633
    %v5244 = vunpack.c.l.b16 %v4634
    %v5245 = vunpack.c.h.b16 %v4634
    %v5246 = vunpack.c.l.b16 %v4635
    %v5247 = vunpack.c.h.b16 %v4635
    %v5248 = vunpack.c.l.b16 %v4636
    %v5249 = vunpack.c.h.b16 %v4636
    %v5250 = vunpack.c.l.b16 %v4637
    %v5251 = vunpack.c.h.b16 %v4637
    %v5252 = vunpack.c.l.b16 %v4638
    %v5253 = vunpack.c.h.b16 %v4638
    %v5254 = vunpack.c.l.b16 %v4639
    %v5255 = vunpack.c.h.b16 %v4639
    %v5256 = vunpack.c.l.b16 %v4640
    %v5257 = vunpack.c.h.b16 %v4640
    %v5258 = vunpack.c.l.b16 %v4641
    %v5259 = vunpack.c.h.b16 %v4641
    %v5260 = vunpack.c.l.b16 %v4642
    %v5261 = vunpack.c.h.b16 %v4642
    %v5262 = vunpack.c.l.b16 %v4643
    %v5263 = vunpack.c.h.b16 %v4643
    %v5264 = vunpack.c.l.b16 %v4644
    %v5265 = vunpack.c.h.b16 %v4644
    %v5266 = vunpack.c.l.b16 %v4645
    %v5267 = vunpack.c.h.b16 %v4645
    %v5268 = vunpack.c.l.b16 %v4646
    %v5269 = vunpack.c.h.b16 %v4646
    %v5270 = vunpack.c.l.b16 %v4647
    %v5271 = vunpack.c.h.b16 %v4647
    %v5272 = vunpack.c.l.b16 %v4648
    %v5273 = vunpack.c.h.b16 %v4648
    %v5274 = vunpack.c.l.b16 %v4649
    %v5275 = vunpack.c.h.b16 %v4649
    %v5276 = vunpack.c.l.b16 %v4650
    %v5277 = vunpack.c.h.b16 %v4650
    %v5278 = vunpack.c.l.b16 %v4651
    %v5279 = vunpack.c.h.b16 %v4651
    %v5280 = vunpack.c.l.b16 %v4652
    %v5281 = vunpack.c.h.b16 %v4652
    %v5282 = vunpack.c.l.b16 %v4653
    %v5283 = vunpack.c.h.b16 %v4653
    %v5284 = vunpack.c.l.b16 %v4654
    %v5285 = vunpack.c.h.b16 %v4654
    %v5286 = vunpack.c.l.b16 %v4655
    %v5287 = vunpack.c.h.b16 %v4655
    %v5288 = vunpack.c.l.b16 %v4656
    %v5289 = vunpack.c.h.b16 %v4656
    %v5290 = vunpack.c.l.b16 %v4657
    %v5291 = vunpack.c.h.b16 %v4657
    %v5292 = vunpack.c.l.b16 %v4658
    %v5293 = vunpack.c.h.b16 %v4658
    %v5294 = vunpack.c.l.b16 %v4659
    %v5295 = vunpack.c.h.b16 %v4659
    %v5296 = vunpack.c.l.b16 %v4660
    %v5297 = vunpack.c.h.b16 %v4660
    %v5298 = vunpack.c.l.b16 %v4661
    %v5299 = vunpack.c.h.b16 %v4661
    %v5300 = vunpack.c.l.b16 %v4662
    %v5301 = vunpack.c.h.b16 %v4662
    %v5302 = vunpack.c.l.b16 %v4663
    %v5303 = vunpack.c.h.b16 %v4663
    %v5304 = vunpack.c.l.b16 %v4664
    %v5305 = vunpack.c.h.b16 %v4664
    %v5306 = vunpack.c.l.b16 %v4665
    %v5307 = vunpack.c.h.b16 %v4665
    %v5308 = vunpack.c.l.b16 %v4666
    %v5309 = vunpack.c.h.b16 %v4666
    %v5310 = vunpack.c.l.b16 %v4667
    %v5311 = vunpack.c.h.b16 %v4667
    %v5312 = vunpack.c.l.b16 %v4668
    %v5313 = vunpack.c.h.b16 %v4668
    %v5314 = vunpack.c.l.b16 %v4669
    %v5315 = vunpack.c.h.b16 %v4669
    %v5316 = vunpack.c.l.b16 %v4670
    %v5317 = vunpack.c.h.b16 %v4670
    %v5318 = vunpack.c.l.b16 %v4671
    %v5319 = vunpack.c.h.b16 %v4671
    %v5320 = vunpack.c.l.b16 %v4672
    %v5321 = vunpack.c.h.b16 %v4672
    %v5322 = vunpack.c.l.b16 %v4673
    %v5323 = vunpack.c.h.b16 %v4673
    %v5324 = vunpack.c.l.b16 %v4674
    %v5325 = vunpack.c.h.b16 %v4674
    %v5326 = vunpack.c.l.b16 %v4675
    %v5327 = vunpack.c.h.b16 %v4675
    %v5328 = vunpack.c.l.b16 %v4676
    %v5329 = vunpack.c.h.b16 %v4676
    %v5330 = vunpack.c.l.b16 %v4677
    %v5331 = vunpack.c.h.b16 %v4677
    %v5332 = vunpack.c.l.b16 %v4678
    %v5333 = vunpack.c.h.b16 %v4678
    %v5334 = vunpack.c.l.b16 %v4679
    %v5335 = vunpack.c.h.b16 %v4679
    %v5336 = vunpack.c.l.b16 %v4680
    %v5337 = vunpack.c.h.b16 %v4680
    %v5338 = vunpack.c.l.b16 %v4681
    %v5339 = vunpack.c.h.b16 %v4681
    %v5340 = vunpack.c.l.b16 %v4682
    %v5341 = vunpack.c.h.b16 %v4682
    %v5342 = vunpack.c.l.b16 %v4683
    %v5343 = vunpack.c.h.b16 %v4683
    %v5344 = vunpack.c.l.b16 %v4684
    %v5345 = vunpack.c.h.b16 %v4684
    %v5346 = vunpack.c.l.b16 %v4685
    %v5347 = vunpack.c.h.b16 %v4685
    %v5348 = vunpack.c.l.b16 %v4686
    %v5349 = vunpack.c.h.b16 %v4686
    %v5350 = vunpack.c.l.b16 %v4687
    %v5351 = vunpack.c.h.b16 %v4687
    %v5352 = vunpack.c.l.b16 %v4688
    %v5353 = vunpack.c.h.b16 %v4688
    %v5354 = vunpack.c.l.b16 %v4689
    %v5355 = vunpack.c.h.b16 %v4689
    %v5356 = vunpack.c.l.b16 %v4690
    %v5357 = vunpack.c.h.b16 %v4690
    %v5358 = vunpack.c.l.b16 %v4691
    %v5359 = vunpack.c.h.b16 %v4691
    %v5360 = vunpack.c.l.b16 %v4692
    %v5361 = vunpack.c.h.b16 %v4692
    %v5362 = vunpack.c.l.b16 %v4693
    %v5363 = vunpack.c.h.b16 %v4693
    %v5364 = vunpack.c.l.b16 %v4694
    %v5365 = vunpack.c.h.b16 %v4694
    %v5366 = vunpack.c.l.b16 %v4695
    %v5367 = vunpack.c.h.b16 %v4695
    %v5368 = vunpack.c.l.b16 %v4696
    %v5369 = vunpack.c.h.b16 %v4696
    %v5370 = vunpack.c.l.b16 %v4697
    %v5371 = vunpack.c.h.b16 %v4697
    %v5372 = vunpack.c.l.b16 %v4698
    %v5373 = vunpack.c.h.b16 %v4698
    %v5374 = vunpack.c.l.b16 %v4699
    %v5375 = vunpack.c.h.b16 %v4699
    %v5376 = vunpack.c.l.b16 %v4700
    %v5377 = vunpack.c.h.b16 %v4700
    %v5378 = vunpack.c.l.b16 %v4701
    %v5379 = vunpack.c.h.b16 %v4701
    %v5380 = vunpack.c.l.b16 %v4702
    %v5381 = vunpack.c.h.b16 %v4702
    %v5382 = vunpack.c.l.b16 %v4703
    %v5383 = vunpack.c.h.b16 %v4703
    %v5384 = vunpack.c.l.b16 %v4704
    %v5385 = vunpack.c.h.b16 %v4704
    %v5386 = vunpack.c.l.b16 %v4705
    %v5387 = vunpack.c.h.b16 %v4705
    %v5388 = vunpack.c.l.b16 %v4706
    %v5389 = vunpack.c.h.b16 %v4706
    %v5390 = vunpack.c.l.b16 %v4707
    %v5391 = vunpack.c.h.b16 %v4707
    %v5392 = vunpack.c.l.b16 %v4708
    %v5393 = vunpack.c.h.b16 %v4708
    %v5394 = vunpack.c.l.b16 %v4709
    %v5395 = vunpack.c.h.b16 %v4709
    %v5396 = vunpack.c.l.b16 %v4710
    %v5397 = vunpack.c.h.b16 %v4710
    %v5398 = vunpack.c.l.b16 %v4711
    %v5399 = vunpack.c.h.b16 %v4711
    %v5400 = vunpack.c.l.b16 %v4712
    %v5401 = vunpack.c.h.b16 %v4712
    %v5402 = vunpack.c.l.b16 %v4713
    %v5403 = vunpack.c.h.b16 %v4713
    %v5404 = vunpack.c.l.b16 %v4714
    %v5405 = vunpack.c.h.b16 %v4714
    %v5406 = vunpack.c.l.b16 %v4715
    %v5407 = vunpack.c.h.b16 %v4715
    %v5408 = vunpack.c.l.b16 %v4716
    %v5409 = vunpack.c.h.b16 %v4716
    %v5410 = vunpack.c.l.b16 %v4717
    %v5411 = vunpack.c.h.b16 %v4717
    %v5412 = vunpack.c.l.b16 %v4718
    %v5413 = vunpack.c.h.b16 %v4718
    %v5414 = vunpack.c.l.b16 %v4719
    %v5415 = vunpack.c.h.b16 %v4719
    %v5416 = vunpack.c.l.b16 %v4720
    %v5417 = vunpack.c.h.b16 %v4720
    %v5418 = vunpack.c.l.b16 %v4721
    %v5419 = vunpack.c.h.b16 %v4721
    %v5420 = vunpack.c.l.b16 %v4722
    %v5421 = vunpack.c.h.b16 %v4722
    %v5422 = vunpack.c.l.b16 %v4723
    %v5423 = vunpack.c.h.b16 %v4723
    %v5424 = vunpack.c.l.b16 %v4724
    %v5425 = vunpack.c.h.b16 %v4724
    %v5426 = vunpack.c.l.b16 %v4725
    %v5427 = vunpack.c.h.b16 %v4725
    %v5428 = vunpack.c.l.b16 %v4726
    %v5429 = vunpack.c.h.b16 %v4726
    %v5430 = vunpack.c.l.b16 %v4727
    %v5431 = vunpack.c.h.b16 %v4727
    %v5432 = vunpack.c.l.b16 %v4728
    %v5433 = vunpack.c.h.b16 %v4728
    %v5434 = vunpack.c.l.b16 %v4729
    %v5435 = vunpack.c.h.b16 %v4729
    %v5436 = vunpack.c.l.b16 %v4730
    %v5437 = vunpack.c.h.b16 %v4730
    %v5438 = vunpack.c.l.b16 %v4731
    %v5439 = vunpack.c.h.b16 %v4731
    %v5440 = vunpack.c.l.b16 %v4732
    %v5441 = vunpack.c.h.b16 %v4732
    %v5442 = vunpack.c.l.b16 %v4733
    %v5443 = vunpack.c.h.b16 %v4733
    %v5444 = vunpack.c.l.b16 %v4734
    %v5445 = vunpack.c.h.b16 %v4734
    %v5446 = vunpack.c.l.b16 %v4735
    %v5447 = vunpack.c.h.b16 %v4735
    %v5448 = vunpack.c.l.b16 %v4736
    %v5449 = vunpack.c.h.b16 %v4736
    %v5450 = vunpack.c.l.b16 %v4737
    %v5451 = vunpack.c.h.b16 %v4737
    %v5452 = vunpack.c.l.b16 %v4738
    %v5453 = vunpack.c.h.b16 %v4738
    %v5454 = vunpack.c.l.b16 %v4739
    %v5455 = vunpack.c.h.b16 %v4739
    %v5456 = vunpack.c.l.b16 %v4740
    %v5457 = vunpack.c.h.b16 %v4740
    %v5458 = vunpack.c.l.b16 %v4741
    %v5459 = vunpack.c.h.b16 %v4741
    %v5460 = vunpack.c.l.b16 %v4742
    %v5461 = vunpack.c.h.b16 %v4742
    %v5462 = vunpack.c.l.b16 %v4743
    %v5463 = vunpack.c.h.b16 %v4743
    %v5464 = vunpack.c.l.b16 %v4744
    %v5465 = vunpack.c.h.b16 %v4744
    %v5466 = vunpack.c.l.b16 %v4745
    %v5467 = vunpack.c.h.b16 %v4745
    %v5468 = vunpack.c.l.b16 %v4746
    %v5469 = vunpack.c.h.b16 %v4746
    %v5470 = vunpack.c.l.b16 %v4747
    %v5471 = vunpack.c.h.b16 %v4747
    %v5472 = vunpack.c.l.b16 %v4748
    %v5473 = vunpack.c.h.b16 %v4748
    %v5474 = vunpack.c.l.b16 %v4749
    %v5475 = vunpack.c.h.b16 %v4749
    %v5476 = vunpack.c.l.b16 %v4750
    %v5477 = vunpack.c.h.b16 %v4750
    %v5478 = vunpack.c.l.b16 %v4751
    %v5479 = vunpack.c.h.b16 %v4751
    %v5480 = vunpack.c.l.b16 %v4752
    %v5481 = vunpack.c.h.b16 %v4752
    %v5482 = vunpack.c.l.b16 %v4753
    %v5483 = vunpack.c.h.b16 %v4753
    %v5484 = vunpack.c.l.b16 %v4754
    %v5485 = vunpack.c.h.b16 %v4754
    %v5486 = vunpack.c.l.b16 %v4755
    %v5487 = vunpack.c.h.b16 %v4755
    %v5488 = vunpack.c.l.b16 %v4756
    %v5489 = vunpack.c.h.b16 %v4756
    %v5490 = vunpack.c.l.b16 %v4757
    %v5491 = vunpack.c.h.b16 %v4757
    %v5492 = vunpack.c.l.b16 %v4758
    %v5493 = vunpack.c.h.b16 %v4758
    %v5494 = vunpack.c.l.b16 %v4759
    %v5495 = vunpack.c.h.b16 %v4759
    %v5496 = vunpack.c.l.b16 %v4760
    %v5497 = vunpack.c.h.b16 %v4760
    %v5498 = vunpack.c.l.b16 %v4761
    %v5499 = vunpack.c.h.b16 %v4761
    %v5500 = vunpack.c.l.b16 %v4762
    %v5501 = vunpack.c.h.b16 %v4762
    %v5502 = vunpack.c.l.b16 %v4763
    %v5503 = vunpack.c.h.b16 %v4763
    %v5504 = vunpack.c.l.b16 %v4764
    %v5505 = vunpack.c.h.b16 %v4764
    %v5506 = vunpack.c.l.b16 %v4765
    %v5507 = vunpack.c.h.b16 %v4765
    %v5508 = vunpack.c.l.b16 %v4766
    %v5509 = vunpack.c.h.b16 %v4766
    %v5510 = vunpack.c.l.b16 %v4767
    %v5511 = vunpack.c.h.b16 %v4767
    %v5512 = vunpack.c.l.b16 %v4768
    %v5513 = vunpack.c.h.b16 %v4768
    %v5514 = vunpack.c.l.b16 %v4769
    %v5515 = vunpack.c.h.b16 %v4769
    %v5516 = vunpack.c.l.b16 %v4770
    %v5517 = vunpack.c.h.b16 %v4770
    %v5518 = vunpack.c.l.b16 %v4771
    %v5519 = vunpack.c.h.b16 %v4771
    %v5520 = vunpack.c.l.b16 %v4772
    %v5521 = vunpack.c.h.b16 %v4772
    %v5522 = vunpack.c.l.b16 %v4773
    %v5523 = vunpack.c.h.b16 %v4773
    %v5524 = vunpack.c.l.b16 %v4774
    %v5525 = vunpack.c.h.b16 %v4774
    %v5526 = vunpack.c.l.b16 %v4775
    %v5527 = vunpack.c.h.b16 %v4775
    %v5528 = vunpack.c.l.b16 %v4776
    %v5529 = vunpack.c.h.b16 %v4776
    %v5530 = vunpack.c.l.b16 %v4777
    %v5531 = vunpack.c.h.b16 %v4777
    %v5532 = vunpack.c.l.b16 %v4778
    %v5533 = vunpack.c.h.b16 %v4778
    %v5534 = vunpack.c.l.b16 %v4779
    %v5535 = vunpack.c.h.b16 %v4779
    %v5536 = vunpack.c.l.b16 %v4780
    %v5537 = vunpack.c.h.b16 %v4780
    %v5538 = vunpack.c.l.b16 %v4781
    %v5539 = vunpack.c.h.b16 %v4781
    %v5540 = vunpack.c.l.b16 %v4782
    %v5541 = vunpack.c.h.b16 %v4782
    %v5542 = vunpack.c.l.b16 %v4783
    %v5543 = vunpack.c.h.b16 %v4783
    %v5544 = vunpack.c.l.b16 %v4784
    %v5545 = vunpack.c.h.b16 %v4784
    %v5546 = vunpack.c.l.b16 %v4785
    %v5547 = vunpack.c.h.b16 %v4785
    %v5548 = vunpack.c.l.b16 %v4786
    %v5549 = vunpack.c.h.b16 %v4786
    %v5550 = vunpack.c.l.b16 %v4787
    %v5551 = vunpack.c.h.b16 %v4787
    %v5552 = vunpack.c.l.b16 %v4788
    %v5553 = vunpack.c.h.b16 %v4788
    %v5554 = vunpack.c.l.b16 %v4789
    %v5555 = vunpack.c.h.b16 %v4789
    %v5556 = vunpack.c.l.b16 %v4790
    %v5557 = vunpack.c.h.b16 %v4790
    %v5558 = vunpack.c.l.b16 %v4791
    %v5559 = vunpack.c.h.b16 %v4791
    %v5560 = vunpack.c.l.b16 %v4792
    %v5561 = vunpack.c.h.b16 %v4792
    %v5562 = vunpack.c.l.b16 %v4793
    %v5563 = vunpack.c.h.b16 %v4793
    %v5564 = vunpack.c.l.b16 %v4794
    %v5565 = vunpack.c.h.b16 %v4794
    %v5566 = vunpack.c.l.b16 %v4795
    %v5567 = vunpack.c.h.b16 %v4795
    %v5568 = vunpack.c.l.b16 %v4796
    %v5569 = vunpack.c.h.b16 %v4796
    %v5570 = vunpack.c.l.b16 %v4797
    %v5571 = vunpack.c.h.b16 %v4797
    %v5572 = vunpack.c.l.b16 %v4798
    %v5573 = vunpack.c.h.b16 %v4798
    %v5574 = vunpack.c.l.b16 %v4799
    %v5575 = vunpack.c.h.b16 %v4799
    %v5576 = vunpack.c.l.b16 %v4800
    %v5577 = vunpack.c.h.b16 %v4800
    %v5578 = vunpack.c.l.b16 %v4801
    %v5579 = vunpack.c.h.b16 %v4801
    %v5580 = vunpack.c.l.b16 %v4802
    %v5581 = vunpack.c.h.b16 %v4802
    %v5582 = vunpack.c.l.b16 %v4803
    %v5583 = vunpack.c.h.b16 %v4803
    %v5584 = vunpack.c.l.b16 %v4804
    %v5585 = vunpack.c.h.b16 %v4804
    %v5586 = vunpack.c.l.b16 %v4805
    %v5587 = vunpack.c.h.b16 %v4805
    %v5588 = vunpack.c.l.b16 %v4806
    %v5589 = vunpack.c.h.b16 %v4806
    %v5590 = vunpack.c.l.b16 %v4807
    %v5591 = vunpack.c.h.b16 %v4807
    %v5592 = vunpack.c.l.b16 %v4808
    %v5593 = vunpack.c.h.b16 %v4808
    %v5594 = vunpack.c.l.b16 %v4809
    %v5595 = vunpack.c.h.b16 %v4809
    %v5596 = vunpack.c.l.b16 %v4810
    %v5597 = vunpack.c.h.b16 %v4810
    %v5598 = vunpack.c.l.b16 %v4811
    %v5599 = vunpack.c.h.b16 %v4811
    %v5600 = vunpack.c.l.b16 %v4812
    %v5601 = vunpack.c.h.b16 %v4812
    %v5602 = vunpack.c.l.b16 %v4813
    %v5603 = vunpack.c.h.b16 %v4813
    %v5604 = vunpack.c.l.b16 %v4814
    %v5605 = vunpack.c.h.b16 %v4814
    %v5606 = vunpack.c.l.b16 %v4815
    %v5607 = vunpack.c.h.b16 %v4815
    %v5608 = vunpack.c.l.b16 %v4816
    %v5609 = vunpack.c.h.b16 %v4816
    %v5610 = vunpack.c.l.b16 %v4817
    %v5611 = vunpack.c.h.b16 %v4817
    %v5612 = vunpack.c.l.b16 %v4818
    %v5613 = vunpack.c.h.b16 %v4818
    %v5614 = vunpack.c.l.b16 %v4819
    %v5615 = vunpack.c.h.b16 %v4819
    %v5616 = vunpack.c.l.b16 %v4820
    %v5617 = vunpack.c.h.b16 %v4820
    %v5618 = vunpack.c.l.b16 %v4821
    %v5619 = vunpack.c.h.b16 %v4821
    %v5620 = vunpack.c.l.b16 %v4822
    %v5621 = vunpack.c.h.b16 %v4822
    %v5622 = vunpack.c.l.b16 %v4823
    %v5623 = vunpack.c.h.b16 %v4823
    %v5624 = vunpack.c.l.b16 %v4824
    %v5625 = vunpack.c.h.b16 %v4824
    %v5626 = vunpack.c.l.b16 %v4825
    %v5627 = vunpack.c.h.b16 %v4825
    %v5628 = vunpack.c.l.b16 %v4826
    %v5629 = vunpack.c.h.b16 %v4826
    %v5630 = vunpack.c.l.b16 %v4827
    %v5631 = vunpack.c.h.b16 %v4827
    %v5632 = vunpack.c.l.b16 %v4828
    %v5633 = vunpack.c.h.b16 %v4828
    %v5634 = vunpack.c.l.b16 %v4829
    %v5635 = vunpack.c.h.b16 %v4829
    %v5636 = vunpack.c.l.b16 %v4830
    %v5637 = vunpack.c.h.b16 %v4830
    %v5638 = vunpack.c.l.b16 %v4831
    %v5639 = vunpack.c.h.b16 %v4831
    %v5640 = vunpack.c.l.b16 %v4832
    %v5641 = vunpack.c.h.b16 %v4832
    %v5642 = vunpack.c.l.b16 %v4833
    %v5643 = vunpack.c.h.b16 %v4833
    %v5644 = vunpack.c.l.b16 %v4834
    %v5645 = vunpack.c.h.b16 %v4834
    %v5646 = vpack.c.b16 %v5142, %v5134
    %v5647 = vpack.c.b16 %v5143, %v5135
    %v5648 = vpack.c.b16 %v5144, %v5136
    %v5649 = vpack.c.b16 %v5145, %v5137
    %v5650 = vpack.c.b16 %v5146, %v5138
    %v5651 = vpack.c.b16 %v5147, %v5139
    %v5652 = vpack.c.b16 %v5148, %v5140
    %v5653 = vpack.c.b16 %v5149, %v5141
    %v5654 = vpack.c.b16 %v5158, %v5150
    %v5655 = vpack.c.b16 %v5159, %v5151
    %v5656 = vpack.c.b16 %v5160, %v5152
    %v5657 = vpack.c.b16 %v5161, %v5153
    %v5658 = vpack.c.b16 %v5162, %v5154
    %v5659 = vpack.c.b16 %v5163, %v5155
    %v5660 = vpack.c.b16 %v5164, %v5156
    %v5661 = vpack.c.b16 %v5165, %v5157
    %v5662 = vpack.c.b16 %v5174, %v5166
    %v5663 = vpack.c.b16 %v5175, %v5167
    %v5664 = vpack.c.b16 %v5176, %v5168
    %v5665 = vpack.c.b16 %v5177, %v5169
    %v5666 = vpack.c.b16 %v5178, %v5170
    %v5667 = vpack.c.b16 %v5179, %v5171
    %v5668 = vpack.c.b16 %v5180, %v5172
    %v5669 = vpack.c.b16 %v5181, %v5173
    %v5670 = vpack.c.b16 %v5190, %v5182
    %v5671 = vpack.c.b16 %v5191, %v5183
    %v5672 = vpack.c.b16 %v5192, %v5184
    %v5673 = vpack.c.b16 %v5193, %v5185
    %v5674 = vpack.c.b16 %v5194, %v5186
    %v5675 = vpack.c.b16 %v5195, %v5187
    %v5676 = vpack.c.b16 %v5196, %v5188
    %v5677 = vpack.c.b16 %v5197, %v5189
    %v5678 = vpack.c.b16 %v5206, %v5198
    %v5679 = vpack.c.b16 %v5207, %v5199
    %v5680 = vpack.c.b16 %v5208, %v5200
    %v5681 = vpack.c.b16 %v5209, %v5201
    %v5682 = vpack.c.b16 %v5210, %v5202
    %v5683 = vpack.c.b16 %v5211, %v5203
    %v5684 = vpack.c.b16 %v5212, %v5204
    %v5685 = vpack.c.b16 %v5213, %v5205
    %v5686 = vpack.c.b16 %v5222, %v5214
    %v5687 = vpack.c.b16 %v5223, %v5215
    %v5688 = vpack.c.b16 %v5224, %v5216
    %v5689 = vpack.c.b16 %v5225, %v5217
    %v5690 = vpack.c.b16 %v5226, %v5218
    %v5691 = vpack.c.b16 %v5227, %v5219
    %v5692 = vpack.c.b16 %v5228, %v5220
    %v5693 = vpack.c.b16 %v5229, %v5221
    %v5694 = vpack.c.b16 %v5238, %v5230
    %v5695 = vpack.c.b16 %v5239, %v5231
    %v5696 = vpack.c.b16 %v5240, %v5232
    %v5697 = vpack.c.b16 %v5241, %v5233
    %v5698 = vpack.c.b16 %v5242, %v5234
    %v5699 = vpack.c.b16 %v5243, %v5235
    %v5700 = vpack.c.b16 %v5244, %v5236
    %v5701 = vpack.c.b16 %v5245, %v5237
    %v5702 = vpack.c.b16 %v5254, %v5246
    %v5703 = vpack.c.b16 %v5255, %v5247
    %v5704 = vpack.c.b16 %v5256, %v5248
    %v5705 = vpack.c.b16 %v5257, %v5249
    %v5706 = vpack.c.b16 %v5258, %v5250
    %v5707 = vpack.c.b16 %v5259, %v5251
    %v5708 = vpack.c.b16 %v5260, %v5252
    %v5709 = vpack.c.b16 %v5261, %v5253
    %v5710 = vpack.c.b16 %v5270, %v5262
    %v5711 = vpack.c.b16 %v5271, %v5263
    %v5712 = vpack.c.b16 %v5272, %v5264
    %v5713 = vpack.c.b16 %v5273, %v5265
    %v5714 = vpack.c.b16 %v5274, %v5266
    %v5715 = vpack.c.b16 %v5275, %v5267
    %v5716 = vpack.c.b16 %v5276, %v5268
    %v5717 = vpack.c.b16 %v5277, %v5269
    %v5718 = vpack.c.b16 %v5286, %v5278
    %v5719 = vpack.c.b16 %v5287, %v5279
    %v5720 = vpack.c.b16 %v5288, %v5280
    %v5721 = vpack.c.b16 %v5289, %v5281
    %v5722 = vpack.c.b16 %v5290, %v5282
    %v5723 = vpack.c.b16 %v5291, %v5283
    %v5724 = vpack.c.b16 %v5292, %v5284
    %v5725 = vpack.c.b16 %v5293, %v5285
    %v5726 = vpack.c.b16 %v5302, %v5294
    %v5727 = vpack.c.b16 %v5303, %v5295
    %v5728 = vpack.c.b16 %v5304, %v5296
    %v5729 = vpack.c.b16 %v5305, %v5297
    %v5730 = vpack.c.b16 %v5306, %v5298
    %v5731 = vpack.c.b16 %v5307, %v5299
    %v5732 = vpack.c.b16 %v5308, %v5300
    %v5733 = vpack.c.b16 %v5309, %v5301
    %v5734 = vpack.c.b16 %v5318, %v5310
    %v5735 = vpack.c.b16 %v5319, %v5311
    %v5736 = vpack.c.b16 %v5320, %v5312
    %v5737 = vpack.c.b16 %v5321, %v5313
    %v5738 = vpack.c.b16 %v5322, %v5314
    %v5739 = vpack.c.b16 %v5323, %v5315
    %v5740 = vpack.c.b16 %v5324, %v5316
    %v5741 = vpack.c.b16 %v5325, %v5317
    %v5742 = vpack.c.b16 %v5334, %v5326
    %v5743 = vpack.c.b16 %v5335, %v5327
    %v5744 = vpack.c.b16 %v5336, %v5328
    %v5745 = vpack.c.b16 %v5337, %v5329
    %v5746 = vpack.c.b16 %v5338, %v5330
    %v5747 = vpack.c.b16 %v5339, %v5331
    %v5748 = vpack.c.b16 %v5340, %v5332
    %v5749 = vpack.c.b16 %v5341, %v5333
    %v5750 = vpack.c.b16 %v5350, %v5342
    %v5751 = vpack.c.b16 %v5351, %v5343
    %v5752 = vpack.c.b16 %v5352, %v5344
    %v5753 = vpack.c.b16 %v5353, %v5345
    %v5754 = vpack.c.b16 %v5354, %v5346
    %v5755 = vpack.c.b16 %v5355, %v5347
    %v5756 = vpack.c.b16 %v5356, %v5348
    %v5757 = vpack.c.b16 %v5357, %v5349
    %v5758 = vpack.c.b16 %v5366, %v5358
    %v5759 = vpack.c.b16 %v5367, %v5359
    %v5760 = vpack.c.b16 %v5368, %v5360
    %v5761 = vpack.c.b16 %v5369, %v5361
    %v5762 = vpack.c.b16 %v5370, %v5362
    %v5763 = vpack.c.b16 %v5371, %v5363
    %v5764 = vpack.c.b16 %v5372, %v5364
    %v5765 = vpack.c.b16 %v5373, %v5365
    %v5766 = vpack.c.b16 %v5382, %v5374
    %v5767 = vpack.c.b16 %v5383, %v5375
    %v5768 = vpack.c.b16 %v5384, %v5376
    %v5769 = vpack.c.b16 %v5385, %v5377
    %v5770 = vpack.c.b16 %v5386, %v5378
    %v5771 = vpack.c.b16 %v5387, %v5379
    %v5772 = vpack.c.b16 %v5388, %v5380
    %v5773 = vpack.c.b16 %v5389, %v5381
    %v5774 = vpack.c.b16 %v5398, %v5390
    %v5775 = vpack.c.b16 %v5399, %v5391
    %v5776 = vpack.c.b16 %v5400, %v5392
    %v5777 = vpack.c.b16 %v5401, %v5393
    %v5778 = vpack.c.b16 %v5402, %v5394
    %v5779 = vpack.c.b16 %v5403, %v5395
    %v5780 = vpack.c.b16 %v5404, %v5396
    %v5781 = vpack.c.b16 %v5405, %v5397
    %v5782 = vpack.c.b16 %v5414, %v5406
    %v5783 = vpack.c.b16 %v5415, %v5407
    %v5784 = vpack.c.b16 %v5416, %v5408
    %v5785 = vpack.c.b16 %v5417, %v5409
    %v5786 = vpack.c.b16 %v5418, %v5410
    %v5787 = vpack.c.b16 %v5419, %v5411
    %v5788 = vpack.c.b16 %v5420, %v5412
    %v5789 = vpack.c.b16 %v5421, %v5413
    %v5790 = vpack.c.b16 %v5430, %v5422
    %v5791 = vpack.c.b16 %v5431, %v5423
    %v5792 = vpack.c.b16 %v5432, %v5424
    %v5793 = vpack.c.b16 %v5433, %v5425
    %v5794 = vpack.c.b16 %v5434, %v5426
    %v5795 = vpack.c.b16 %v5435, %v5427
    %v5796 = vpack.c.b16 %v5436, %v5428
    %v5797 = vpack.c.b16 %v5437, %v5429
    %v5798 = vpack.c.b16 %v5446, %v5438
    %v5799 = vpack.c.b16 %v5447, %v5439
    %v5800 = vpack.c.b16 %v5448, %v5440
    %v5801 = vpack.c.b16 %v5449, %v5441
    %v5802 = vpack.c.b16 %v5450, %v5442
    %v5803 = vpack.c.b16 %v5451, %v5443
    %v5804 = vpack.c.b16 %v5452, %v5444
    %v5805 = vpack.c.b16 %v5453, %v5445
    %v5806 = vpack.c.b16 %v5462, %v5454
    %v5807 = vpack.c.b16 %v5463, %v5455
    %v5808 = vpack.c.b16 %v5464, %v5456
    %v5809 = vpack.c.b16 %v5465, %v5457
    %v5810 = vpack.c.b16 %v5466, %v5458
    %v5811 = vpack.c.b16 %v5467, %v5459
    %v5812 = vpack.c.b16 %v5468, %v5460
    %v5813 = vpack.c.b16 %v5469, %v5461
    %v5814 = vpack.c.b16 %v5478, %v5470
    %v5815 = vpack.c.b16 %v5479, %v5471
    %v5816 = vpack.c.b16 %v5480, %v5472
    %v5817 = vpack.c.b16 %v5481, %v5473
    %v5818 = vpack.c.b16 %v5482, %v5474
    %v5819 = vpack.c.b16 %v5483, %v5475
    %v5820 = vpack.c.b16 %v5484, %v5476
    %v5821 = vpack.c.b16 %v5485, %v5477
    %v5822 = vpack.c.b16 %v5494, %v5486
    %v5823 = vpack.c.b16 %v5495, %v5487
    %v5824 = vpack.c.b16 %v5496, %v5488
    %v5825 = vpack.c.b16 %v5497, %v5489
    %v5826 = vpack.c.b16 %v5498, %v5490
    %v5827 = vpack.c.b16 %v5499, %v5491
    %v5828 = vpack.c.b16 %v5500, %v5492
    %v5829 = vpack.c.b16 %v5501, %v5493
    %v5830 = vpack.c.b16 %v5510, %v5502
    %v5831 = vpack.c.b16 %v5511, %v5503
    %v5832 = vpack.c.b16 %v5512, %v5504
    %v5833 = vpack.c.b16 %v5513, %v5505
    %v5834 = vpack.c.b16 %v5514, %v5506
    %v5835 = vpack.c.b16 %v5515, %v5507
    %v5836 = vpack.c.b16 %v5516, %v5508
    %v5837 = vpack.c.b16 %v5517, %v5509
    %v5838 = vpack.c.b16 %v5526, %v5518
    %v5839 = vpack.c.b16 %v5527, %v5519
    %v5840 = vpack.c.b16 %v5528, %v5520
    %v5841 = vpack.c.b16 %v5529, %v5521
    %v5842 = vpack.c.b16 %v5530, %v5522
    %v5843 = vpack.c.b16 %v5531, %v5523
    %v5844 = vpack.c.b16 %v5532, %v5524
    %v5845 = vpack.c.b16 %v5533, %v5525
    %v5846 = vpack.c.b16 %v5542, %v5534
    %v5847 = vpack.c.b16 %v5543, %v5535
    %v5848 = vpack.c.b16 %v5544, %v5536
    %v5849 = vpack.c.b16 %v5545, %v5537
    %v5850 = vpack.c.b16 %v5546, %v5538
    %v5851 = vpack.c.b16 %v5547, %v5539
    %v5852 = vpack.c.b16 %v5548, %v5540
    %v5853 = vpack.c.b16 %v5549, %v5541
    %v5854 = vpack.c.b16 %v5558, %v5550
    %v5855 = vpack.c.b16 %v5559, %v5551
    %v5856 = vpack.c.b16 %v5560, %v5552
    %v5857 = vpack.c.b16 %v5561, %v5553
    %v5858 = vpack.c.b16 %v5562, %v5554
    %v5859 = vpack.c.b16 %v5563, %v5555
    %v5860 = vpack.c.b16 %v5564, %v5556
    %v5861 = vpack.c.b16 %v5565, %v5557
    %v5862 = vpack.c.b16 %v5574, %v5566
    %v5863 = vpack.c.b16 %v5575, %v5567
    %v5864 = vpack.c.b16 %v5576, %v5568
    %v5865 = vpack.c.b16 %v5577, %v5569
    %v5866 = vpack.c.b16 %v5578, %v5570
    %v5867 = vpack.c.b16 %v5579, %v5571
    %v5868 = vpack.c.b16 %v5580, %v5572
    %v5869 = vpack.c.b16 %v5581, %v5573
    %v5870 = vpack.c.b16 %v5590, %v5582
    %v5871 = vpack.c.b16 %v5591, %v5583
    %v5872 = vpack.c.b16 %v5592, %v5584
    %v5873 = vpack.c.b16 %v5593, %v5585
    %v5874 = vpack.c.b16 %v5594, %v5586
    %v5875 = vpack.c.b16 %v5595, %v5587
    %v5876 = vpack.c.b16 %v5596, %v5588
    %v5877 = vpack.c.b16 %v5597, %v5589
    %v5878 = vpack.c.b16 %v5606, %v5598
    %v5879 = vpack.c.b16 %v5607, %v5599
    %v5880 = vpack.c.b16 %v5608, %v5600
    %v5881 = vpack.c.b16 %v5609, %v5601
    %v5882 = vpack.c.b16 %v5610, %v5602
    %v5883 = vpack.c.b16 %v5611, %v5603
    %v5884 = vpack.c.b16 %v5612, %v5604
    %v5885 = vpack.c.b16 %v5613, %v5605
    %v5886 = vpack.c.b16 %v5622, %v5614
    %v5887 = vpack.c.b16 %v5623, %v5615
    %v5888 = vpack.c.b16 %v5624, %v5616
    %v5889 = vpack.c.b16 %v5625, %v5617
    %v5890 = vpack.c.b16 %v5626, %v5618
    %v5891 = vpack.c.b16 %v5627, %v5619
    %v5892 = vpack.c.b16 %v5628, %v5620
    %v5893 = vpack.c.b16 %v5629, %v5621
    %v5894 = vpack.c.b16 %v5638, %v5630
    %v5895 = vpack.c.b16 %v5639, %v5631
    %v5896 = vpack.c.b16 %v5640, %v5632
    %v5897 = vpack.c.b16 %v5641, %v5633
    %v5898 = vpack.c.b16 %v5642, %v5634
    %v5899 = vpack.c.b16 %v5643, %v5635
    %v5900 = vpack.c.b16 %v5644, %v5636
    %v5901 = vpack.c.b16 %v5645, %v5637
    %6158 = vmatprep.subr.bf16.mxu0 %v5703
    %6159 = vmatpush1.bf16.msra.mxu0 %v5702
    %6160 = vmatprep.subr.bf16.mxu0 %v5695
    %6161 = vmatpush1.bf16.msra.mxu0 %v5694
    %6162 = vmatprep.subr.bf16.mxu0 %v5687
    %6163 = vmatpush1.bf16.msra.mxu0 %v5686
    %6164 = vmatprep.subr.bf16.mxu0 %v5679
    %6165 = vmatpush1.bf16.msra.mxu0 %v5678
    %6166 = vmatprep.subr.bf16.mxu0 %v5671
    %6167 = vmatpush1.bf16.msra.mxu0 %v5670
    %6168 = vmatprep.subr.bf16.mxu0 %v5663
    %6169 = vmatpush1.bf16.msra.mxu0 %v5662
    %6170 = vmatprep.subr.bf16.mxu0 %v5655
    %6171 = vmatpush1.bf16.msra.mxu0 %v5654
    %6172 = vmatprep.subr.bf16.mxu0 %v5647
    %6173 = vmatpush1.bf16.msra.mxu0 %v5646
    %6174 = vmatprep.subr.bf16.mxu0 %v5767
    %6175 = vmatpush2.bf16.msra.mxu0 %v5766
    %6176 = vmatprep.subr.bf16.mxu0 %v5759
    %6177 = vmatpush2.bf16.msra.mxu0 %v5758
    %6178 = vmatprep.subr.bf16.mxu0 %v5751
    %6179 = vmatpush2.bf16.msra.mxu0 %v5750
    %6180 = vmatprep.subr.bf16.mxu0 %v5743
    %6181 = vmatpush2.bf16.msra.mxu0 %v5742
    %6182 = vmatprep.subr.bf16.mxu0 %v5735
    %6183 = vmatpush2.bf16.msra.mxu0 %v5734
    %6184 = vmatprep.subr.bf16.mxu0 %v5727
    %6185 = vmatpush2.bf16.msra.mxu0 %v5726
    %6186 = vmatprep.subr.bf16.mxu0 %v5719
    %6187 = vmatpush2.bf16.msra.mxu0 %v5718
    %6188 = vmatprep.subr.bf16.mxu0 %v5711
    %6189 = vmatpush2.bf16.msra.mxu0 %v5710
    %6190 = vmatprep.mubr.bf16.mxu0 %v177
    %6191 = vmatmul.mubr.bf16.gmra.mxu0 %v176
    %v6192 = vpop.f32.mrf.mxu0
    %v6193 = vadd.f32 %v4841, %v6192
    %v6194 = vpop.f32.mrf.mxu0
    %v6195 = vadd.f32 %v4845, %v6194
    %v6196 = vpop.f32.mrf.mxu0
    %v6197 = vpop.f32.mrf.mxu0
    %6198 = vdwg.mxu0
    %6199 = vmatprep.subr.bf16.mxu0 %v5831
    %6200 = vmatpush1.bf16.msra.mxu0 %v5830
    %6201 = vmatprep.subr.bf16.mxu0 %v5823
    %6202 = vmatpush1.bf16.msra.mxu0 %v5822
    %6203 = vmatprep.subr.bf16.mxu0 %v5815
    %6204 = vmatpush1.bf16.msra.mxu0 %v5814
    %6205 = vmatprep.subr.bf16.mxu0 %v5807
    %6206 = vmatpush1.bf16.msra.mxu0 %v5806
    %6207 = vmatprep.subr.bf16.mxu0 %v5799
    %6208 = vmatpush1.bf16.msra.mxu0 %v5798
    %6209 = vmatprep.subr.bf16.mxu0 %v5791
    %6210 = vmatpush1.bf16.msra.mxu0 %v5790
    %6211 = vmatprep.subr.bf16.mxu0 %v5783
    %6212 = vmatpush1.bf16.msra.mxu0 %v5782
    %6213 = vmatprep.subr.bf16.mxu0 %v5775
    %6214 = vmatpush1.bf16.msra.mxu0 %v5774
    %6215 = vmatprep.subr.bf16.mxu0 %v5895
    %6216 = vmatpush2.bf16.msra.mxu0 %v5894
    %6217 = vmatprep.subr.bf16.mxu0 %v5887
    %6218 = vmatpush2.bf16.msra.mxu0 %v5886
    %6219 = vmatprep.subr.bf16.mxu0 %v5879
    %6220 = vmatpush2.bf16.msra.mxu0 %v5878
    %6221 = vmatprep.subr.bf16.mxu0 %v5871
    %6222 = vmatpush2.bf16.msra.mxu0 %v5870
    %6223 = vmatprep.subr.bf16.mxu0 %v5863
    %6224 = vmatpush2.bf16.msra.mxu0 %v5862
    %6225 = vmatprep.subr.bf16.mxu0 %v5855
    %6226 = vmatpush2.bf16.msra.mxu0 %v5854
    %6227 = vmatprep.subr.bf16.mxu0 %v5847
    %6228 = vmatpush2.bf16.msra.mxu0 %v5846
    %6229 = vmatprep.subr.bf16.mxu0 %v5839
    %6230 = vmatpush2.bf16.msra.mxu0 %v5838
    %6231 = vmatprep.mubr.bf16.mxu0 %v190
    %6232 = vmatmul.mubr.bf16.gmra.mxu0 %v189
    %v6233 = vpop.f32.mrf.mxu0
    %v6234 = vadd.f32 %v6193, %v6233
    %v6235 = vpop.f32.mrf.mxu0
    %v6236 = vadd.f32 %v6195, %v6235
    %v6237 = vpop.f32.mrf.mxu0
    %v6238 = vpop.f32.mrf.mxu0
    %6239 = vdwg.mxu0
    %6240 = vmatprep.subr.bf16.mxu0 %v5705
    %6241 = vmatpush1.bf16.msra.mxu0 %v5704
    %6242 = vmatprep.subr.bf16.mxu0 %v5697
    %6243 = vmatpush1.bf16.msra.mxu0 %v5696
    %6244 = vmatprep.subr.bf16.mxu0 %v5689
    %6245 = vmatpush1.bf16.msra.mxu0 %v5688
    %6246 = vmatprep.subr.bf16.mxu0 %v5681
    %6247 = vmatpush1.bf16.msra.mxu0 %v5680
    %6248 = vmatprep.subr.bf16.mxu0 %v5673
    %6249 = vmatpush1.bf16.msra.mxu0 %v5672
    %6250 = vmatprep.subr.bf16.mxu0 %v5665
    %6251 = vmatpush1.bf16.msra.mxu0 %v5664
    %6252 = vmatprep.subr.bf16.mxu0 %v5657
    %6253 = vmatpush1.bf16.msra.mxu0 %v5656
    %6254 = vmatprep.subr.bf16.mxu0 %v5649
    %6255 = vmatpush1.bf16.msra.mxu0 %v5648
    %6256 = vmatprep.subr.bf16.mxu0 %v5769
    %6257 = vmatpush2.bf16.msra.mxu0 %v5768
    %6258 = vmatprep.subr.bf16.mxu0 %v5761
    %6259 = vmatpush2.bf16.msra.mxu0 %v5760
    %6260 = vmatprep.subr.bf16.mxu0 %v5753
    %6261 = vmatpush2.bf16.msra.mxu0 %v5752
    %6262 = vmatprep.subr.bf16.mxu0 %v5745
    %6263 = vmatpush2.bf16.msra.mxu0 %v5744
    %6264 = vmatprep.subr.bf16.mxu0 %v5737
    %6265 = vmatpush2.bf16.msra.mxu0 %v5736
    %6266 = vmatprep.subr.bf16.mxu0 %v5729
    %6267 = vmatpush2.bf16.msra.mxu0 %v5728
    %6268 = vmatprep.subr.bf16.mxu0 %v5721
    %6269 = vmatpush2.bf16.msra.mxu0 %v5720
    %6270 = vmatprep.subr.bf16.mxu0 %v5713
    %6271 = vmatpush2.bf16.msra.mxu0 %v5712
    %6272 = vmatprep.mubr.bf16.mxu0 %v177
    %6273 = vmatmul.mubr.bf16.gmra.mxu0 %v176
    %v6274 = vpop.f32.mrf.mxu0
    %v6275 = vadd.f32 %v4849, %v6274
    %v6276 = vpop.f32.mrf.mxu0
    %v6277 = vadd.f32 %v4853, %v6276
    %v6278 = vpop.f32.mrf.mxu0
    %v6279 = vpop.f32.mrf.mxu0
    %6280 = vdwg.mxu0
    %6281 = vmatprep.subr.bf16.mxu0 %v5833
    %6282 = vmatpush1.bf16.msra.mxu0 %v5832
    %6283 = vmatprep.subr.bf16.mxu0 %v5825
    %6284 = vmatpush1.bf16.msra.mxu0 %v5824
    %6285 = vmatprep.subr.bf16.mxu0 %v5817
    %6286 = vmatpush1.bf16.msra.mxu0 %v5816
    %6287 = vmatprep.subr.bf16.mxu0 %v5809
    %6288 = vmatpush1.bf16.msra.mxu0 %v5808
    %6289 = vmatprep.subr.bf16.mxu0 %v5801
    %6290 = vmatpush1.bf16.msra.mxu0 %v5800
    %6291 = vmatprep.subr.bf16.mxu0 %v5793
    %6292 = vmatpush1.bf16.msra.mxu0 %v5792
    %6293 = vmatprep.subr.bf16.mxu0 %v5785
    %6294 = vmatpush1.bf16.msra.mxu0 %v5784
    %6295 = vmatprep.subr.bf16.mxu0 %v5777
    %6296 = vmatpush1.bf16.msra.mxu0 %v5776
    %6297 = vmatprep.subr.bf16.mxu0 %v5897
    %6298 = vmatpush2.bf16.msra.mxu0 %v5896
    %6299 = vmatprep.subr.bf16.mxu0 %v5889
    %6300 = vmatpush2.bf16.msra.mxu0 %v5888
    %6301 = vmatprep.subr.bf16.mxu0 %v5881
    %6302 = vmatpush2.bf16.msra.mxu0 %v5880
    %6303 = vmatprep.subr.bf16.mxu0 %v5873
    %6304 = vmatpush2.bf16.msra.mxu0 %v5872
    %6305 = vmatprep.subr.bf16.mxu0 %v5865
    %6306 = vmatpush2.bf16.msra.mxu0 %v5864
    %6307 = vmatprep.subr.bf16.mxu0 %v5857
    %6308 = vmatpush2.bf16.msra.mxu0 %v5856
    %6309 = vmatprep.subr.bf16.mxu0 %v5849
    %6310 = vmatpush2.bf16.msra.mxu0 %v5848
    %6311 = vmatprep.subr.bf16.mxu0 %v5841
    %6312 = vmatpush2.bf16.msra.mxu0 %v5840
    %6313 = vmatprep.mubr.bf16.mxu0 %v190
    %6314 = vmatmul.mubr.bf16.gmra.mxu0 %v189
    %v6315 = vpop.f32.mrf.mxu0
    %v6316 = vadd.f32 %v6275, %v6315
    %v6317 = vpop.f32.mrf.mxu0
    %v6318 = vadd.f32 %v6277, %v6317
    %v6319 = vpop.f32.mrf.mxu0
    %v6320 = vpop.f32.mrf.mxu0
    %6321 = vdwg.mxu0
    %6322 = vmatprep.subr.bf16.mxu0 %v5707
    %6323 = vmatpush1.bf16.msra.mxu0 %v5706
    %6324 = vmatprep.subr.bf16.mxu0 %v5699
    %6325 = vmatpush1.bf16.msra.mxu0 %v5698
    %6326 = vmatprep.subr.bf16.mxu0 %v5691
    %6327 = vmatpush1.bf16.msra.mxu0 %v5690
    %6328 = vmatprep.subr.bf16.mxu0 %v5683
    %6329 = vmatpush1.bf16.msra.mxu0 %v5682
    %6330 = vmatprep.subr.bf16.mxu0 %v5675
    %6331 = vmatpush1.bf16.msra.mxu0 %v5674
    %6332 = vmatprep.subr.bf16.mxu0 %v5667
    %6333 = vmatpush1.bf16.msra.mxu0 %v5666
    %6334 = vmatprep.subr.bf16.mxu0 %v5659
    %6335 = vmatpush1.bf16.msra.mxu0 %v5658
    %6336 = vmatprep.subr.bf16.mxu0 %v5651
    %6337 = vmatpush1.bf16.msra.mxu0 %v5650
    %6338 = vmatprep.subr.bf16.mxu0 %v5771
    %6339 = vmatpush2.bf16.msra.mxu0 %v5770
    %6340 = vmatprep.subr.bf16.mxu0 %v5763
    %6341 = vmatpush2.bf16.msra.mxu0 %v5762
    %6342 = vmatprep.subr.bf16.mxu0 %v5755
    %6343 = vmatpush2.bf16.msra.mxu0 %v5754
    %6344 = vmatprep.subr.bf16.mxu0 %v5747
    %6345 = vmatpush2.bf16.msra.mxu0 %v5746
    %6346 = vmatprep.subr.bf16.mxu0 %v5739
    %6347 = vmatpush2.bf16.msra.mxu0 %v5738
    %6348 = vmatprep.subr.bf16.mxu0 %v5731
    %6349 = vmatpush2.bf16.msra.mxu0 %v5730
    %6350 = vmatprep.subr.bf16.mxu0 %v5723
    %6351 = vmatpush2.bf16.msra.mxu0 %v5722
    %6352 = vmatprep.subr.bf16.mxu0 %v5715
    %6353 = vmatpush2.bf16.msra.mxu0 %v5714
    %6354 = vmatprep.mubr.bf16.mxu0 %v177
    %6355 = vmatmul.mubr.bf16.gmra.mxu0 %v176
    %v6356 = vpop.f32.mrf.mxu0
    %v6357 = vadd.f32 %v4857, %v6356
    %v6358 = vpop.f32.mrf.mxu0
    %v6359 = vadd.f32 %v4861, %v6358
    %v6360 = vpop.f32.mrf.mxu0
    %v6361 = vpop.f32.mrf.mxu0
    %6362 = vdwg.mxu0
    %6363 = vmatprep.subr.bf16.mxu0 %v5835
    %6364 = vmatpush1.bf16.msra.mxu0 %v5834
    %6365 = vmatprep.subr.bf16.mxu0 %v5827
    %6366 = vmatpush1.bf16.msra.mxu0 %v5826
    %6367 = vmatprep.subr.bf16.mxu0 %v5819
    %6368 = vmatpush1.bf16.msra.mxu0 %v5818
    %6369 = vmatprep.subr.bf16.mxu0 %v5811
    %6370 = vmatpush1.bf16.msra.mxu0 %v5810
    %6371 = vmatprep.subr.bf16.mxu0 %v5803
    %6372 = vmatpush1.bf16.msra.mxu0 %v5802
    %6373 = vmatprep.subr.bf16.mxu0 %v5795
    %6374 = vmatpush1.bf16.msra.mxu0 %v5794
    %6375 = vmatprep.subr.bf16.mxu0 %v5787
    %6376 = vmatpush1.bf16.msra.mxu0 %v5786
    %6377 = vmatprep.subr.bf16.mxu0 %v5779
    %6378 = vmatpush1.bf16.msra.mxu0 %v5778
    %6379 = vmatprep.subr.bf16.mxu0 %v5899
    %6380 = vmatpush2.bf16.msra.mxu0 %v5898
    %6381 = vmatprep.subr.bf16.mxu0 %v5891
    %6382 = vmatpush2.bf16.msra.mxu0 %v5890
    %6383 = vmatprep.subr.bf16.mxu0 %v5883
    %6384 = vmatpush2.bf16.msra.mxu0 %v5882
    %6385 = vmatprep.subr.bf16.mxu0 %v5875
    %6386 = vmatpush2.bf16.msra.mxu0 %v5874
    %6387 = vmatprep.subr.bf16.mxu0 %v5867
    %6388 = vmatpush2.bf16.msra.mxu0 %v5866
    %6389 = vmatprep.subr.bf16.mxu0 %v5859
    %6390 = vmatpush2.bf16.msra.mxu0 %v5858
    %6391 = vmatprep.subr.bf16.mxu0 %v5851
    %6392 = vmatpush2.bf16.msra.mxu0 %v5850
    %6393 = vmatprep.subr.bf16.mxu0 %v5843
    %6394 = vmatpush2.bf16.msra.mxu0 %v5842
    %6395 = vmatprep.mubr.bf16.mxu0 %v190
    %6396 = vmatmul.mubr.bf16.gmra.mxu0 %v189
    %v6397 = vpop.f32.mrf.mxu0
    %v6398 = vadd.f32 %v6357, %v6397
    %v6399 = vpop.f32.mrf.mxu0
    %v6400 = vadd.f32 %v6359, %v6399
    %v6401 = vpop.f32.mrf.mxu0
    %v6402 = vpop.f32.mrf.mxu0
    %6403 = vdwg.mxu0
    %6404 = vmatprep.subr.bf16.mxu0 %v5709
    %6405 = vmatpush1.bf16.msra.mxu0 %v5708
    %6406 = vmatprep.subr.bf16.mxu0 %v5701
    %6407 = vmatpush1.bf16.msra.mxu0 %v5700
    %6408 = vmatprep.subr.bf16.mxu0 %v5693
    %6409 = vmatpush1.bf16.msra.mxu0 %v5692
    %6410 = vmatprep.subr.bf16.mxu0 %v5685
    %6411 = vmatpush1.bf16.msra.mxu0 %v5684
    %6412 = vmatprep.subr.bf16.mxu0 %v5677
    %6413 = vmatpush1.bf16.msra.mxu0 %v5676
    %6414 = vmatprep.subr.bf16.mxu0 %v5669
    %6415 = vmatpush1.bf16.msra.mxu0 %v5668
    %6416 = vmatprep.subr.bf16.mxu0 %v5661
    %6417 = vmatpush1.bf16.msra.mxu0 %v5660
    %6418 = vmatprep.subr.bf16.mxu0 %v5653
    %6419 = vmatpush1.bf16.msra.mxu0 %v5652
    %6420 = vmatprep.subr.bf16.mxu0 %v5773
    %6421 = vmatpush2.bf16.msra.mxu0 %v5772
    %6422 = vmatprep.subr.bf16.mxu0 %v5765
    %6423 = vmatpush2.bf16.msra.mxu0 %v5764
    %6424 = vmatprep.subr.bf16.mxu0 %v5757
    %6425 = vmatpush2.bf16.msra.mxu0 %v5756
    %6426 = vmatprep.subr.bf16.mxu0 %v5749
    %6427 = vmatpush2.bf16.msra.mxu0 %v5748
    %6428 = vmatprep.subr.bf16.mxu0 %v5741
    %6429 = vmatpush2.bf16.msra.mxu0 %v5740
    %6430 = vmatprep.subr.bf16.mxu0 %v5733
    %6431 = vmatpush2.bf16.msra.mxu0 %v5732
    %6432 = vmatprep.subr.bf16.mxu0 %v5725
    %6433 = vmatpush2.bf16.msra.mxu0 %v5724
    %6434 = vmatprep.subr.bf16.mxu0 %v5717
    %6435 = vmatpush2.bf16.msra.mxu0 %v5716
    %6436 = vmatprep.mubr.bf16.mxu0 %v177
    %6437 = vmatmul.mubr.bf16.gmra.mxu0 %v176
    %v6438 = vpop.f32.mrf.mxu0
    %v6439 = vadd.f32 %v4865, %v6438
    %v6440 = vpop.f32.mrf.mxu0
    %v6441 = vadd.f32 %v4869, %v6440
    %v6442 = vpop.f32.mrf.mxu0
    %v6443 = vpop.f32.mrf.mxu0
    %6444 = vdwg.mxu0
    %6445 = vmatprep.subr.bf16.mxu0 %v5837
    %6446 = vmatpush1.bf16.msra.mxu0 %v5836
    %6447 = vmatprep.subr.bf16.mxu0 %v5829
    %6448 = vmatpush1.bf16.msra.mxu0 %v5828
    %6449 = vmatprep.subr.bf16.mxu0 %v5821
    %6450 = vmatpush1.bf16.msra.mxu0 %v5820
    %6451 = vmatprep.subr.bf16.mxu0 %v5813
    %6452 = vmatpush1.bf16.msra.mxu0 %v5812
    %6453 = vmatprep.subr.bf16.mxu0 %v5805
    %6454 = vmatpush1.bf16.msra.mxu0 %v5804
    %6455 = vmatprep.subr.bf16.mxu0 %v5797
    %6456 = vmatpush1.bf16.msra.mxu0 %v5796
    %6457 = vmatprep.subr.bf16.mxu0 %v5789
    %6458 = vmatpush1.bf16.msra.mxu0 %v5788
    %6459 = vmatprep.subr.bf16.mxu0 %v5781
    %6460 = vmatpush1.bf16.msra.mxu0 %v5780
    %6461 = vmatprep.subr.bf16.mxu0 %v5901
    %6462 = vmatpush2.bf16.msra.mxu0 %v5900
    %6463 = vmatprep.subr.bf16.mxu0 %v5893
    %6464 = vmatpush2.bf16.msra.mxu0 %v5892
    %6465 = vmatprep.subr.bf16.mxu0 %v5885
    %6466 = vmatpush2.bf16.msra.mxu0 %v5884
    %6467 = vmatprep.subr.bf16.mxu0 %v5877
    %6468 = vmatpush2.bf16.msra.mxu0 %v5876
    %6469 = vmatprep.subr.bf16.mxu0 %v5869
    %6470 = vmatpush2.bf16.msra.mxu0 %v5868
    %6471 = vmatprep.subr.bf16.mxu0 %v5861
    %6472 = vmatpush2.bf16.msra.mxu0 %v5860
    %6473 = vmatprep.subr.bf16.mxu0 %v5853
    %6474 = vmatpush2.bf16.msra.mxu0 %v5852
    %6475 = vmatprep.subr.bf16.mxu0 %v5845
    %6476 = vmatpush2.bf16.msra.mxu0 %v5844
    %6477 = vmatprep.mubr.bf16.mxu0 %v190
    %6478 = vmatmul.mubr.bf16.gmra.mxu0 %v189
    %v6479 = vpop.f32.mrf.mxu0
    %v6480 = vadd.f32 %v6439, %v6479
    %v6481 = vpop.f32.mrf.mxu0
    %v6482 = vadd.f32 %v6441, %v6481
    %v6483 = vpop.f32.mrf.mxu0
    %v6484 = vpop.f32.mrf.mxu0
    %6485 = vdwg.mxu0
    %v6486 = vxor.u32 %v2297, 2147483648
    %v6487 = vxor.u32 %v2299, 2147483648
    %v6488 = vmul.f32 %v6486, 1.442695
    %v6489 = vpow.pop %v6488
    %v6490 = vmul.f32 %v6487, 1.442695
    %v6491 = vpow.pop %v6490
    %v6492 = vadd.f32 %v6489, 1.0
    %v6493 = vadd.f32 %v6491, 1.0
    %v6494 = vrcp.pop %v6492
    %v6495 = vmul.f32 1.0, %v6494
    %v6496 = vrcp.pop %v6493
    %v6497 = vmul.f32 1.0, %v6496
    %v6498 = vxor.u32 %v2420, 2147483648
    %v6499 = vxor.u32 %v2422, 2147483648
    %v6500 = vmul.f32 %v6498, 1.442695
    %v6501 = vpow.pop %v6500
    %v6502 = vmul.f32 %v6499, 1.442695
    %v6503 = vpow.pop %v6502
    %v6504 = vadd.f32 %v6501, 1.0
    %v6505 = vadd.f32 %v6503, 1.0
    %v6506 = vrcp.pop %v6504
    %v6507 = vmul.f32 1.0, %v6506
    %v6508 = vrcp.pop %v6505
    %v6509 = vmul.f32 1.0, %v6508
    %v6510 = vtanh.pop %v2543
    %v6511 = vtanh.pop %v2545
    %v6512 = vxor.u32 %v2666, 2147483648
    %v6513 = vxor.u32 %v2668, 2147483648
    %v6514 = vmul.f32 %v6512, 1.442695
    %v6515 = vpow.pop %v6514
    %v6516 = vmul.f32 %v6513, 1.442695
    %v6517 = vpow.pop %v6516
    %v6518 = vadd.f32 %v6515, 1.0
    %v6519 = vadd.f32 %v6517, 1.0
    %v6520 = vrcp.pop %v6518
    %v6521 = vmul.f32 1.0, %v6520
    %v6522 = vrcp.pop %v6519
    %v6523 = vmul.f32 1.0, %v6522
    %v6526 = vunpack.c.l.s4 1983009808
    %v6527 = vunpack.c.0.s8 %v6526
    %v6528 = vlaneseq
    %v6529 = vshrl.u32 %v6528, 7
    %v6530 = vsub.s32 %v6527, %v6529
    %v6531 = vrot.slane %v147, %v6530
    %v6532 = vcombine.high %v6531, %v6531
    %v6535 = vmul.f32 %v6507, %v6531
    %v6536 = vmul.f32 %v6509, %v6532
    %v6537 = vmul.f32 %v6495, %v6510
    %v6538 = vmul.f32 %v6497, %v6511
    %v6539 = vadd.f32 %v6535, %v6537
    %v6540 = vadd.f32 %v6536, %v6538
    %v6541 = vtanh.pop %v6539
    %v6542 = vtanh.pop %v6540
    %v6543 = vmul.f32 %v6521, %v6541
    %v6544 = vmul.f32 %v6523, %v6542
    %v6545 = vxor.u32 %v4327, 2147483648
    %v6546 = vxor.u32 %v4329, 2147483648
    %v6547 = vmul.f32 %v6545, 1.442695
    %v6548 = vpow.pop %v6547
    %v6549 = vmul.f32 %v6546, 1.442695
    %v6550 = vpow.pop %v6549
    %v6551 = vadd.f32 %v6548, 1.0
    %v6552 = vadd.f32 %v6550, 1.0
    %v6553 = vrcp.pop %v6551
    %v6554 = vmul.f32 1.0, %v6553
    %v6555 = vrcp.pop %v6552
    %v6556 = vmul.f32 1.0, %v6555
    %v6557 = vxor.u32 %v4409, 2147483648
    %v6558 = vxor.u32 %v4411, 2147483648
    %v6559 = vmul.f32 %v6557, 1.442695
    %v6560 = vpow.pop %v6559
    %v6561 = vmul.f32 %v6558, 1.442695
    %v6562 = vpow.pop %v6561
    %v6563 = vadd.f32 %v6560, 1.0
    %v6564 = vadd.f32 %v6562, 1.0
    %v6565 = vrcp.pop %v6563
    %v6566 = vmul.f32 1.0, %v6565
    %v6567 = vrcp.pop %v6564
    %v6568 = vmul.f32 1.0, %v6567
    %v6569 = vtanh.pop %v4491
    %v6570 = vtanh.pop %v4493
    %v6571 = vxor.u32 %v4573, 2147483648
    %v6572 = vxor.u32 %v4575, 2147483648
    %v6573 = vmul.f32 %v6571, 1.442695
    %v6574 = vpow.pop %v6573
    %v6575 = vmul.f32 %v6572, 1.442695
    %v6576 = vpow.pop %v6575
    %v6577 = vadd.f32 %v6574, 1.0
    %v6578 = vadd.f32 %v6576, 1.0
    %v6579 = vrcp.pop %v6577
    %v6580 = vmul.f32 1.0, %v6579
    %v6581 = vrcp.pop %v6578
    %v6582 = vmul.f32 1.0, %v6581
    %v6585 = vunpack.c.l.s4 1983009808
    %v6586 = vunpack.c.0.s8 %v6585
    %v6587 = vlaneseq
    %v6588 = vshrl.u32 %v6587, 7
    %v6589 = vsub.s32 %v6586, %v6588
    %v6590 = vrot.slane %v149, %v6589
    %v6591 = vcombine.high %v6590, %v6590
    %v6594 = vmul.f32 %v6566, %v6590
    %v6595 = vmul.f32 %v6568, %v6591
    %v6596 = vmul.f32 %v6554, %v6569
    %v6597 = vmul.f32 %v6556, %v6570
    %v6598 = vadd.f32 %v6594, %v6596
    %v6599 = vadd.f32 %v6595, %v6597
    %v6600 = vtanh.pop %v6598
    %v6601 = vtanh.pop %v6599
    %v6602 = vmul.f32 %v6580, %v6600
    %v6603 = vmul.f32 %v6582, %v6601
    %v6604 = vxor.u32 %v6234, 2147483648
    %v6605 = vxor.u32 %v6236, 2147483648
    %v6606 = vmul.f32 %v6604, 1.442695
    %v6607 = vpow.pop %v6606
    %v6608 = vmul.f32 %v6605, 1.442695
    %v6609 = vpow.pop %v6608
    %v6610 = vadd.f32 %v6607, 1.0
    %v6611 = vadd.f32 %v6609, 1.0
    %v6612 = vrcp.pop %v6610
    %v6613 = vmul.f32 1.0, %v6612
    %v6614 = vrcp.pop %v6611
    %v6615 = vmul.f32 1.0, %v6614
    %v6616 = vxor.u32 %v6316, 2147483648
    %v6617 = vxor.u32 %v6318, 2147483648
    %v6618 = vmul.f32 %v6616, 1.442695
    %v6619 = vpow.pop %v6618
    %v6620 = vmul.f32 %v6617, 1.442695
    %v6621 = vpow.pop %v6620
    %v6622 = vadd.f32 %v6619, 1.0
    %v6623 = vadd.f32 %v6621, 1.0
    %v6624 = vrcp.pop %v6622
    %v6625 = vmul.f32 1.0, %v6624
    %v6626 = vrcp.pop %v6623
    %v6627 = vmul.f32 1.0, %v6626
    %v6628 = vtanh.pop %v6398
    %v6629 = vtanh.pop %v6400
    %v6630 = vxor.u32 %v6480, 2147483648
    %v6631 = vxor.u32 %v6482, 2147483648
    %v6632 = vmul.f32 %v6630, 1.442695
    %v6633 = vpow.pop %v6632
    %v6634 = vmul.f32 %v6631, 1.442695
    %v6635 = vpow.pop %v6634
    %v6636 = vadd.f32 %v6633, 1.0
    %v6637 = vadd.f32 %v6635, 1.0
    %v6638 = vrcp.pop %v6636
    %v6639 = vmul.f32 1.0, %v6638
    %v6640 = vrcp.pop %v6637
    %v6641 = vmul.f32 1.0, %v6640
    %v6644 = vunpack.c.l.s4 1983009808
    %v6645 = vunpack.c.0.s8 %v6644
    %v6646 = vlaneseq
    %v6647 = vshrl.u32 %v6646, 7
    %v6648 = vsub.s32 %v6645, %v6647
    %v6649 = vrot.slane %v151, %v6648
    %v6650 = vcombine.high %v6649, %v6649
    %v6653 = vmul.f32 %v6625, %v6649
    %v6654 = vmul.f32 %v6627, %v6650
    %v6655 = vmul.f32 %v6613, %v6628
    %v6656 = vmul.f32 %v6615, %v6629
    %v6657 = vadd.f32 %v6653, %v6655
    %v6658 = vadd.f32 %v6654, %v6656
    %v6659 = vtanh.pop %v6657
    %v6660 = vtanh.pop %v6658
    %v6661 = vmul.f32 %v6639, %v6659
    %v6662 = vmul.f32 %v6641, %v6660
    %v6665 = vcombine.low %v6543, %v6544
    %v6667 = vunpack.c.l.s4 1983009808
    %v6668 = vunpack.c.0.s8 %v6667
    %v6669 = vlaneseq
    %v6670 = vshrl.u32 %v6669, 7
    %v6671 = vsub.s32 %v6668, %v6670
    %v6672 = vrot.slane %v6665, %v6671
    %6674 = vst [vmem:[#allocation15] sm:$0xf] %v6672
    %v6677 = vcombine.low %v6602, %v6603
    %v6679 = vunpack.c.l.s4 1983009808
    %v6680 = vunpack.c.0.s8 %v6679
    %v6681 = vlaneseq
    %v6682 = vshrl.u32 %v6681, 7
    %v6683 = vsub.s32 %v6680, %v6682
    %v6684 = vrot.slane %v6677, %v6683
    %6686 = vst [vmem:[%s143] sm:$0xf] %v6684
    %v6689 = vcombine.low %v6661, %v6662
    %v6691 = vunpack.c.l.s4 1983009808
    %v6692 = vunpack.c.0.s8 %v6691
    %v6693 = vlaneseq
    %v6694 = vshrl.u32 %v6693, 7
    %v6695 = vsub.s32 %v6692, %v6694
    %v6696 = vrot.slane %v6689, %v6695
    %6698 = vst [vmem:[%s145] sm:$0xf] %v6696
    %v6701 = vcombine.low %v6539, %v6540
    %v6703 = vunpack.c.l.s4 1983009808
    %v6704 = vunpack.c.0.s8 %v6703
    %v6705 = vlaneseq
    %v6706 = vshrl.u32 %v6705, 7
    %v6707 = vsub.s32 %v6704, %v6706
    %v6708 = vrot.slane %v6701, %v6707
    %6710 = vst [vmem:[#allocation17] sm:$0xf] %v6708
    %v6713 = vcombine.low %v6598, %v6599
    %v6715 = vunpack.c.l.s4 1983009808
    %v6716 = vunpack.c.0.s8 %v6715
    %v6717 = vlaneseq
    %v6718 = vshrl.u32 %v6717, 7
    %v6719 = vsub.s32 %v6716, %v6718
    %v6720 = vrot.slane %v6713, %v6719
    %6722 = vst [vmem:[%s148] sm:$0xf] %v6720
    %v6725 = vcombine.low %v6657, %v6658
    %v6727 = vunpack.c.l.s4 1983009808
    %v6728 = vunpack.c.0.s8 %v6727
    %v6729 = vlaneseq
    %v6730 = vshrl.u32 %v6729, 7
    %v6731 = vsub.s32 %v6728, %v6730
    %v6732 = vrot.slane %v6725, %v6731
    %6734 = vst [vmem:[%s150] sm:$0xf] %v6732
    %6735 = vst [vmem:[#allocation14] sm:$0xf] %v6696
    // Predicated region
    $region62: #{tpu_custom_call.1} parent=1 // pred_check
      _
    $region63: #{tpu_custom_call.1} parent=1 // pred_check_branch
      %6737 = sbr.rel (0) target = $region65
    $region64: #{tpu_custom_call.1} parent=1 // pred_region
      %s6739 = ssub.s32 64, 64
      %6740 = vsyncadd [#allocation4], %s6739
      %s6742 = sshll.u32 [#allocation14], 4
      %s6743 = int_to_ptr.vmem [resolvable:$true] %s6742
      %6745 = dma.vmem_to_hbm [thread:$0]  %s6743, 64, %s7, [#allocation4]
    $region65: #{tpu_custom_call.1} parent=1 // pred_fallthru
      _
    // Predicated region
    $region66: #{tpu_custom_call.1} parent=1 // pred_check
      _
    $region67: #{tpu_custom_call.1} parent=1 // pred_check_branch
      %6747 = sbr.rel (0) target = $region69
    $region68: #{tpu_custom_call.1} parent=1 // pred_region
      %s6749 = ssub.s32 192, 192
      %6750 = vsyncadd [#allocation16], %s6749
      %s6751 = sshll.u32 [#allocation15], 4
      %s6752 = int_to_ptr.vmem [resolvable:$true] %s6751
      %6757 = dma.vmem_to_hbm [thread:$0]  %s6752, 192, %s8, [#allocation16], 64, 64, 4
    $region69: #{tpu_custom_call.1} parent=1 // pred_fallthru
      _
    // Predicated region
    $region70: #{tpu_custom_call.1} parent=1 // pred_check
      _
    $region71: #{tpu_custom_call.1} parent=1 // pred_check_branch
      %6759 = sbr.rel (0) target = $region73
    $region72: #{tpu_custom_call.1} parent=1 // pred_region
      %s6761 = ssub.s32 192, 192
      %6762 = vsyncadd [#allocation16], %s6761
      %s6763 = sshll.u32 [#allocation17], 4
      %s6764 = int_to_ptr.vmem [resolvable:$true] %s6763
      %6769 = dma.vmem_to_hbm [thread:$0]  %s6764, 192, %s9, [#allocation16], 64, 64, 4
    $region73: #{tpu_custom_call.1} parent=1 // pred_fallthru
      _
    // Predicated region
    $region74: #{tpu_custom_call.1} parent=1 // pred_check
      _
    $region75: #{tpu_custom_call.1} parent=1 // pred_check_branch
      %6771 = sbr.rel (0) target = $region77
    $region76: #{tpu_custom_call.1} parent=1 // pred_region
      %6772 = dma.done [#allocation4], 64
    $region77: #{tpu_custom_call.1} parent=1 // pred_fallthru
      _
    // Predicated region
    $region78: #{tpu_custom_call.1} parent=1 // pred_check
      _
    $region79: #{tpu_custom_call.1} parent=1 // pred_check_branch
      %6774 = sbr.rel (0) target = $region81
    $region80: #{tpu_custom_call.1} parent=1 // pred_region
      %6775 = dma.done [#allocation16], 192
    $region81: #{tpu_custom_call.1} parent=1 // pred_fallthru
      _
    // Predicated region
    $region82: #{tpu_custom_call.1} parent=1 // pred_check
      _
    $region83: #{tpu_custom_call.1} parent=1 // pred_check_branch
      %6777 = sbr.rel (0) target = $region85
    $region84: #{tpu_custom_call.1} parent=1 // pred_region
      %6778 = dma.done [#allocation16], 192
    $region85: #{tpu_custom_call.1} parent=1 // pred_fallthru
      _
    %6779 = vsyncpa [#allocation3], 1
    %6780 = vsyncpa [#allocation6], 1
    %6781 = vsyncpa [#allocation9], 1
    %6782 = vsyncpa [#allocation12], 1
    %6783 = vsyncpa [#allocation4], 1
    %6784 = vsyncpa [#allocation16], 1

</llo_original>
